<compile_context>
chip_gen: v7x
topology: tpu7x:2x2x1
jax: 0.10.0
libtpu: 0.0.40
codegen_flags: <defaults>
</compile_context>

<pallas_src>
import jax
import jax.numpy as jnp
from jax import lax
from jax.experimental import pallas as pl
from jax.experimental.pallas import tpu as pltpu


def _pixelshuffle_conv_to_eff3x3(w2_hwio, C, up=2):
    """Fold PixelShuffle(up) + Conv(k=4, stride=2, pad=1) into a stride-1 SAME
    3x3 conv over the pre-shuffle (C*up*up)-channel map.

    w2_hwio: (4, 4, C, Cout) -> (3, 3, C*up*up, Cout).  Pre-shuffle channel
    k = c*up*up + i*up + j (PyTorch PixelShuffle convention)."""
    assert up == 2, "fusion derived for upFactor == 2 (kernel 4, stride 2, pad 1)"
    Cout = w2_hwio.shape[-1]
    eff = jnp.zeros((3, 3, C * 4, Cout), w2_hwio.dtype)
    # (spatial offset d in {-1,0,+1}, sub-pixel phase p in {0,1}) -> 4-tap index
    tap = {(-1, 1): 0, (0, 0): 1, (0, 1): 2, (1, 0): 3}
    for (dh, i), dy in tap.items():
        for (dw, j), dx in tap.items():
            ch = jnp.arange(C) * 4 + i * 2 + j
            eff = eff.at[dh + 1, dw + 1, ch, :].set(w2_hwio[dy, dx, :, :])
    return eff


def _make_kernel(W):
    """Kernel over one lane-dense slab x:(Cin, L) of B images (L = B*H*W)."""

    def kernel(x_ref, m_ref, w1_ref, b1_ref, w2_ref, b2_ref, o_ref):
        _, L = x_ref.shape
        C4 = w1_ref.shape[1]          # conv1 out channels (= C*up*up)
        Co = w2_ref.shape[1]          # conv2 out channels (= C)
        cdt = x_ref.dtype             # compute dtype of matmul operands

        def conv3x3(inp, w_ref, cout):
            # inp: (cin, L) — channels on sublanes, flattened pixels on lanes.
            acc = jnp.zeros((cout, L), jnp.float32)
            t = 0
            for dy in range(3):
                for dx in range(3):
                    off = (dy - 1) * W + (dx - 1)        # flat shift of this tap
                    if off == 0:                         # centre tap: mask == 1
                        src = inp
                    else:
                        # XLU lane rotation (free-ish); mask zeroes row-wrap /
                        # image-wrap pixels so edges behave like SAME padding.
                        src = pltpu.roll(inp, shift=(-off) % L, axis=1)
                        src = src * m_ref[t:t + 1, :]
                    acc = acc + jnp.dot(w_ref[t], src,
                                        preferred_element_type=jnp.float32)
                    t += 1
            return acc

        x = x_ref[...]
        # conv1 (3x3 SAME) + bias + ReLU  — bias/ReLU kept in f32
        y1 = jnp.maximum(conv3x3(x, w1_ref, C4) + b1_ref[...], 0.0)
        # PixelShuffle + conv2 (4x4, s2, p1) pre-folded into an effective 3x3
        y2 = jnp.maximum(conv3x3(y1.astype(cdt), w2_ref, Co) + b2_ref[...], 0.0)
        o_ref[...] = y2.astype(o_ref.dtype)              # lane-dense full store

    return kernel


def spblock(x_nchw, params, up=2, compute_dtype=jnp.bfloat16, block_images=None):
    """SPBlock forward.  x_nchw: (N, C, H, W); params = (w1, b1, w2, b2) with
    w1: (3,3,C,C*up*up) HWIO, b1: (C*up*up,), w2: (4,4,C,C) HWIO, b2: (C,)."""
    assert up == 2
    w1, b1, w2, b2 = params
    N, C, H, W = x_nchw.shape
    C4 = C * up * up
    HW = H * W

    # How many images to fold onto the lane axis per grid step.
    if block_images is None:
        block_images = max(1, min(N, 2048 // max(HW, 1)))
    if HW % 128 != 0:
        block_images = N          # full-array block is exempt from the 128 rule
    B = max(1, min(block_images, N))
    while N % B:
        B -= 1
    L = B * HW

    # Per-tap (Cout, Cin) weight matrices (flipped matmul orientation).
    w1t = jnp.transpose(w1, (0, 1, 3, 2)).reshape(9, C4, C).astype(compute_dtype)
    w2e = _pixelshuffle_conv_to_eff3x3(w2, C, up)                    # (3,3,C4,C)
    w2t = jnp.transpose(w2e, (0, 1, 3, 2)).reshape(9, C, C4).astype(compute_dtype)
    b1r = b1.reshape(C4, 1).astype(jnp.float32)
    b2r = b2.reshape(C, 1).astype(jnp.float32)

    # Per-tap validity masks over the flat row-major pixel index (period H*W).
    pix = jnp.arange(HW)
    hh, ww = pix // W, pix % W
    rows = []
    for dy in range(3):
        for dx in range(3):
            rows.append((hh + dy >= 1) & (hh + dy <= H) &
                        (ww + dx >= 1) & (ww + dx <= W))
    masks = jnp.tile(jnp.stack(rows).astype(compute_dtype), (1, B))  # (9, L)

    # Channels-major, lane-dense activation layout (layout plumbing in XLA).
    x2 = jnp.transpose(x_nchw.reshape(N, C, HW), (1, 0, 2)).reshape(C, N * HW)
    x2 = x2.astype(compute_dtype)

    grid_spec = pltpu.PrefetchScalarGridSpec(
        num_scalar_prefetch=0,
        grid=(N // B,),
        in_specs=[
            pl.BlockSpec((C, L), lambda n: (0, n)),          # activations
            pl.BlockSpec((9, L), lambda n: (0, 0)),          # tap masks
            pl.BlockSpec((9, C4, C), lambda n: (0, 0, 0)),   # conv1 taps
            pl.BlockSpec((C4, 1), lambda n: (0, 0)),         # conv1 bias
            pl.BlockSpec((9, C, C4), lambda n: (0, 0, 0)),   # conv2 (folded) taps
            pl.BlockSpec((C, 1), lambda n: (0, 0)),          # conv2 bias
        ],
        out_specs=pl.BlockSpec((C, L), lambda n: (0, n)),
    )

    out2 = pl.pallas_call(
        _make_kernel(W),
        out_shape=jax.ShapeDtypeStruct((C, N * HW), jnp.float32),
        grid_spec=grid_spec,
        compiler_params=pltpu.CompilerParams(
            dimension_semantics=("parallel",)),              # image blocks indep.
    )(x2, masks, w1t, b1r, w2t, b2r)

    return jnp.transpose(out2.reshape(C, N, H, W), (1, 0, 2, 3))


def ref_spblock(x_nchw, params, up=2):
    """Pure-JAX reference: conv1 + ReLU -> PixelShuffle -> conv2 + ReLU (unfused)."""
    w1, b1, w2, b2 = params
    x = jnp.transpose(x_nchw, (0, 2, 3, 1)).astype(jnp.float32)      # NHWC
    dn1 = lax.conv_dimension_numbers(x.shape, w1.shape, ('NHWC', 'HWIO', 'NHWC'))
    y = lax.conv_general_dilated(x, w1, (1, 1), [(1, 1), (1, 1)],
                                 dimension_numbers=dn1,
                                 precision=lax.Precision.HIGHEST)
    y = jax.nn.relu(y + b1.reshape(1, 1, 1, -1))
    # PixelShuffle (PyTorch channel order k = c*up*up + i*up + j), NHWC form
    N, H, W, C4 = y.shape
    C = C4 // (up * up)
    y = y.reshape(N, H, W, C, up, up)
    y = jnp.transpose(y, (0, 1, 4, 2, 5, 3)).reshape(N, H * up, W * up, C)
    dn2 = lax.conv_dimension_numbers(y.shape, w2.shape, ('NHWC', 'HWIO', 'NHWC'))
    z = lax.conv_general_dilated(y, w2, (up, up), [(1, 1), (1, 1)],
                                 dimension_numbers=dn2,
                                 precision=lax.Precision.HIGHEST)
    z = jax.nn.relu(z + b2.reshape(1, 1, 1, -1))
    return jnp.transpose(z, (0, 3, 1, 2))


if __name__ == "__main__":
    key = jax.random.PRNGKey(0)
    kx, k1, kb1, k2, kb2 = jax.random.split(key, 5)

    N, C, H, W, up = 2, 4, 16, 16, 2          # in_channels == out_channels == C
    x = jax.random.normal(kx, (N, C, H, W), jnp.float32)
    w1 = jax.random.normal(k1, (3, 3, C, C * up * up), jnp.float32) * 0.1   # HWIO
    b1 = jax.random.normal(kb1, (C * up * up,), jnp.float32) * 0.1
    w2 = jax.random.normal(k2, (4, 4, C, C), jnp.float32) * 0.1             # HWIO
    b2 = jax.random.normal(kb2, (C,), jnp.float32) * 0.1
    params = (w1, b1, w2, b2)

    ref = jax.block_until_ready(ref_spblock(x, params, up=up))

    # 1) f32 operands: tight logical check of the fused/flipped kernel.
    out32 = jax.block_until_ready(
        spblock(x, params, up=up, compute_dtype=jnp.float32))
    assert out32.shape == (N, C, H, W)
    err32 = float(jnp.max(jnp.abs(out32 - ref)))
    assert jnp.allclose(out32, ref, atol=1e-3, rtol=1e-3), f"f32 max abs err {err32}"

    # 2) bf16 matmul operands (default; v6e/v7x MXU-native), f32 accumulation.
    outbf = jax.block_until_ready(spblock(x, params, up=up))
    errbf = float(jnp.max(jnp.abs(outbf - ref)))
    assert jnp.allclose(outbf, ref, atol=5e-2, rtol=5e-2), f"bf16 max abs err {errbf}"

    print("KERNEL_OK")
</pallas_src>

<mosaic_0001>
module attributes {stable_mosaic.version = 11 : i64} {
  func.func @kernel(%arg0: i32, %arg1: memref<4x512xf32, #tpu.memory_space<vmem>>, %arg2: memref<9x512xf32, #tpu.memory_space<vmem>>, %arg3: memref<9x16x4xf32, #tpu.memory_space<vmem>>, %arg4: memref<16x1xf32, #tpu.memory_space<vmem>>, %arg5: memref<9x4x16xf32, #tpu.memory_space<vmem>>, %arg6: memref<4x1xf32, #tpu.memory_space<vmem>>, %arg7: memref<4x512xf32, #tpu.memory_space<vmem>>) attributes {dimension_semantics = [#tpu.dimension_semantics<parallel>], iteration_bounds = array<i64: 1>, scalar_prefetch = 0 : i64, scratch_operands = 0 : i64, tpu.core_type = #tpu.core_type<tc>, window_params = [{transform_indices = @transform_0, window_bounds = array<i64: 4, 512>}, {pipeline_mode = #tpu.pipeline_mode<synchronous>, transform_indices = @transform_1, window_bounds = array<i64: 9, 512>}, {pipeline_mode = #tpu.pipeline_mode<synchronous>, transform_indices = @transform_2, window_bounds = array<i64: 9, 16, 4>}, {pipeline_mode = #tpu.pipeline_mode<synchronous>, transform_indices = @transform_3, window_bounds = array<i64: 16, 1>}, {pipeline_mode = #tpu.pipeline_mode<synchronous>, transform_indices = @transform_4, window_bounds = array<i64: 9, 4, 16>}, {pipeline_mode = #tpu.pipeline_mode<synchronous>, transform_indices = @transform_5, window_bounds = array<i64: 4, 1>}, {transform_indices = @transform_6, window_bounds = array<i64: 4, 512>}]} {
    %c0 = arith.constant 0 : index
    %c0_0 = arith.constant 0 : index
    %0 = vector.load %arg1[%c0, %c0_0] : memref<4x512xf32, #tpu.memory_space<vmem>>, vector<4x512xf32>
    %cst = arith.constant 0.000000e+00 : f32
    %1 = vector.broadcast %cst : f32 to vector<16x512xf32>
    %c17_i32 = arith.constant 17 : i32
    %2 = tpu.dynamic_rotate %0 by %c17_i32 dim 1 : vector<4x512xf32>, i32 -> vector<4x512xf32>
    %c0_1 = arith.constant 0 : index
    %c0_2 = arith.constant 0 : index
    %3 = vector.load %arg2[%c0_1, %c0_2] : memref<9x512xf32, #tpu.memory_space<vmem>>, vector<1x512xf32>
    %4 = vector.broadcast %3 : vector<1x512xf32> to vector<4x512xf32>
    %5 = arith.mulf %2, %4 : vector<4x512xf32>
    %c0_3 = arith.constant 0 : index
    %c0_4 = arith.constant 0 : index
    %c0_5 = arith.constant 0 : index
    %6 = vector.load %arg3[%c0_3, %c0_4, %c0_5] : memref<9x16x4xf32, #tpu.memory_space<vmem>>, vector<1x16x4xf32>
    %7 = vector.shape_cast %6 : vector<1x16x4xf32> to vector<16x4xf32>
    %cst_6 = arith.constant dense<0.000000e+00> : vector<16x512xf32>
    %8 = tpu.matmul %7, %5, %cst_6 {dimension_numbers = #tpu.dot_dimension_numbers<[1], [0], [0], [1], [0, 0, 1, 1], [], []>} : vector<16x4xf32>, vector<4x512xf32>, vector<16x512xf32> -> vector<16x512xf32>
    %9 = arith.addf %1, %8 : vector<16x512xf32>
    %c16_i32 = arith.constant 16 : i32
    %10 = tpu.dynamic_rotate %0 by %c16_i32 dim 1 : vector<4x512xf32>, i32 -> vector<4x512xf32>
    %c1 = arith.constant 1 : index
    %c0_7 = arith.constant 0 : index
    %11 = vector.load %arg2[%c1, %c0_7] : memref<9x512xf32, #tpu.memory_space<vmem>>, vector<1x512xf32>
    %12 = vector.broadcast %11 : vector<1x512xf32> to vector<4x512xf32>
    %13 = arith.mulf %10, %12 : vector<4x512xf32>
    %c1_8 = arith.constant 1 : index
    %c0_9 = arith.constant 0 : index
    %c0_10 = arith.constant 0 : index
    %14 = vector.load %arg3[%c1_8, %c0_9, %c0_10] : memref<9x16x4xf32, #tpu.memory_space<vmem>>, vector<1x16x4xf32>
    %15 = vector.shape_cast %14 : vector<1x16x4xf32> to vector<16x4xf32>
    %cst_11 = arith.constant dense<0.000000e+00> : vector<16x512xf32>
    %16 = tpu.matmul %15, %13, %cst_11 {dimension_numbers = #tpu.dot_dimension_numbers<[1], [0], [0], [1], [0, 0, 1, 1], [], []>} : vector<16x4xf32>, vector<4x512xf32>, vector<16x512xf32> -> vector<16x512xf32>
    %17 = arith.addf %9, %16 : vector<16x512xf32>
    %c15_i32 = arith.constant 15 : i32
    %18 = tpu.dynamic_rotate %0 by %c15_i32 dim 1 : vector<4x512xf32>, i32 -> vector<4x512xf32>
    %c2 = arith.constant 2 : index
    %c0_12 = arith.constant 0 : index
    %19 = vector.load %arg2[%c2, %c0_12] : memref<9x512xf32, #tpu.memory_space<vmem>>, vector<1x512xf32>
    %20 = vector.broadcast %19 : vector<1x512xf32> to vector<4x512xf32>
    %21 = arith.mulf %18, %20 : vector<4x512xf32>
    %c2_13 = arith.constant 2 : index
    %c0_14 = arith.constant 0 : index
    %c0_15 = arith.constant 0 : index
    %22 = vector.load %arg3[%c2_13, %c0_14, %c0_15] : memref<9x16x4xf32, #tpu.memory_space<vmem>>, vector<1x16x4xf32>
    %23 = vector.shape_cast %22 : vector<1x16x4xf32> to vector<16x4xf32>
    %cst_16 = arith.constant dense<0.000000e+00> : vector<16x512xf32>
    %24 = tpu.matmul %23, %21, %cst_16 {dimension_numbers = #tpu.dot_dimension_numbers<[1], [0], [0], [1], [0, 0, 1, 1], [], []>} : vector<16x4xf32>, vector<4x512xf32>, vector<16x512xf32> -> vector<16x512xf32>
    %25 = arith.addf %17, %24 : vector<16x512xf32>
    %c1_i32 = arith.constant 1 : i32
    %26 = tpu.dynamic_rotate %0 by %c1_i32 dim 1 : vector<4x512xf32>, i32 -> vector<4x512xf32>
    %c3 = arith.constant 3 : index
    %c0_17 = arith.constant 0 : index
    %27 = vector.load %arg2[%c3, %c0_17] : memref<9x512xf32, #tpu.memory_space<vmem>>, vector<1x512xf32>
    %28 = vector.broadcast %27 : vector<1x512xf32> to vector<4x512xf32>
    %29 = arith.mulf %26, %28 : vector<4x512xf32>
    %c3_18 = arith.constant 3 : index
    %c0_19 = arith.constant 0 : index
    %c0_20 = arith.constant 0 : index
    %30 = vector.load %arg3[%c3_18, %c0_19, %c0_20] : memref<9x16x4xf32, #tpu.memory_space<vmem>>, vector<1x16x4xf32>
    %31 = vector.shape_cast %30 : vector<1x16x4xf32> to vector<16x4xf32>
    %cst_21 = arith.constant dense<0.000000e+00> : vector<16x512xf32>
    %32 = tpu.matmul %31, %29, %cst_21 {dimension_numbers = #tpu.dot_dimension_numbers<[1], [0], [0], [1], [0, 0, 1, 1], [], []>} : vector<16x4xf32>, vector<4x512xf32>, vector<16x512xf32> -> vector<16x512xf32>
    %33 = arith.addf %25, %32 : vector<16x512xf32>
    %c4 = arith.constant 4 : index
    %c0_22 = arith.constant 0 : index
    %c0_23 = arith.constant 0 : index
    %34 = vector.load %arg3[%c4, %c0_22, %c0_23] : memref<9x16x4xf32, #tpu.memory_space<vmem>>, vector<1x16x4xf32>
    %35 = vector.shape_cast %34 : vector<1x16x4xf32> to vector<16x4xf32>
    %cst_24 = arith.constant dense<0.000000e+00> : vector<16x512xf32>
    %36 = tpu.matmul %35, %0, %cst_24 {dimension_numbers = #tpu.dot_dimension_numbers<[1], [0], [0], [1], [0, 0, 1, 1], [], []>} : vector<16x4xf32>, vector<4x512xf32>, vector<16x512xf32> -> vector<16x512xf32>
    %37 = arith.addf %33, %36 : vector<16x512xf32>
    %c511_i32 = arith.constant 511 : i32
    %38 = tpu.dynamic_rotate %0 by %c511_i32 dim 1 : vector<4x512xf32>, i32 -> vector<4x512xf32>
    %c5 = arith.constant 5 : index
    %c0_25 = arith.constant 0 : index
    %39 = vector.load %arg2[%c5, %c0_25] : memref<9x512xf32, #tpu.memory_space<vmem>>, vector<1x512xf32>
    %40 = vector.broadcast %39 : vector<1x512xf32> to vector<4x512xf32>
    %41 = arith.mulf %38, %40 : vector<4x512xf32>
    %c5_26 = arith.constant 5 : index
    %c0_27 = arith.constant 0 : index
    %c0_28 = arith.constant 0 : index
    %42 = vector.load %arg3[%c5_26, %c0_27, %c0_28] : memref<9x16x4xf32, #tpu.memory_space<vmem>>, vector<1x16x4xf32>
    %43 = vector.shape_cast %42 : vector<1x16x4xf32> to vector<16x4xf32>
    %cst_29 = arith.constant dense<0.000000e+00> : vector<16x512xf32>
    %44 = tpu.matmul %43, %41, %cst_29 {dimension_numbers = #tpu.dot_dimension_numbers<[1], [0], [0], [1], [0, 0, 1, 1], [], []>} : vector<16x4xf32>, vector<4x512xf32>, vector<16x512xf32> -> vector<16x512xf32>
    %45 = arith.addf %37, %44 : vector<16x512xf32>
    %c497_i32 = arith.constant 497 : i32
    %46 = tpu.dynamic_rotate %0 by %c497_i32 dim 1 : vector<4x512xf32>, i32 -> vector<4x512xf32>
    %c6 = arith.constant 6 : index
    %c0_30 = arith.constant 0 : index
    %47 = vector.load %arg2[%c6, %c0_30] : memref<9x512xf32, #tpu.memory_space<vmem>>, vector<1x512xf32>
    %48 = vector.broadcast %47 : vector<1x512xf32> to vector<4x512xf32>
    %49 = arith.mulf %46, %48 : vector<4x512xf32>
    %c6_31 = arith.constant 6 : index
    %c0_32 = arith.constant 0 : index
    %c0_33 = arith.constant 0 : index
    %50 = vector.load %arg3[%c6_31, %c0_32, %c0_33] : memref<9x16x4xf32, #tpu.memory_space<vmem>>, vector<1x16x4xf32>
    %51 = vector.shape_cast %50 : vector<1x16x4xf32> to vector<16x4xf32>
    %cst_34 = arith.constant dense<0.000000e+00> : vector<16x512xf32>
    %52 = tpu.matmul %51, %49, %cst_34 {dimension_numbers = #tpu.dot_dimension_numbers<[1], [0], [0], [1], [0, 0, 1, 1], [], []>} : vector<16x4xf32>, vector<4x512xf32>, vector<16x512xf32> -> vector<16x512xf32>
    %53 = arith.addf %45, %52 : vector<16x512xf32>
    %c496_i32 = arith.constant 496 : i32
    %54 = tpu.dynamic_rotate %0 by %c496_i32 dim 1 : vector<4x512xf32>, i32 -> vector<4x512xf32>
    %c7 = arith.constant 7 : index
    %c0_35 = arith.constant 0 : index
    %55 = vector.load %arg2[%c7, %c0_35] : memref<9x512xf32, #tpu.memory_space<vmem>>, vector<1x512xf32>
    %56 = vector.broadcast %55 : vector<1x512xf32> to vector<4x512xf32>
    %57 = arith.mulf %54, %56 : vector<4x512xf32>
    %c7_36 = arith.constant 7 : index
    %c0_37 = arith.constant 0 : index
    %c0_38 = arith.constant 0 : index
    %58 = vector.load %arg3[%c7_36, %c0_37, %c0_38] : memref<9x16x4xf32, #tpu.memory_space<vmem>>, vector<1x16x4xf32>
    %59 = vector.shape_cast %58 : vector<1x16x4xf32> to vector<16x4xf32>
    %cst_39 = arith.constant dense<0.000000e+00> : vector<16x512xf32>
    %60 = tpu.matmul %59, %57, %cst_39 {dimension_numbers = #tpu.dot_dimension_numbers<[1], [0], [0], [1], [0, 0, 1, 1], [], []>} : vector<16x4xf32>, vector<4x512xf32>, vector<16x512xf32> -> vector<16x512xf32>
    %61 = arith.addf %53, %60 : vector<16x512xf32>
    %c495_i32 = arith.constant 495 : i32
    %62 = tpu.dynamic_rotate %0 by %c495_i32 dim 1 : vector<4x512xf32>, i32 -> vector<4x512xf32>
    %c8 = arith.constant 8 : index
    %c0_40 = arith.constant 0 : index
    %63 = vector.load %arg2[%c8, %c0_40] : memref<9x512xf32, #tpu.memory_space<vmem>>, vector<1x512xf32>
    %64 = vector.broadcast %63 : vector<1x512xf32> to vector<4x512xf32>
    %65 = arith.mulf %62, %64 : vector<4x512xf32>
    %c8_41 = arith.constant 8 : index
    %c0_42 = arith.constant 0 : index
    %c0_43 = arith.constant 0 : index
    %66 = vector.load %arg3[%c8_41, %c0_42, %c0_43] : memref<9x16x4xf32, #tpu.memory_space<vmem>>, vector<1x16x4xf32>
    %67 = vector.shape_cast %66 : vector<1x16x4xf32> to vector<16x4xf32>
    %cst_44 = arith.constant dense<0.000000e+00> : vector<16x512xf32>
    %68 = tpu.matmul %67, %65, %cst_44 {dimension_numbers = #tpu.dot_dimension_numbers<[1], [0], [0], [1], [0, 0, 1, 1], [], []>} : vector<16x4xf32>, vector<4x512xf32>, vector<16x512xf32> -> vector<16x512xf32>
    %69 = arith.addf %61, %68 : vector<16x512xf32>
    %c0_45 = arith.constant 0 : index
    %c0_46 = arith.constant 0 : index
    %70 = vector.load %arg4[%c0_45, %c0_46] : memref<16x1xf32, #tpu.memory_space<vmem>>, vector<16x1xf32>
    %71 = vector.broadcast %70 : vector<16x1xf32> to vector<16x512xf32>
    %72 = arith.addf %69, %71 : vector<16x512xf32>
    %cst_47 = arith.constant 0.000000e+00 : f32
    %73 = vector.broadcast %cst_47 : f32 to vector<16x512xf32>
    %74 = arith.maximumf %72, %73 : vector<16x512xf32>
    %cst_48 = arith.constant 0.000000e+00 : f32
    %75 = vector.broadcast %cst_48 : f32 to vector<4x512xf32>
    %c17_i32_49 = arith.constant 17 : i32
    %76 = tpu.dynamic_rotate %74 by %c17_i32_49 dim 1 : vector<16x512xf32>, i32 -> vector<16x512xf32>
    %c0_50 = arith.constant 0 : index
    %c0_51 = arith.constant 0 : index
    %77 = vector.load %arg2[%c0_50, %c0_51] : memref<9x512xf32, #tpu.memory_space<vmem>>, vector<1x512xf32>
    %78 = vector.broadcast %77 : vector<1x512xf32> to vector<16x512xf32>
    %79 = arith.mulf %76, %78 : vector<16x512xf32>
    %c0_52 = arith.constant 0 : index
    %c0_53 = arith.constant 0 : index
    %c0_54 = arith.constant 0 : index
    %80 = vector.load %arg5[%c0_52, %c0_53, %c0_54] : memref<9x4x16xf32, #tpu.memory_space<vmem>>, vector<1x4x16xf32>
    %81 = vector.shape_cast %80 : vector<1x4x16xf32> to vector<4x16xf32>
    %cst_55 = arith.constant dense<0.000000e+00> : vector<4x512xf32>
    %82 = tpu.matmul %81, %79, %cst_55 {dimension_numbers = #tpu.dot_dimension_numbers<[1], [0], [0], [1], [0, 0, 1, 1], [], []>} : vector<4x16xf32>, vector<16x512xf32>, vector<4x512xf32> -> vector<4x512xf32>
    %83 = arith.addf %75, %82 : vector<4x512xf32>
    %c16_i32_56 = arith.constant 16 : i32
    %84 = tpu.dynamic_rotate %74 by %c16_i32_56 dim 1 : vector<16x512xf32>, i32 -> vector<16x512xf32>
    %c1_57 = arith.constant 1 : index
    %c0_58 = arith.constant 0 : index
    %85 = vector.load %arg2[%c1_57, %c0_58] : memref<9x512xf32, #tpu.memory_space<vmem>>, vector<1x512xf32>
    %86 = vector.broadcast %85 : vector<1x512xf32> to vector<16x512xf32>
    %87 = arith.mulf %84, %86 : vector<16x512xf32>
    %c1_59 = arith.constant 1 : index
    %c0_60 = arith.constant 0 : index
    %c0_61 = arith.constant 0 : index
    %88 = vector.load %arg5[%c1_59, %c0_60, %c0_61] : memref<9x4x16xf32, #tpu.memory_space<vmem>>, vector<1x4x16xf32>
    %89 = vector.shape_cast %88 : vector<1x4x16xf32> to vector<4x16xf32>
    %cst_62 = arith.constant dense<0.000000e+00> : vector<4x512xf32>
    %90 = tpu.matmul %89, %87, %cst_62 {dimension_numbers = #tpu.dot_dimension_numbers<[1], [0], [0], [1], [0, 0, 1, 1], [], []>} : vector<4x16xf32>, vector<16x512xf32>, vector<4x512xf32> -> vector<4x512xf32>
    %91 = arith.addf %83, %90 : vector<4x512xf32>
    %c15_i32_63 = arith.constant 15 : i32
    %92 = tpu.dynamic_rotate %74 by %c15_i32_63 dim 1 : vector<16x512xf32>, i32 -> vector<16x512xf32>
    %c2_64 = arith.constant 2 : index
    %c0_65 = arith.constant 0 : index
    %93 = vector.load %arg2[%c2_64, %c0_65] : memref<9x512xf32, #tpu.memory_space<vmem>>, vector<1x512xf32>
    %94 = vector.broadcast %93 : vector<1x512xf32> to vector<16x512xf32>
    %95 = arith.mulf %92, %94 : vector<16x512xf32>
    %c2_66 = arith.constant 2 : index
    %c0_67 = arith.constant 0 : index
    %c0_68 = arith.constant 0 : index
    %96 = vector.load %arg5[%c2_66, %c0_67, %c0_68] : memref<9x4x16xf32, #tpu.memory_space<vmem>>, vector<1x4x16xf32>
    %97 = vector.shape_cast %96 : vector<1x4x16xf32> to vector<4x16xf32>
    %cst_69 = arith.constant dense<0.000000e+00> : vector<4x512xf32>
    %98 = tpu.matmul %97, %95, %cst_69 {dimension_numbers = #tpu.dot_dimension_numbers<[1], [0], [0], [1], [0, 0, 1, 1], [], []>} : vector<4x16xf32>, vector<16x512xf32>, vector<4x512xf32> -> vector<4x512xf32>
    %99 = arith.addf %91, %98 : vector<4x512xf32>
    %c1_i32_70 = arith.constant 1 : i32
    %100 = tpu.dynamic_rotate %74 by %c1_i32_70 dim 1 : vector<16x512xf32>, i32 -> vector<16x512xf32>
    %c3_71 = arith.constant 3 : index
    %c0_72 = arith.constant 0 : index
    %101 = vector.load %arg2[%c3_71, %c0_72] : memref<9x512xf32, #tpu.memory_space<vmem>>, vector<1x512xf32>
    %102 = vector.broadcast %101 : vector<1x512xf32> to vector<16x512xf32>
    %103 = arith.mulf %100, %102 : vector<16x512xf32>
    %c3_73 = arith.constant 3 : index
    %c0_74 = arith.constant 0 : index
    %c0_75 = arith.constant 0 : index
    %104 = vector.load %arg5[%c3_73, %c0_74, %c0_75] : memref<9x4x16xf32, #tpu.memory_space<vmem>>, vector<1x4x16xf32>
    %105 = vector.shape_cast %104 : vector<1x4x16xf32> to vector<4x16xf32>
    %cst_76 = arith.constant dense<0.000000e+00> : vector<4x512xf32>
    %106 = tpu.matmul %105, %103, %cst_76 {dimension_numbers = #tpu.dot_dimension_numbers<[1], [0], [0], [1], [0, 0, 1, 1], [], []>} : vector<4x16xf32>, vector<16x512xf32>, vector<4x512xf32> -> vector<4x512xf32>
    %107 = arith.addf %99, %106 : vector<4x512xf32>
    %c4_77 = arith.constant 4 : index
    %c0_78 = arith.constant 0 : index
    %c0_79 = arith.constant 0 : index
    %108 = vector.load %arg5[%c4_77, %c0_78, %c0_79] : memref<9x4x16xf32, #tpu.memory_space<vmem>>, vector<1x4x16xf32>
    %109 = vector.shape_cast %108 : vector<1x4x16xf32> to vector<4x16xf32>
    %cst_80 = arith.constant dense<0.000000e+00> : vector<4x512xf32>
    %110 = tpu.matmul %109, %74, %cst_80 {dimension_numbers = #tpu.dot_dimension_numbers<[1], [0], [0], [1], [0, 0, 1, 1], [], []>} : vector<4x16xf32>, vector<16x512xf32>, vector<4x512xf32> -> vector<4x512xf32>
    %111 = arith.addf %107, %110 : vector<4x512xf32>
    %c511_i32_81 = arith.constant 511 : i32
    %112 = tpu.dynamic_rotate %74 by %c511_i32_81 dim 1 : vector<16x512xf32>, i32 -> vector<16x512xf32>
    %c5_82 = arith.constant 5 : index
    %c0_83 = arith.constant 0 : index
    %113 = vector.load %arg2[%c5_82, %c0_83] : memref<9x512xf32, #tpu.memory_space<vmem>>, vector<1x512xf32>
    %114 = vector.broadcast %113 : vector<1x512xf32> to vector<16x512xf32>
    %115 = arith.mulf %112, %114 : vector<16x512xf32>
    %c5_84 = arith.constant 5 : index
    %c0_85 = arith.constant 0 : index
    %c0_86 = arith.constant 0 : index
    %116 = vector.load %arg5[%c5_84, %c0_85, %c0_86] : memref<9x4x16xf32, #tpu.memory_space<vmem>>, vector<1x4x16xf32>
    %117 = vector.shape_cast %116 : vector<1x4x16xf32> to vector<4x16xf32>
    %cst_87 = arith.constant dense<0.000000e+00> : vector<4x512xf32>
    %118 = tpu.matmul %117, %115, %cst_87 {dimension_numbers = #tpu.dot_dimension_numbers<[1], [0], [0], [1], [0, 0, 1, 1], [], []>} : vector<4x16xf32>, vector<16x512xf32>, vector<4x512xf32> -> vector<4x512xf32>
    %119 = arith.addf %111, %118 : vector<4x512xf32>
    %c497_i32_88 = arith.constant 497 : i32
    %120 = tpu.dynamic_rotate %74 by %c497_i32_88 dim 1 : vector<16x512xf32>, i32 -> vector<16x512xf32>
    %c6_89 = arith.constant 6 : index
    %c0_90 = arith.constant 0 : index
    %121 = vector.load %arg2[%c6_89, %c0_90] : memref<9x512xf32, #tpu.memory_space<vmem>>, vector<1x512xf32>
    %122 = vector.broadcast %121 : vector<1x512xf32> to vector<16x512xf32>
    %123 = arith.mulf %120, %122 : vector<16x512xf32>
    %c6_91 = arith.constant 6 : index
    %c0_92 = arith.constant 0 : index
    %c0_93 = arith.constant 0 : index
    %124 = vector.load %arg5[%c6_91, %c0_92, %c0_93] : memref<9x4x16xf32, #tpu.memory_space<vmem>>, vector<1x4x16xf32>
    %125 = vector.shape_cast %124 : vector<1x4x16xf32> to vector<4x16xf32>
    %cst_94 = arith.constant dense<0.000000e+00> : vector<4x512xf32>
    %126 = tpu.matmul %125, %123, %cst_94 {dimension_numbers = #tpu.dot_dimension_numbers<[1], [0], [0], [1], [0, 0, 1, 1], [], []>} : vector<4x16xf32>, vector<16x512xf32>, vector<4x512xf32> -> vector<4x512xf32>
    %127 = arith.addf %119, %126 : vector<4x512xf32>
    %c496_i32_95 = arith.constant 496 : i32
    %128 = tpu.dynamic_rotate %74 by %c496_i32_95 dim 1 : vector<16x512xf32>, i32 -> vector<16x512xf32>
    %c7_96 = arith.constant 7 : index
    %c0_97 = arith.constant 0 : index
    %129 = vector.load %arg2[%c7_96, %c0_97] : memref<9x512xf32, #tpu.memory_space<vmem>>, vector<1x512xf32>
    %130 = vector.broadcast %129 : vector<1x512xf32> to vector<16x512xf32>
    %131 = arith.mulf %128, %130 : vector<16x512xf32>
    %c7_98 = arith.constant 7 : index
    %c0_99 = arith.constant 0 : index
    %c0_100 = arith.constant 0 : index
    %132 = vector.load %arg5[%c7_98, %c0_99, %c0_100] : memref<9x4x16xf32, #tpu.memory_space<vmem>>, vector<1x4x16xf32>
    %133 = vector.shape_cast %132 : vector<1x4x16xf32> to vector<4x16xf32>
    %cst_101 = arith.constant dense<0.000000e+00> : vector<4x512xf32>
    %134 = tpu.matmul %133, %131, %cst_101 {dimension_numbers = #tpu.dot_dimension_numbers<[1], [0], [0], [1], [0, 0, 1, 1], [], []>} : vector<4x16xf32>, vector<16x512xf32>, vector<4x512xf32> -> vector<4x512xf32>
    %135 = arith.addf %127, %134 : vector<4x512xf32>
    %c495_i32_102 = arith.constant 495 : i32
    %136 = tpu.dynamic_rotate %74 by %c495_i32_102 dim 1 : vector<16x512xf32>, i32 -> vector<16x512xf32>
    %c8_103 = arith.constant 8 : index
    %c0_104 = arith.constant 0 : index
    %137 = vector.load %arg2[%c8_103, %c0_104] : memref<9x512xf32, #tpu.memory_space<vmem>>, vector<1x512xf32>
    %138 = vector.broadcast %137 : vector<1x512xf32> to vector<16x512xf32>
    %139 = arith.mulf %136, %138 : vector<16x512xf32>
    %c8_105 = arith.constant 8 : index
    %c0_106 = arith.constant 0 : index
    %c0_107 = arith.constant 0 : index
    %140 = vector.load %arg5[%c8_105, %c0_106, %c0_107] : memref<9x4x16xf32, #tpu.memory_space<vmem>>, vector<1x4x16xf32>
    %141 = vector.shape_cast %140 : vector<1x4x16xf32> to vector<4x16xf32>
    %cst_108 = arith.constant dense<0.000000e+00> : vector<4x512xf32>
    %142 = tpu.matmul %141, %139, %cst_108 {dimension_numbers = #tpu.dot_dimension_numbers<[1], [0], [0], [1], [0, 0, 1, 1], [], []>} : vector<4x16xf32>, vector<16x512xf32>, vector<4x512xf32> -> vector<4x512xf32>
    %143 = arith.addf %135, %142 : vector<4x512xf32>
    %c0_109 = arith.constant 0 : index
    %c0_110 = arith.constant 0 : index
    %144 = vector.load %arg6[%c0_109, %c0_110] : memref<4x1xf32, #tpu.memory_space<vmem>>, vector<4x1xf32>
    %145 = vector.broadcast %144 : vector<4x1xf32> to vector<4x512xf32>
    %146 = arith.addf %143, %145 : vector<4x512xf32>
    %cst_111 = arith.constant 0.000000e+00 : f32
    %147 = vector.broadcast %cst_111 : f32 to vector<4x512xf32>
    %148 = arith.maximumf %146, %147 : vector<4x512xf32>
    %c0_112 = arith.constant 0 : index
    %c0_113 = arith.constant 0 : index
    %149 = vector.load %arg7[%c0_112, %c0_113] : memref<4x512xf32, #tpu.memory_space<vmem>>, vector<4x512xf32>
    tpu.vector_store %arg7[%c0_112, %c0_113], %148 {strides = array<i32>} : memref<4x512xf32, #tpu.memory_space<vmem>>, vector<4x512xf32>,
    return
  }
  func.func @transform_0(%arg0: i32) -> (i32, i32) {
    %c0_i32 = arith.constant 0 : i32
    %c0_i32_0 = arith.constant 0 : i32
    return %c0_i32, %arg0 : i32, i32
  }
  func.func @transform_1(%arg0: i32) -> (i32, i32) {
    %c0_i32 = arith.constant 0 : i32
    %c0_i32_0 = arith.constant 0 : i32
    %c0_i32_1 = arith.constant 0 : i32
    return %c0_i32, %c0_i32_0 : i32, i32
  }
  func.func @transform_2(%arg0: i32) -> (i32, i32, i32) {
    %c0_i32 = arith.constant 0 : i32
    %c0_i32_0 = arith.constant 0 : i32
    %c0_i32_1 = arith.constant 0 : i32
    %c0_i32_2 = arith.constant 0 : i32
    return %c0_i32, %c0_i32_0, %c0_i32_1 : i32, i32, i32
  }
  func.func @transform_3(%arg0: i32) -> (i32, i32) {
    %c0_i32 = arith.constant 0 : i32
    %c0_i32_0 = arith.constant 0 : i32
    %c0_i32_1 = arith.constant 0 : i32
    return %c0_i32, %c0_i32_0 : i32, i32
  }
  func.func @transform_4(%arg0: i32) -> (i32, i32, i32) {
    %c0_i32 = arith.constant 0 : i32
    %c0_i32_0 = arith.constant 0 : i32
    %c0_i32_1 = arith.constant 0 : i32
    %c0_i32_2 = arith.constant 0 : i32
    return %c0_i32, %c0_i32_0, %c0_i32_1 : i32, i32, i32
  }
  func.func @transform_5(%arg0: i32) -> (i32, i32) {
    %c0_i32 = arith.constant 0 : i32
    %c0_i32_0 = arith.constant 0 : i32
    %c0_i32_1 = arith.constant 0 : i32
    return %c0_i32, %c0_i32_0 : i32, i32
  }
  func.func @transform_6(%arg0: i32) -> (i32, i32) {
    %c0_i32 = arith.constant 0 : i32
    %c0_i32_0 = arith.constant 0 : i32
    return %c0_i32, %arg0 : i32, i32
  }
}

</mosaic_0001>

<llo_original>
// kernel: tpu_custom_call.1
$region0: #{tpu_custom_call.1}
  #allocation0 [shape = 'u32[]', space=smem, size = 0x4, offset = 0x4, fixed_abs, tag = 'smem constant byte address 0x4 - core index']
  #allocation1 [shape = 'u32[144,128]{1,0:T(1,128)}', space=vmem, size = 0x12000, scoped, tag = 'internal scratch']
  %s0 = inlined_call_operand.vmem [shape: f32[4,512], index: 0, kind: input, shape index: {}]
  %s1 = inlined_call_operand.vmem [shape: f32[9,512], index: 1, kind: input, shape index: {}]
  %s2 = inlined_call_operand.vmem [shape: f32[9,16,4], index: 2, kind: input, shape index: {}]
  %s3 = inlined_call_operand.vmem [shape: f32[16,1], index: 3, kind: input, shape index: {}]
  %s4 = inlined_call_operand.vmem [shape: f32[9,4,16], index: 4, kind: input, shape index: {}]
  %s5 = inlined_call_operand.vmem [shape: f32[4,1], index: 5, kind: input, shape index: {}]
  %s6 = inlined_call_operand.hbm [shape: f32[4,512], index: 6, kind: output, shape index: {}]
  %s7 = sld [smem:[#allocation0]]
  $region34: #{tpu_custom_call.1} parent=0
    _
  %s9 = ssub.s32 1, %s7
  %s10 = scalar_select 0, %s9, %s7
  $region1: #{tpu_custom_call.1} parent=0
    #allocation2 [shape = 'u8[8192]{0}', space=vmem, size = 0x2000, scoped, tag = 'output window, operand 0, single buffered']
    #allocation3 [shape = 's32[1]{0}', space=sflag, size = 0x4, scoped, tag = 'scoped memory for tpu_custom_call.1']
    %11 = vsyncpa [#allocation3], 0
    // Predicated region
    $region2: #{tpu_custom_call.1} parent=1 // pred_check
      _
    $region3: #{tpu_custom_call.1} parent=1 // pred_check_branch
      %13 = sbr.rel (0) target = $region5
    $region4: #{tpu_custom_call.1} parent=1 // pred_region
      _
    $region5: #{tpu_custom_call.1} parent=1 // pred_fallthru
      _
    // Predicated region
    $region6: #{tpu_custom_call.1} parent=1 // pred_check
      _
    $region7: #{tpu_custom_call.1} parent=1 // pred_check_branch
      %15 = sbr.rel (0) target = $region9
    $region8: #{tpu_custom_call.1} parent=1 // pred_region
      _
    $region9: #{tpu_custom_call.1} parent=1 // pred_fallthru
      _
    // Predicated region
    $region10: #{tpu_custom_call.1} parent=1 // pred_check
      _
    $region11: #{tpu_custom_call.1} parent=1 // pred_check_branch
      %17 = sbr.rel (0) target = $region13
    $region12: #{tpu_custom_call.1} parent=1 // pred_region
      _
    $region13: #{tpu_custom_call.1} parent=1 // pred_fallthru
      _
    // Predicated region
    $region14: #{tpu_custom_call.1} parent=1 // pred_check
      _
    $region15: #{tpu_custom_call.1} parent=1 // pred_check_branch
      %19 = sbr.rel (0) target = $region17
    $region16: #{tpu_custom_call.1} parent=1 // pred_region
      _
    $region17: #{tpu_custom_call.1} parent=1 // pred_fallthru
      _
    // Predicated region
    $region18: #{tpu_custom_call.1} parent=1 // pred_check
      _
    $region19: #{tpu_custom_call.1} parent=1 // pred_check_branch
      %21 = sbr.rel (0) target = $region21
    $region20: #{tpu_custom_call.1} parent=1 // pred_region
      _
    $region21: #{tpu_custom_call.1} parent=1 // pred_fallthru
      _
    // Predicated region
    $region22: #{tpu_custom_call.1} parent=1 // pred_check
      _
    $region23: #{tpu_custom_call.1} parent=1 // pred_check_branch
      %23 = sbr.rel (0) target = $region25
    $region24: #{tpu_custom_call.1} parent=1 // pred_region
      _
    $region25: #{tpu_custom_call.1} parent=1 // pred_fallthru
      _
    %v24 = vld [vmem:[%s0] sm:$0xff]
    %v25 = vld [vmem:[%s0 + $0x8] sm:$0xff]
    %v28 = vcombine.high %v24, %v24
    %v29 = vcombine.high %v25, %v25
    %32 = vrot.lane.b32.xlu0 %v24, 17
    %v33 = vpop.permute.xlu0 %32
    %34 = vrot.lane.b32.xlu0 %v28, 17
    %v35 = vpop.permute.xlu0 %34
    %36 = vrot.lane.b32.xlu0 %v25, 17
    %v37 = vpop.permute.xlu0 %36
    %38 = vrot.lane.b32.xlu0 %v29, 17
    %v39 = vpop.permute.xlu0 %38
    %v40 = vlaneseq
    %v41 = vand.u32 %v40, 127
    %vm42 = vcmp.lt.s32.totalorder %v41, 17
    %v43 = vsel %vm42, %v37, %v39
    %v44 = vsel %vm42, %v35, %v37
    %v45 = vsel %vm42, %v33, %v35
    %v46 = vsel %vm42, %v39, %v33
    %v47 = vld [vmem:[%s1] ss:$8 sm:$0xf]
    %v49 = vlaneseq
    %v50 = vshrl.u32 %v49, 7
    %v51 = vsub.s32 0, %v50
    %v52 = vrot.slane %v47, %v51
    %v53 = vlaneseq
    %v54 = vshrl.u32 %v53, 7
    %v55 = vsub.s32 1, %v54
    %v56 = vrot.slane %v47, %v55
    %v57 = vlaneseq
    %v58 = vshrl.u32 %v57, 7
    %v59 = vsub.s32 2, %v58
    %v60 = vrot.slane %v47, %v59
    %v61 = vlaneseq
    %v62 = vshrl.u32 %v61, 7
    %v63 = vsub.s32 3, %v62
    %v64 = vrot.slane %v47, %v63
    %v69 = vmul.f32 %v46, %v52
    %v70 = vmul.f32 %v45, %v56
    %v71 = vmul.f32 %v44, %v60
    %v72 = vmul.f32 %v43, %v64
    %v73 = vld [vmem:[%s2] sm:$0xff]
    %v74 = vld [vmem:[%s2 + $0x8] sm:$0xff]
    %75 = vrot.lane.b32.xlu0 %v24, 16
    %v76 = vpop.permute.xlu0 %75
    %77 = vrot.lane.b32.xlu0 %v28, 16
    %v78 = vpop.permute.xlu0 %77
    %79 = vrot.lane.b32.xlu0 %v25, 16
    %v80 = vpop.permute.xlu0 %79
    %81 = vrot.lane.b32.xlu0 %v29, 16
    %v82 = vpop.permute.xlu0 %81
    %vm83 = vcmp.lt.s32.totalorder %v41, 16
    %v84 = vsel %vm83, %v80, %v82
    %v85 = vsel %vm83, %v78, %v80
    %v86 = vsel %vm83, %v76, %v78
    %v87 = vsel %vm83, %v82, %v76
    %s88 = scalar_lea.vmem %s1, 1
    %v89 = vld [vmem:[%s88] ss:$8 sm:$0xf]
    %v91 = vlaneseq
    %v92 = vshrl.u32 %v91, 7
    %v93 = vsub.s32 0, %v92
    %v94 = vrot.slane %v89, %v93
    %v95 = vlaneseq
    %v96 = vshrl.u32 %v95, 7
    %v97 = vsub.s32 1, %v96
    %v98 = vrot.slane %v89, %v97
    %v99 = vlaneseq
    %v100 = vshrl.u32 %v99, 7
    %v101 = vsub.s32 2, %v100
    %v102 = vrot.slane %v89, %v101
    %v103 = vlaneseq
    %v104 = vshrl.u32 %v103, 7
    %v105 = vsub.s32 3, %v104
    %v106 = vrot.slane %v89, %v105
    %v111 = vmul.f32 %v87, %v94
    %v112 = vmul.f32 %v86, %v98
    %v113 = vmul.f32 %v85, %v102
    %v114 = vmul.f32 %v84, %v106
    %s115 = scalar_lea.vmem %s2, 16
    %v116 = vld [vmem:[%s115] sm:$0xff]
    %v117 = vld [vmem:[%s115 + $0x8] sm:$0xff]
    %vm118 = vcmask 31744
    %v120 = vsel %vm118, %v116, 0
    %v123 = vsel %vm118, %v117, 0
    %vm125 = vcmask 1043456
    %v127 = vsel %vm125, %v111, 0
    %v130 = vsel %vm125, %v112, 0
    %v133 = vsel %vm125, %v113, 0
    %v136 = vsel %vm125, %v114, 0
    %138 = vmatprep.subr.mxu0 %v130
    %139 = vmatpush1.msra.mxu0 %v127
    %140 = vmatprep.subr.mxu0 0.0
    %141 = vmatpush1.msra.mxu0 0.0
    %142 = vmatprep.subr.mxu0 0.0
    %143 = vmatpush1.msra.mxu0 0.0
    %144 = vmatprep.subr.mxu0 0.0
    %145 = vmatpush1.msra.mxu0 0.0
    %146 = vmatprep.subr.mxu0 0.0
    %147 = vmatpush1.msra.mxu0 0.0
    %148 = vmatprep.subr.mxu0 0.0
    %149 = vmatpush1.msra.mxu0 0.0
    %150 = vmatprep.subr.mxu0 0.0
    %151 = vmatpush1.msra.mxu0 0.0
    %152 = vmatprep.subr.mxu0 0.0
    %153 = vmatpush1.msra.mxu0 0.0
    %154 = vmatprep.subr.mxu0 0.0
    %155 = vmatpush1.msra.mxu0 0.0
    %156 = vmatprep.subr.mxu0 0.0
    %157 = vmatpush1.msra.mxu0 0.0
    %158 = vmatprep.subr.mxu0 0.0
    %159 = vmatpush1.msra.mxu0 0.0
    %160 = vmatprep.subr.mxu0 0.0
    %161 = vmatpush1.msra.mxu0 0.0
    %162 = vmatprep.subr.mxu0 0.0
    %163 = vmatpush1.msra.mxu0 0.0
    %164 = vmatprep.subr.mxu0 0.0
    %165 = vmatpush1.msra.mxu0 0.0
    %166 = vmatprep.subr.mxu0 0.0
    %167 = vmatpush1.msra.mxu0 0.0
    %168 = vmatprep.subr.mxu0 0.0
    %169 = vmatpush1.msra.mxu0 0.0
    %170 = vmatprep.subr.mxu0 0.0
    %171 = vmatpush1.msra.mxu0 0.0
    %172 = vmatprep.subr.mxu0 0.0
    %173 = vmatpush1.msra.mxu0 0.0
    %174 = vmatprep.subr.mxu0 0.0
    %175 = vmatpush1.msra.mxu0 0.0
    %176 = vmatprep.subr.mxu0 0.0
    %177 = vmatpush1.msra.mxu0 0.0
    %178 = vmatprep.subr.mxu0 0.0
    %179 = vmatpush1.msra.mxu0 0.0
    %180 = vmatprep.subr.mxu0 0.0
    %181 = vmatpush1.msra.mxu0 0.0
    %182 = vmatprep.subr.mxu0 0.0
    %183 = vmatpush1.msra.mxu0 0.0
    %184 = vmatprep.subr.mxu0 0.0
    %185 = vmatpush1.msra.mxu0 0.0
    %186 = vmatprep.subr.mxu0 0.0
    %187 = vmatpush1.msra.mxu0 0.0
    %188 = vmatprep.subr.mxu0 0.0
    %189 = vmatpush1.msra.mxu0 0.0
    %190 = vmatprep.subr.mxu0 0.0
    %191 = vmatpush1.msra.mxu0 0.0
    %192 = vmatprep.subr.mxu0 0.0
    %193 = vmatpush1.msra.mxu0 0.0
    %194 = vmatprep.subr.mxu0 0.0
    %195 = vmatpush1.msra.mxu0 0.0
    %196 = vmatprep.subr.mxu0 0.0
    %197 = vmatpush1.msra.mxu0 0.0
    %198 = vmatprep.subr.mxu0 0.0
    %199 = vmatpush1.msra.mxu0 0.0
    %200 = vmatprep.subr.mxu0 0.0
    %201 = vmatpush1.msra.mxu0 0.0
    %202 = vmatprep.mubr.f32.mxu0 0.0
    %203 = vmatmul.mubr.f32.gmra.mrb[0].mxu0 %v120
    %v204 = vpop.f32.mrb[0].mxu0
    %v205 = vadd.f32 0.0, %v204
    %v206 = vpop.f32.mrb[0].mxu0
    %v207 = vadd.f32 0.0, %v206
    %208 = vmatprep.mubr.f32.mxu0 0.0
    %209 = vmatmul.mubr.f32.gmra.mrb[0].mxu0 %v123
    %v210 = vpop.f32.mrb[0].mxu0
    %v211 = vadd.f32 0.0, %v210
    %v212 = vpop.f32.mrb[0].mxu0
    %v213 = vadd.f32 0.0, %v212
    %214 = vdwg.mxu0
    %215 = vmatprep.subr.mxu0 %v136
    %216 = vmatpush1.msra.mxu0 %v133
    %217 = vmatprep.subr.mxu0 0.0
    %218 = vmatpush1.msra.mxu0 0.0
    %219 = vmatprep.subr.mxu0 0.0
    %220 = vmatpush1.msra.mxu0 0.0
    %221 = vmatprep.subr.mxu0 0.0
    %222 = vmatpush1.msra.mxu0 0.0
    %223 = vmatprep.subr.mxu0 0.0
    %224 = vmatpush1.msra.mxu0 0.0
    %225 = vmatprep.subr.mxu0 0.0
    %226 = vmatpush1.msra.mxu0 0.0
    %227 = vmatprep.subr.mxu0 0.0
    %228 = vmatpush1.msra.mxu0 0.0
    %229 = vmatprep.subr.mxu0 0.0
    %230 = vmatpush1.msra.mxu0 0.0
    %231 = vmatprep.subr.mxu0 0.0
    %232 = vmatpush1.msra.mxu0 0.0
    %233 = vmatprep.subr.mxu0 0.0
    %234 = vmatpush1.msra.mxu0 0.0
    %235 = vmatprep.subr.mxu0 0.0
    %236 = vmatpush1.msra.mxu0 0.0
    %237 = vmatprep.subr.mxu0 0.0
    %238 = vmatpush1.msra.mxu0 0.0
    %239 = vmatprep.subr.mxu0 0.0
    %240 = vmatpush1.msra.mxu0 0.0
    %241 = vmatprep.subr.mxu0 0.0
    %242 = vmatpush1.msra.mxu0 0.0
    %243 = vmatprep.subr.mxu0 0.0
    %244 = vmatpush1.msra.mxu0 0.0
    %245 = vmatprep.subr.mxu0 0.0
    %246 = vmatpush1.msra.mxu0 0.0
    %247 = vmatprep.subr.mxu0 0.0
    %248 = vmatpush1.msra.mxu0 0.0
    %249 = vmatprep.subr.mxu0 0.0
    %250 = vmatpush1.msra.mxu0 0.0
    %251 = vmatprep.subr.mxu0 0.0
    %252 = vmatpush1.msra.mxu0 0.0
    %253 = vmatprep.subr.mxu0 0.0
    %254 = vmatpush1.msra.mxu0 0.0
    %255 = vmatprep.subr.mxu0 0.0
    %256 = vmatpush1.msra.mxu0 0.0
    %257 = vmatprep.subr.mxu0 0.0
    %258 = vmatpush1.msra.mxu0 0.0
    %259 = vmatprep.subr.mxu0 0.0
    %260 = vmatpush1.msra.mxu0 0.0
    %261 = vmatprep.subr.mxu0 0.0
    %262 = vmatpush1.msra.mxu0 0.0
    %263 = vmatprep.subr.mxu0 0.0
    %264 = vmatpush1.msra.mxu0 0.0
    %265 = vmatprep.subr.mxu0 0.0
    %266 = vmatpush1.msra.mxu0 0.0
    %267 = vmatprep.subr.mxu0 0.0
    %268 = vmatpush1.msra.mxu0 0.0
    %269 = vmatprep.subr.mxu0 0.0
    %270 = vmatpush1.msra.mxu0 0.0
    %271 = vmatprep.subr.mxu0 0.0
    %272 = vmatpush1.msra.mxu0 0.0
    %273 = vmatprep.subr.mxu0 0.0
    %274 = vmatpush1.msra.mxu0 0.0
    %275 = vmatprep.subr.mxu0 0.0
    %276 = vmatpush1.msra.mxu0 0.0
    %277 = vmatprep.subr.mxu0 0.0
    %278 = vmatpush1.msra.mxu0 0.0
    %279 = vmatprep.mubr.f32.mxu0 0.0
    %280 = vmatmul.mubr.f32.gmra.mrb[0].mxu0 %v120
    %v281 = vpop.f32.mrb[0].mxu0
    %v282 = vadd.f32 0.0, %v281
    %v283 = vpop.f32.mrb[0].mxu0
    %v284 = vadd.f32 0.0, %v283
    %285 = vmatprep.mubr.f32.mxu0 0.0
    %286 = vmatmul.mubr.f32.gmra.mrb[0].mxu0 %v123
    %v287 = vpop.f32.mrb[0].mxu0
    %v288 = vadd.f32 0.0, %v287
    %v289 = vpop.f32.mrb[0].mxu0
    %v290 = vadd.f32 0.0, %v289
    %291 = vdwg.mxu0
    %v293 = vsel %vm118, %v73, 0
    %v296 = vsel %vm118, %v74, 0
    %v299 = vsel %vm125, %v69, 0
    %v302 = vsel %vm125, %v70, 0
    %v305 = vsel %vm125, %v71, 0
    %v308 = vsel %vm125, %v72, 0
    %310 = vmatprep.subr.mxu0 %v302
    %311 = vmatpush1.msra.mxu0 %v299
    %312 = vmatprep.subr.mxu0 0.0
    %313 = vmatpush1.msra.mxu0 0.0
    %314 = vmatprep.subr.mxu0 0.0
    %315 = vmatpush1.msra.mxu0 0.0
    %316 = vmatprep.subr.mxu0 0.0
    %317 = vmatpush1.msra.mxu0 0.0
    %318 = vmatprep.subr.mxu0 0.0
    %319 = vmatpush1.msra.mxu0 0.0
    %320 = vmatprep.subr.mxu0 0.0
    %321 = vmatpush1.msra.mxu0 0.0
    %322 = vmatprep.subr.mxu0 0.0
    %323 = vmatpush1.msra.mxu0 0.0
    %324 = vmatprep.subr.mxu0 0.0
    %325 = vmatpush1.msra.mxu0 0.0
    %326 = vmatprep.subr.mxu0 0.0
    %327 = vmatpush1.msra.mxu0 0.0
    %328 = vmatprep.subr.mxu0 0.0
    %329 = vmatpush1.msra.mxu0 0.0
    %330 = vmatprep.subr.mxu0 0.0
    %331 = vmatpush1.msra.mxu0 0.0
    %332 = vmatprep.subr.mxu0 0.0
    %333 = vmatpush1.msra.mxu0 0.0
    %334 = vmatprep.subr.mxu0 0.0
    %335 = vmatpush1.msra.mxu0 0.0
    %336 = vmatprep.subr.mxu0 0.0
    %337 = vmatpush1.msra.mxu0 0.0
    %338 = vmatprep.subr.mxu0 0.0
    %339 = vmatpush1.msra.mxu0 0.0
    %340 = vmatprep.subr.mxu0 0.0
    %341 = vmatpush1.msra.mxu0 0.0
    %342 = vmatprep.subr.mxu0 0.0
    %343 = vmatpush1.msra.mxu0 0.0
    %344 = vmatprep.subr.mxu0 0.0
    %345 = vmatpush1.msra.mxu0 0.0
    %346 = vmatprep.subr.mxu0 0.0
    %347 = vmatpush1.msra.mxu0 0.0
    %348 = vmatprep.subr.mxu0 0.0
    %349 = vmatpush1.msra.mxu0 0.0
    %350 = vmatprep.subr.mxu0 0.0
    %351 = vmatpush1.msra.mxu0 0.0
    %352 = vmatprep.subr.mxu0 0.0
    %353 = vmatpush1.msra.mxu0 0.0
    %354 = vmatprep.subr.mxu0 0.0
    %355 = vmatpush1.msra.mxu0 0.0
    %356 = vmatprep.subr.mxu0 0.0
    %357 = vmatpush1.msra.mxu0 0.0
    %358 = vmatprep.subr.mxu0 0.0
    %359 = vmatpush1.msra.mxu0 0.0
    %360 = vmatprep.subr.mxu0 0.0
    %361 = vmatpush1.msra.mxu0 0.0
    %362 = vmatprep.subr.mxu0 0.0
    %363 = vmatpush1.msra.mxu0 0.0
    %364 = vmatprep.subr.mxu0 0.0
    %365 = vmatpush1.msra.mxu0 0.0
    %366 = vmatprep.subr.mxu0 0.0
    %367 = vmatpush1.msra.mxu0 0.0
    %368 = vmatprep.subr.mxu0 0.0
    %369 = vmatpush1.msra.mxu0 0.0
    %370 = vmatprep.subr.mxu0 0.0
    %371 = vmatpush1.msra.mxu0 0.0
    %372 = vmatprep.subr.mxu0 0.0
    %373 = vmatpush1.msra.mxu0 0.0
    %374 = vmatprep.mubr.f32.mxu0 0.0
    %375 = vmatmul.mubr.f32.gmra.mrb[0].mxu0 %v293
    %v376 = vpop.f32.mrb[0].mxu0
    %v377 = vadd.f32 %v205, %v376
    %v378 = vpop.f32.mrb[0].mxu0
    %v379 = vadd.f32 %v207, %v378
    %380 = vmatprep.mubr.f32.mxu0 0.0
    %381 = vmatmul.mubr.f32.gmra.mrb[0].mxu0 %v296
    %v382 = vpop.f32.mrb[0].mxu0
    %v383 = vadd.f32 %v211, %v382
    %v384 = vpop.f32.mrb[0].mxu0
    %v385 = vadd.f32 %v213, %v384
    %386 = vdwg.mxu0
    %387 = vmatprep.subr.mxu0 %v308
    %388 = vmatpush1.msra.mxu0 %v305
    %389 = vmatprep.subr.mxu0 0.0
    %390 = vmatpush1.msra.mxu0 0.0
    %391 = vmatprep.subr.mxu0 0.0
    %392 = vmatpush1.msra.mxu0 0.0
    %393 = vmatprep.subr.mxu0 0.0
    %394 = vmatpush1.msra.mxu0 0.0
    %395 = vmatprep.subr.mxu0 0.0
    %396 = vmatpush1.msra.mxu0 0.0
    %397 = vmatprep.subr.mxu0 0.0
    %398 = vmatpush1.msra.mxu0 0.0
    %399 = vmatprep.subr.mxu0 0.0
    %400 = vmatpush1.msra.mxu0 0.0
    %401 = vmatprep.subr.mxu0 0.0
    %402 = vmatpush1.msra.mxu0 0.0
    %403 = vmatprep.subr.mxu0 0.0
    %404 = vmatpush1.msra.mxu0 0.0
    %405 = vmatprep.subr.mxu0 0.0
    %406 = vmatpush1.msra.mxu0 0.0
    %407 = vmatprep.subr.mxu0 0.0
    %408 = vmatpush1.msra.mxu0 0.0
    %409 = vmatprep.subr.mxu0 0.0
    %410 = vmatpush1.msra.mxu0 0.0
    %411 = vmatprep.subr.mxu0 0.0
    %412 = vmatpush1.msra.mxu0 0.0
    %413 = vmatprep.subr.mxu0 0.0
    %414 = vmatpush1.msra.mxu0 0.0
    %415 = vmatprep.subr.mxu0 0.0
    %416 = vmatpush1.msra.mxu0 0.0
    %417 = vmatprep.subr.mxu0 0.0
    %418 = vmatpush1.msra.mxu0 0.0
    %419 = vmatprep.subr.mxu0 0.0
    %420 = vmatpush1.msra.mxu0 0.0
    %421 = vmatprep.subr.mxu0 0.0
    %422 = vmatpush1.msra.mxu0 0.0
    %423 = vmatprep.subr.mxu0 0.0
    %424 = vmatpush1.msra.mxu0 0.0
    %425 = vmatprep.subr.mxu0 0.0
    %426 = vmatpush1.msra.mxu0 0.0
    %427 = vmatprep.subr.mxu0 0.0
    %428 = vmatpush1.msra.mxu0 0.0
    %429 = vmatprep.subr.mxu0 0.0
    %430 = vmatpush1.msra.mxu0 0.0
    %431 = vmatprep.subr.mxu0 0.0
    %432 = vmatpush1.msra.mxu0 0.0
    %433 = vmatprep.subr.mxu0 0.0
    %434 = vmatpush1.msra.mxu0 0.0
    %435 = vmatprep.subr.mxu0 0.0
    %436 = vmatpush1.msra.mxu0 0.0
    %437 = vmatprep.subr.mxu0 0.0
    %438 = vmatpush1.msra.mxu0 0.0
    %439 = vmatprep.subr.mxu0 0.0
    %440 = vmatpush1.msra.mxu0 0.0
    %441 = vmatprep.subr.mxu0 0.0
    %442 = vmatpush1.msra.mxu0 0.0
    %443 = vmatprep.subr.mxu0 0.0
    %444 = vmatpush1.msra.mxu0 0.0
    %445 = vmatprep.subr.mxu0 0.0
    %446 = vmatpush1.msra.mxu0 0.0
    %447 = vmatprep.subr.mxu0 0.0
    %448 = vmatpush1.msra.mxu0 0.0
    %449 = vmatprep.subr.mxu0 0.0
    %450 = vmatpush1.msra.mxu0 0.0
    %451 = vmatprep.mubr.f32.mxu0 0.0
    %452 = vmatmul.mubr.f32.gmra.mrb[0].mxu0 %v293
    %v453 = vpop.f32.mrb[0].mxu0
    %v454 = vadd.f32 %v282, %v453
    %v455 = vpop.f32.mrb[0].mxu0
    %v456 = vadd.f32 %v284, %v455
    %457 = vmatprep.mubr.f32.mxu0 0.0
    %458 = vmatmul.mubr.f32.gmra.mrb[0].mxu0 %v296
    %v459 = vpop.f32.mrb[0].mxu0
    %v460 = vadd.f32 %v288, %v459
    %v461 = vpop.f32.mrb[0].mxu0
    %v462 = vadd.f32 %v290, %v461
    %463 = vdwg.mxu0
    %464 = vrot.lane.b32.xlu0 %v24, 15
    %v465 = vpop.permute.xlu0 %464
    %466 = vrot.lane.b32.xlu0 %v28, 15
    %v467 = vpop.permute.xlu0 %466
    %468 = vrot.lane.b32.xlu0 %v25, 15
    %v469 = vpop.permute.xlu0 %468
    %470 = vrot.lane.b32.xlu0 %v29, 15
    %v471 = vpop.permute.xlu0 %470
    %vm472 = vcmp.lt.s32.totalorder %v41, 15
    %v473 = vsel %vm472, %v469, %v471
    %v474 = vsel %vm472, %v467, %v469
    %v475 = vsel %vm472, %v465, %v467
    %v476 = vsel %vm472, %v471, %v465
    %s477 = scalar_lea.vmem %s1, 2
    %v478 = vld [vmem:[%s477] ss:$8 sm:$0xf]
    %v480 = vlaneseq
    %v481 = vshrl.u32 %v480, 7
    %v482 = vsub.s32 0, %v481
    %v483 = vrot.slane %v478, %v482
    %v484 = vlaneseq
    %v485 = vshrl.u32 %v484, 7
    %v486 = vsub.s32 1, %v485
    %v487 = vrot.slane %v478, %v486
    %v488 = vlaneseq
    %v489 = vshrl.u32 %v488, 7
    %v490 = vsub.s32 2, %v489
    %v491 = vrot.slane %v478, %v490
    %v492 = vlaneseq
    %v493 = vshrl.u32 %v492, 7
    %v494 = vsub.s32 3, %v493
    %v495 = vrot.slane %v478, %v494
    %v500 = vmul.f32 %v476, %v483
    %v501 = vmul.f32 %v475, %v487
    %v502 = vmul.f32 %v474, %v491
    %v503 = vmul.f32 %v473, %v495
    %s504 = scalar_lea.vmem %s2, 32
    %v505 = vld [vmem:[%s504] sm:$0xff]
    %v506 = vld [vmem:[%s504 + $0x8] sm:$0xff]
    %v508 = vsel %vm118, %v505, 0
    %v511 = vsel %vm118, %v506, 0
    %v514 = vsel %vm125, %v500, 0
    %v517 = vsel %vm125, %v501, 0
    %v520 = vsel %vm125, %v502, 0
    %v523 = vsel %vm125, %v503, 0
    %525 = vmatprep.subr.mxu0 %v517
    %526 = vmatpush1.msra.mxu0 %v514
    %527 = vmatprep.subr.mxu0 0.0
    %528 = vmatpush1.msra.mxu0 0.0
    %529 = vmatprep.subr.mxu0 0.0
    %530 = vmatpush1.msra.mxu0 0.0
    %531 = vmatprep.subr.mxu0 0.0
    %532 = vmatpush1.msra.mxu0 0.0
    %533 = vmatprep.subr.mxu0 0.0
    %534 = vmatpush1.msra.mxu0 0.0
    %535 = vmatprep.subr.mxu0 0.0
    %536 = vmatpush1.msra.mxu0 0.0
    %537 = vmatprep.subr.mxu0 0.0
    %538 = vmatpush1.msra.mxu0 0.0
    %539 = vmatprep.subr.mxu0 0.0
    %540 = vmatpush1.msra.mxu0 0.0
    %541 = vmatprep.subr.mxu0 0.0
    %542 = vmatpush1.msra.mxu0 0.0
    %543 = vmatprep.subr.mxu0 0.0
    %544 = vmatpush1.msra.mxu0 0.0
    %545 = vmatprep.subr.mxu0 0.0
    %546 = vmatpush1.msra.mxu0 0.0
    %547 = vmatprep.subr.mxu0 0.0
    %548 = vmatpush1.msra.mxu0 0.0
    %549 = vmatprep.subr.mxu0 0.0
    %550 = vmatpush1.msra.mxu0 0.0
    %551 = vmatprep.subr.mxu0 0.0
    %552 = vmatpush1.msra.mxu0 0.0
    %553 = vmatprep.subr.mxu0 0.0
    %554 = vmatpush1.msra.mxu0 0.0
    %555 = vmatprep.subr.mxu0 0.0
    %556 = vmatpush1.msra.mxu0 0.0
    %557 = vmatprep.subr.mxu0 0.0
    %558 = vmatpush1.msra.mxu0 0.0
    %559 = vmatprep.subr.mxu0 0.0
    %560 = vmatpush1.msra.mxu0 0.0
    %561 = vmatprep.subr.mxu0 0.0
    %562 = vmatpush1.msra.mxu0 0.0
    %563 = vmatprep.subr.mxu0 0.0
    %564 = vmatpush1.msra.mxu0 0.0
    %565 = vmatprep.subr.mxu0 0.0
    %566 = vmatpush1.msra.mxu0 0.0
    %567 = vmatprep.subr.mxu0 0.0
    %568 = vmatpush1.msra.mxu0 0.0
    %569 = vmatprep.subr.mxu0 0.0
    %570 = vmatpush1.msra.mxu0 0.0
    %571 = vmatprep.subr.mxu0 0.0
    %572 = vmatpush1.msra.mxu0 0.0
    %573 = vmatprep.subr.mxu0 0.0
    %574 = vmatpush1.msra.mxu0 0.0
    %575 = vmatprep.subr.mxu0 0.0
    %576 = vmatpush1.msra.mxu0 0.0
    %577 = vmatprep.subr.mxu0 0.0
    %578 = vmatpush1.msra.mxu0 0.0
    %579 = vmatprep.subr.mxu0 0.0
    %580 = vmatpush1.msra.mxu0 0.0
    %581 = vmatprep.subr.mxu0 0.0
    %582 = vmatpush1.msra.mxu0 0.0
    %583 = vmatprep.subr.mxu0 0.0
    %584 = vmatpush1.msra.mxu0 0.0
    %585 = vmatprep.subr.mxu0 0.0
    %586 = vmatpush1.msra.mxu0 0.0
    %587 = vmatprep.subr.mxu0 0.0
    %588 = vmatpush1.msra.mxu0 0.0
    %589 = vmatprep.mubr.f32.mxu0 0.0
    %590 = vmatmul.mubr.f32.gmra.mrb[0].mxu0 %v508
    %v591 = vpop.f32.mrb[0].mxu0
    %v592 = vadd.f32 0.0, %v591
    %v593 = vpop.f32.mrb[0].mxu0
    %v594 = vadd.f32 0.0, %v593
    %595 = vmatprep.mubr.f32.mxu0 0.0
    %596 = vmatmul.mubr.f32.gmra.mrb[0].mxu0 %v511
    %v597 = vpop.f32.mrb[0].mxu0
    %v598 = vadd.f32 0.0, %v597
    %v599 = vpop.f32.mrb[0].mxu0
    %v600 = vadd.f32 0.0, %v599
    %601 = vdwg.mxu0
    %602 = vmatprep.subr.mxu0 %v523
    %603 = vmatpush1.msra.mxu0 %v520
    %604 = vmatprep.subr.mxu0 0.0
    %605 = vmatpush1.msra.mxu0 0.0
    %606 = vmatprep.subr.mxu0 0.0
    %607 = vmatpush1.msra.mxu0 0.0
    %608 = vmatprep.subr.mxu0 0.0
    %609 = vmatpush1.msra.mxu0 0.0
    %610 = vmatprep.subr.mxu0 0.0
    %611 = vmatpush1.msra.mxu0 0.0
    %612 = vmatprep.subr.mxu0 0.0
    %613 = vmatpush1.msra.mxu0 0.0
    %614 = vmatprep.subr.mxu0 0.0
    %615 = vmatpush1.msra.mxu0 0.0
    %616 = vmatprep.subr.mxu0 0.0
    %617 = vmatpush1.msra.mxu0 0.0
    %618 = vmatprep.subr.mxu0 0.0
    %619 = vmatpush1.msra.mxu0 0.0
    %620 = vmatprep.subr.mxu0 0.0
    %621 = vmatpush1.msra.mxu0 0.0
    %622 = vmatprep.subr.mxu0 0.0
    %623 = vmatpush1.msra.mxu0 0.0
    %624 = vmatprep.subr.mxu0 0.0
    %625 = vmatpush1.msra.mxu0 0.0
    %626 = vmatprep.subr.mxu0 0.0
    %627 = vmatpush1.msra.mxu0 0.0
    %628 = vmatprep.subr.mxu0 0.0
    %629 = vmatpush1.msra.mxu0 0.0
    %630 = vmatprep.subr.mxu0 0.0
    %631 = vmatpush1.msra.mxu0 0.0
    %632 = vmatprep.subr.mxu0 0.0
    %633 = vmatpush1.msra.mxu0 0.0
    %634 = vmatprep.subr.mxu0 0.0
    %635 = vmatpush1.msra.mxu0 0.0
    %636 = vmatprep.subr.mxu0 0.0
    %637 = vmatpush1.msra.mxu0 0.0
    %638 = vmatprep.subr.mxu0 0.0
    %639 = vmatpush1.msra.mxu0 0.0
    %640 = vmatprep.subr.mxu0 0.0
    %641 = vmatpush1.msra.mxu0 0.0
    %642 = vmatprep.subr.mxu0 0.0
    %643 = vmatpush1.msra.mxu0 0.0
    %644 = vmatprep.subr.mxu0 0.0
    %645 = vmatpush1.msra.mxu0 0.0
    %646 = vmatprep.subr.mxu0 0.0
    %647 = vmatpush1.msra.mxu0 0.0
    %648 = vmatprep.subr.mxu0 0.0
    %649 = vmatpush1.msra.mxu0 0.0
    %650 = vmatprep.subr.mxu0 0.0
    %651 = vmatpush1.msra.mxu0 0.0
    %652 = vmatprep.subr.mxu0 0.0
    %653 = vmatpush1.msra.mxu0 0.0
    %654 = vmatprep.subr.mxu0 0.0
    %655 = vmatpush1.msra.mxu0 0.0
    %656 = vmatprep.subr.mxu0 0.0
    %657 = vmatpush1.msra.mxu0 0.0
    %658 = vmatprep.subr.mxu0 0.0
    %659 = vmatpush1.msra.mxu0 0.0
    %660 = vmatprep.subr.mxu0 0.0
    %661 = vmatpush1.msra.mxu0 0.0
    %662 = vmatprep.subr.mxu0 0.0
    %663 = vmatpush1.msra.mxu0 0.0
    %664 = vmatprep.subr.mxu0 0.0
    %665 = vmatpush1.msra.mxu0 0.0
    %666 = vmatprep.mubr.f32.mxu0 0.0
    %667 = vmatmul.mubr.f32.gmra.mrb[0].mxu0 %v508
    %v668 = vpop.f32.mrb[0].mxu0
    %v669 = vadd.f32 0.0, %v668
    %v670 = vpop.f32.mrb[0].mxu0
    %v671 = vadd.f32 0.0, %v670
    %672 = vmatprep.mubr.f32.mxu0 0.0
    %673 = vmatmul.mubr.f32.gmra.mrb[0].mxu0 %v511
    %v674 = vpop.f32.mrb[0].mxu0
    %v675 = vadd.f32 0.0, %v674
    %v676 = vpop.f32.mrb[0].mxu0
    %v677 = vadd.f32 0.0, %v676
    %678 = vdwg.mxu0
    %v679 = vadd.f32 %v377, %v592
    %v680 = vadd.f32 %v379, %v594
    %v681 = vadd.f32 %v454, %v669
    %v682 = vadd.f32 %v456, %v671
    %v683 = vadd.f32 %v383, %v598
    %v684 = vadd.f32 %v385, %v600
    %v685 = vadd.f32 %v460, %v675
    %v686 = vadd.f32 %v462, %v677
    %687 = vrot.lane.b32.xlu0 %v24, 1
    %v688 = vpop.permute.xlu0 %687
    %689 = vrot.lane.b32.xlu0 %v28, 1
    %v690 = vpop.permute.xlu0 %689
    %691 = vrot.lane.b32.xlu0 %v25, 1
    %v692 = vpop.permute.xlu0 %691
    %693 = vrot.lane.b32.xlu0 %v29, 1
    %v694 = vpop.permute.xlu0 %693
    %vm695 = vcmp.lt.s32.totalorder %v41, 1
    %v696 = vsel %vm695, %v692, %v694
    %v697 = vsel %vm695, %v690, %v692
    %v698 = vsel %vm695, %v688, %v690
    %v699 = vsel %vm695, %v694, %v688
    %s700 = scalar_lea.vmem %s1, 3
    %v701 = vld [vmem:[%s700] ss:$8 sm:$0xf]
    %v703 = vlaneseq
    %v704 = vshrl.u32 %v703, 7
    %v705 = vsub.s32 0, %v704
    %v706 = vrot.slane %v701, %v705
    %v707 = vlaneseq
    %v708 = vshrl.u32 %v707, 7
    %v709 = vsub.s32 1, %v708
    %v710 = vrot.slane %v701, %v709
    %v711 = vlaneseq
    %v712 = vshrl.u32 %v711, 7
    %v713 = vsub.s32 2, %v712
    %v714 = vrot.slane %v701, %v713
    %v715 = vlaneseq
    %v716 = vshrl.u32 %v715, 7
    %v717 = vsub.s32 3, %v716
    %v718 = vrot.slane %v701, %v717
    %v723 = vmul.f32 %v699, %v706
    %v724 = vmul.f32 %v698, %v710
    %v725 = vmul.f32 %v697, %v714
    %v726 = vmul.f32 %v696, %v718
    %s727 = scalar_lea.vmem %s2, 48
    %v728 = vld [vmem:[%s727] sm:$0xff]
    %v729 = vld [vmem:[%s727 + $0x8] sm:$0xff]
    %v731 = vsel %vm118, %v728, 0
    %v734 = vsel %vm118, %v729, 0
    %v737 = vsel %vm125, %v723, 0
    %v740 = vsel %vm125, %v724, 0
    %v743 = vsel %vm125, %v725, 0
    %v746 = vsel %vm125, %v726, 0
    %748 = vmatprep.subr.mxu0 %v740
    %749 = vmatpush1.msra.mxu0 %v737
    %750 = vmatprep.subr.mxu0 0.0
    %751 = vmatpush1.msra.mxu0 0.0
    %752 = vmatprep.subr.mxu0 0.0
    %753 = vmatpush1.msra.mxu0 0.0
    %754 = vmatprep.subr.mxu0 0.0
    %755 = vmatpush1.msra.mxu0 0.0
    %756 = vmatprep.subr.mxu0 0.0
    %757 = vmatpush1.msra.mxu0 0.0
    %758 = vmatprep.subr.mxu0 0.0
    %759 = vmatpush1.msra.mxu0 0.0
    %760 = vmatprep.subr.mxu0 0.0
    %761 = vmatpush1.msra.mxu0 0.0
    %762 = vmatprep.subr.mxu0 0.0
    %763 = vmatpush1.msra.mxu0 0.0
    %764 = vmatprep.subr.mxu0 0.0
    %765 = vmatpush1.msra.mxu0 0.0
    %766 = vmatprep.subr.mxu0 0.0
    %767 = vmatpush1.msra.mxu0 0.0
    %768 = vmatprep.subr.mxu0 0.0
    %769 = vmatpush1.msra.mxu0 0.0
    %770 = vmatprep.subr.mxu0 0.0
    %771 = vmatpush1.msra.mxu0 0.0
    %772 = vmatprep.subr.mxu0 0.0
    %773 = vmatpush1.msra.mxu0 0.0
    %774 = vmatprep.subr.mxu0 0.0
    %775 = vmatpush1.msra.mxu0 0.0
    %776 = vmatprep.subr.mxu0 0.0
    %777 = vmatpush1.msra.mxu0 0.0
    %778 = vmatprep.subr.mxu0 0.0
    %779 = vmatpush1.msra.mxu0 0.0
    %780 = vmatprep.subr.mxu0 0.0
    %781 = vmatpush1.msra.mxu0 0.0
    %782 = vmatprep.subr.mxu0 0.0
    %783 = vmatpush1.msra.mxu0 0.0
    %784 = vmatprep.subr.mxu0 0.0
    %785 = vmatpush1.msra.mxu0 0.0
    %786 = vmatprep.subr.mxu0 0.0
    %787 = vmatpush1.msra.mxu0 0.0
    %788 = vmatprep.subr.mxu0 0.0
    %789 = vmatpush1.msra.mxu0 0.0
    %790 = vmatprep.subr.mxu0 0.0
    %791 = vmatpush1.msra.mxu0 0.0
    %792 = vmatprep.subr.mxu0 0.0
    %793 = vmatpush1.msra.mxu0 0.0
    %794 = vmatprep.subr.mxu0 0.0
    %795 = vmatpush1.msra.mxu0 0.0
    %796 = vmatprep.subr.mxu0 0.0
    %797 = vmatpush1.msra.mxu0 0.0
    %798 = vmatprep.subr.mxu0 0.0
    %799 = vmatpush1.msra.mxu0 0.0
    %800 = vmatprep.subr.mxu0 0.0
    %801 = vmatpush1.msra.mxu0 0.0
    %802 = vmatprep.subr.mxu0 0.0
    %803 = vmatpush1.msra.mxu0 0.0
    %804 = vmatprep.subr.mxu0 0.0
    %805 = vmatpush1.msra.mxu0 0.0
    %806 = vmatprep.subr.mxu0 0.0
    %807 = vmatpush1.msra.mxu0 0.0
    %808 = vmatprep.subr.mxu0 0.0
    %809 = vmatpush1.msra.mxu0 0.0
    %810 = vmatprep.subr.mxu0 0.0
    %811 = vmatpush1.msra.mxu0 0.0
    %812 = vmatprep.mubr.f32.mxu0 0.0
    %813 = vmatmul.mubr.f32.gmra.mrb[0].mxu0 %v731
    %v814 = vpop.f32.mrb[0].mxu0
    %v815 = vadd.f32 0.0, %v814
    %v816 = vpop.f32.mrb[0].mxu0
    %v817 = vadd.f32 0.0, %v816
    %818 = vmatprep.mubr.f32.mxu0 0.0
    %819 = vmatmul.mubr.f32.gmra.mrb[0].mxu0 %v734
    %v820 = vpop.f32.mrb[0].mxu0
    %v821 = vadd.f32 0.0, %v820
    %v822 = vpop.f32.mrb[0].mxu0
    %v823 = vadd.f32 0.0, %v822
    %824 = vdwg.mxu0
    %825 = vmatprep.subr.mxu0 %v746
    %826 = vmatpush1.msra.mxu0 %v743
    %827 = vmatprep.subr.mxu0 0.0
    %828 = vmatpush1.msra.mxu0 0.0
    %829 = vmatprep.subr.mxu0 0.0
    %830 = vmatpush1.msra.mxu0 0.0
    %831 = vmatprep.subr.mxu0 0.0
    %832 = vmatpush1.msra.mxu0 0.0
    %833 = vmatprep.subr.mxu0 0.0
    %834 = vmatpush1.msra.mxu0 0.0
    %835 = vmatprep.subr.mxu0 0.0
    %836 = vmatpush1.msra.mxu0 0.0
    %837 = vmatprep.subr.mxu0 0.0
    %838 = vmatpush1.msra.mxu0 0.0
    %839 = vmatprep.subr.mxu0 0.0
    %840 = vmatpush1.msra.mxu0 0.0
    %841 = vmatprep.subr.mxu0 0.0
    %842 = vmatpush1.msra.mxu0 0.0
    %843 = vmatprep.subr.mxu0 0.0
    %844 = vmatpush1.msra.mxu0 0.0
    %845 = vmatprep.subr.mxu0 0.0
    %846 = vmatpush1.msra.mxu0 0.0
    %847 = vmatprep.subr.mxu0 0.0
    %848 = vmatpush1.msra.mxu0 0.0
    %849 = vmatprep.subr.mxu0 0.0
    %850 = vmatpush1.msra.mxu0 0.0
    %851 = vmatprep.subr.mxu0 0.0
    %852 = vmatpush1.msra.mxu0 0.0
    %853 = vmatprep.subr.mxu0 0.0
    %854 = vmatpush1.msra.mxu0 0.0
    %855 = vmatprep.subr.mxu0 0.0
    %856 = vmatpush1.msra.mxu0 0.0
    %857 = vmatprep.subr.mxu0 0.0
    %858 = vmatpush1.msra.mxu0 0.0
    %859 = vmatprep.subr.mxu0 0.0
    %860 = vmatpush1.msra.mxu0 0.0
    %861 = vmatprep.subr.mxu0 0.0
    %862 = vmatpush1.msra.mxu0 0.0
    %863 = vmatprep.subr.mxu0 0.0
    %864 = vmatpush1.msra.mxu0 0.0
    %865 = vmatprep.subr.mxu0 0.0
    %866 = vmatpush1.msra.mxu0 0.0
    %867 = vmatprep.subr.mxu0 0.0
    %868 = vmatpush1.msra.mxu0 0.0
    %869 = vmatprep.subr.mxu0 0.0
    %870 = vmatpush1.msra.mxu0 0.0
    %871 = vmatprep.subr.mxu0 0.0
    %872 = vmatpush1.msra.mxu0 0.0
    %873 = vmatprep.subr.mxu0 0.0
    %874 = vmatpush1.msra.mxu0 0.0
    %875 = vmatprep.subr.mxu0 0.0
    %876 = vmatpush1.msra.mxu0 0.0
    %877 = vmatprep.subr.mxu0 0.0
    %878 = vmatpush1.msra.mxu0 0.0
    %879 = vmatprep.subr.mxu0 0.0
    %880 = vmatpush1.msra.mxu0 0.0
    %881 = vmatprep.subr.mxu0 0.0
    %882 = vmatpush1.msra.mxu0 0.0
    %883 = vmatprep.subr.mxu0 0.0
    %884 = vmatpush1.msra.mxu0 0.0
    %885 = vmatprep.subr.mxu0 0.0
    %886 = vmatpush1.msra.mxu0 0.0
    %887 = vmatprep.subr.mxu0 0.0
    %888 = vmatpush1.msra.mxu0 0.0
    %889 = vmatprep.mubr.f32.mxu0 0.0
    %890 = vmatmul.mubr.f32.gmra.mrb[0].mxu0 %v731
    %v891 = vpop.f32.mrb[0].mxu0
    %v892 = vadd.f32 0.0, %v891
    %v893 = vpop.f32.mrb[0].mxu0
    %v894 = vadd.f32 0.0, %v893
    %895 = vmatprep.mubr.f32.mxu0 0.0
    %896 = vmatmul.mubr.f32.gmra.mrb[0].mxu0 %v734
    %v897 = vpop.f32.mrb[0].mxu0
    %v898 = vadd.f32 0.0, %v897
    %v899 = vpop.f32.mrb[0].mxu0
    %v900 = vadd.f32 0.0, %v899
    %901 = vdwg.mxu0
    %v902 = vadd.f32 %v679, %v815
    %v903 = vadd.f32 %v680, %v817
    %v904 = vadd.f32 %v681, %v892
    %v905 = vadd.f32 %v682, %v894
    %v906 = vadd.f32 %v683, %v821
    %v907 = vadd.f32 %v684, %v823
    %v908 = vadd.f32 %v685, %v898
    %v909 = vadd.f32 %v686, %v900
    %s910 = scalar_lea.vmem %s2, 64
    %v911 = vld [vmem:[%s910] sm:$0xff]
    %v912 = vld [vmem:[%s910 + $0x8] sm:$0xff]
    %v914 = vsel %vm118, %v911, 0
    %v917 = vsel %vm118, %v912, 0
    %v919 = vsel %vm125, %v24, 0
    %v921 = vsel %vm125, %v28, 0
    %v923 = vsel %vm125, %v25, 0
    %v925 = vsel %vm125, %v29, 0
    %927 = vmatprep.subr.mxu0 %v921
    %928 = vmatpush1.msra.mxu0 %v919
    %929 = vmatprep.subr.mxu0 0.0
    %930 = vmatpush1.msra.mxu0 0.0
    %931 = vmatprep.subr.mxu0 0.0
    %932 = vmatpush1.msra.mxu0 0.0
    %933 = vmatprep.subr.mxu0 0.0
    %934 = vmatpush1.msra.mxu0 0.0
    %935 = vmatprep.subr.mxu0 0.0
    %936 = vmatpush1.msra.mxu0 0.0
    %937 = vmatprep.subr.mxu0 0.0
    %938 = vmatpush1.msra.mxu0 0.0
    %939 = vmatprep.subr.mxu0 0.0
    %940 = vmatpush1.msra.mxu0 0.0
    %941 = vmatprep.subr.mxu0 0.0
    %942 = vmatpush1.msra.mxu0 0.0
    %943 = vmatprep.subr.mxu0 0.0
    %944 = vmatpush1.msra.mxu0 0.0
    %945 = vmatprep.subr.mxu0 0.0
    %946 = vmatpush1.msra.mxu0 0.0
    %947 = vmatprep.subr.mxu0 0.0
    %948 = vmatpush1.msra.mxu0 0.0
    %949 = vmatprep.subr.mxu0 0.0
    %950 = vmatpush1.msra.mxu0 0.0
    %951 = vmatprep.subr.mxu0 0.0
    %952 = vmatpush1.msra.mxu0 0.0
    %953 = vmatprep.subr.mxu0 0.0
    %954 = vmatpush1.msra.mxu0 0.0
    %955 = vmatprep.subr.mxu0 0.0
    %956 = vmatpush1.msra.mxu0 0.0
    %957 = vmatprep.subr.mxu0 0.0
    %958 = vmatpush1.msra.mxu0 0.0
    %959 = vmatprep.subr.mxu0 0.0
    %960 = vmatpush1.msra.mxu0 0.0
    %961 = vmatprep.subr.mxu0 0.0
    %962 = vmatpush1.msra.mxu0 0.0
    %963 = vmatprep.subr.mxu0 0.0
    %964 = vmatpush1.msra.mxu0 0.0
    %965 = vmatprep.subr.mxu0 0.0
    %966 = vmatpush1.msra.mxu0 0.0
    %967 = vmatprep.subr.mxu0 0.0
    %968 = vmatpush1.msra.mxu0 0.0
    %969 = vmatprep.subr.mxu0 0.0
    %970 = vmatpush1.msra.mxu0 0.0
    %971 = vmatprep.subr.mxu0 0.0
    %972 = vmatpush1.msra.mxu0 0.0
    %973 = vmatprep.subr.mxu0 0.0
    %974 = vmatpush1.msra.mxu0 0.0
    %975 = vmatprep.subr.mxu0 0.0
    %976 = vmatpush1.msra.mxu0 0.0
    %977 = vmatprep.subr.mxu0 0.0
    %978 = vmatpush1.msra.mxu0 0.0
    %979 = vmatprep.subr.mxu0 0.0
    %980 = vmatpush1.msra.mxu0 0.0
    %981 = vmatprep.subr.mxu0 0.0
    %982 = vmatpush1.msra.mxu0 0.0
    %983 = vmatprep.subr.mxu0 0.0
    %984 = vmatpush1.msra.mxu0 0.0
    %985 = vmatprep.subr.mxu0 0.0
    %986 = vmatpush1.msra.mxu0 0.0
    %987 = vmatprep.subr.mxu0 0.0
    %988 = vmatpush1.msra.mxu0 0.0
    %989 = vmatprep.subr.mxu0 0.0
    %990 = vmatpush1.msra.mxu0 0.0
    %991 = vmatprep.mubr.f32.mxu0 0.0
    %992 = vmatmul.mubr.f32.gmra.mrb[0].mxu0 %v914
    %v993 = vpop.f32.mrb[0].mxu0
    %v994 = vadd.f32 0.0, %v993
    %v995 = vpop.f32.mrb[0].mxu0
    %v996 = vadd.f32 0.0, %v995
    %997 = vmatprep.mubr.f32.mxu0 0.0
    %998 = vmatmul.mubr.f32.gmra.mrb[0].mxu0 %v917
    %v999 = vpop.f32.mrb[0].mxu0
    %v1000 = vadd.f32 0.0, %v999
    %v1001 = vpop.f32.mrb[0].mxu0
    %v1002 = vadd.f32 0.0, %v1001
    %1003 = vdwg.mxu0
    %1004 = vmatprep.subr.mxu0 %v925
    %1005 = vmatpush1.msra.mxu0 %v923
    %1006 = vmatprep.subr.mxu0 0.0
    %1007 = vmatpush1.msra.mxu0 0.0
    %1008 = vmatprep.subr.mxu0 0.0
    %1009 = vmatpush1.msra.mxu0 0.0
    %1010 = vmatprep.subr.mxu0 0.0
    %1011 = vmatpush1.msra.mxu0 0.0
    %1012 = vmatprep.subr.mxu0 0.0
    %1013 = vmatpush1.msra.mxu0 0.0
    %1014 = vmatprep.subr.mxu0 0.0
    %1015 = vmatpush1.msra.mxu0 0.0
    %1016 = vmatprep.subr.mxu0 0.0
    %1017 = vmatpush1.msra.mxu0 0.0
    %1018 = vmatprep.subr.mxu0 0.0
    %1019 = vmatpush1.msra.mxu0 0.0
    %1020 = vmatprep.subr.mxu0 0.0
    %1021 = vmatpush1.msra.mxu0 0.0
    %1022 = vmatprep.subr.mxu0 0.0
    %1023 = vmatpush1.msra.mxu0 0.0
    %1024 = vmatprep.subr.mxu0 0.0
    %1025 = vmatpush1.msra.mxu0 0.0
    %1026 = vmatprep.subr.mxu0 0.0
    %1027 = vmatpush1.msra.mxu0 0.0
    %1028 = vmatprep.subr.mxu0 0.0
    %1029 = vmatpush1.msra.mxu0 0.0
    %1030 = vmatprep.subr.mxu0 0.0
    %1031 = vmatpush1.msra.mxu0 0.0
    %1032 = vmatprep.subr.mxu0 0.0
    %1033 = vmatpush1.msra.mxu0 0.0
    %1034 = vmatprep.subr.mxu0 0.0
    %1035 = vmatpush1.msra.mxu0 0.0
    %1036 = vmatprep.subr.mxu0 0.0
    %1037 = vmatpush1.msra.mxu0 0.0
    %1038 = vmatprep.subr.mxu0 0.0
    %1039 = vmatpush1.msra.mxu0 0.0
    %1040 = vmatprep.subr.mxu0 0.0
    %1041 = vmatpush1.msra.mxu0 0.0
    %1042 = vmatprep.subr.mxu0 0.0
    %1043 = vmatpush1.msra.mxu0 0.0
    %1044 = vmatprep.subr.mxu0 0.0
    %1045 = vmatpush1.msra.mxu0 0.0
    %1046 = vmatprep.subr.mxu0 0.0
    %1047 = vmatpush1.msra.mxu0 0.0
    %1048 = vmatprep.subr.mxu0 0.0
    %1049 = vmatpush1.msra.mxu0 0.0
    %1050 = vmatprep.subr.mxu0 0.0
    %1051 = vmatpush1.msra.mxu0 0.0
    %1052 = vmatprep.subr.mxu0 0.0
    %1053 = vmatpush1.msra.mxu0 0.0
    %1054 = vmatprep.subr.mxu0 0.0
    %1055 = vmatpush1.msra.mxu0 0.0
    %1056 = vmatprep.subr.mxu0 0.0
    %1057 = vmatpush1.msra.mxu0 0.0
    %1058 = vmatprep.subr.mxu0 0.0
    %1059 = vmatpush1.msra.mxu0 0.0
    %1060 = vmatprep.subr.mxu0 0.0
    %1061 = vmatpush1.msra.mxu0 0.0
    %1062 = vmatprep.subr.mxu0 0.0
    %1063 = vmatpush1.msra.mxu0 0.0
    %1064 = vmatprep.subr.mxu0 0.0
    %1065 = vmatpush1.msra.mxu0 0.0
    %1066 = vmatprep.subr.mxu0 0.0
    %1067 = vmatpush1.msra.mxu0 0.0
    %1068 = vmatprep.mubr.f32.mxu0 0.0
    %1069 = vmatmul.mubr.f32.gmra.mrb[0].mxu0 %v914
    %v1070 = vpop.f32.mrb[0].mxu0
    %v1071 = vadd.f32 0.0, %v1070
    %v1072 = vpop.f32.mrb[0].mxu0
    %v1073 = vadd.f32 0.0, %v1072
    %1074 = vmatprep.mubr.f32.mxu0 0.0
    %1075 = vmatmul.mubr.f32.gmra.mrb[0].mxu0 %v917
    %v1076 = vpop.f32.mrb[0].mxu0
    %v1077 = vadd.f32 0.0, %v1076
    %v1078 = vpop.f32.mrb[0].mxu0
    %v1079 = vadd.f32 0.0, %v1078
    %1080 = vdwg.mxu0
    %v1081 = vadd.f32 %v902, %v994
    %v1082 = vadd.f32 %v903, %v996
    %v1083 = vadd.f32 %v904, %v1071
    %v1084 = vadd.f32 %v905, %v1073
    %v1085 = vadd.f32 %v906, %v1000
    %v1086 = vadd.f32 %v907, %v1002
    %v1087 = vadd.f32 %v908, %v1077
    %v1088 = vadd.f32 %v909, %v1079
    %1089 = vrot.lane.b32.xlu0 %v24, 127
    %v1090 = vpop.permute.xlu0 %1089
    %1091 = vrot.lane.b32.xlu0 %v28, 127
    %v1092 = vpop.permute.xlu0 %1091
    %1093 = vrot.lane.b32.xlu0 %v25, 127
    %v1094 = vpop.permute.xlu0 %1093
    %1095 = vrot.lane.b32.xlu0 %v29, 127
    %v1096 = vpop.permute.xlu0 %1095
    %vm1097 = vcmp.lt.s32.totalorder %v41, 127
    %v1098 = vsel %vm1097, %v1094, %v1096
    %v1099 = vsel %vm1097, %v1092, %v1094
    %v1100 = vsel %vm1097, %v1090, %v1092
    %v1101 = vsel %vm1097, %v1096, %v1090
    %s1102 = scalar_lea.vmem %s1, 5
    %v1103 = vld [vmem:[%s1102] ss:$8 sm:$0xf]
    %v1105 = vlaneseq
    %v1106 = vshrl.u32 %v1105, 7
    %v1107 = vsub.s32 0, %v1106
    %v1108 = vrot.slane %v1103, %v1107
    %v1109 = vlaneseq
    %v1110 = vshrl.u32 %v1109, 7
    %v1111 = vsub.s32 1, %v1110
    %v1112 = vrot.slane %v1103, %v1111
    %v1113 = vlaneseq
    %v1114 = vshrl.u32 %v1113, 7
    %v1115 = vsub.s32 2, %v1114
    %v1116 = vrot.slane %v1103, %v1115
    %v1117 = vlaneseq
    %v1118 = vshrl.u32 %v1117, 7
    %v1119 = vsub.s32 3, %v1118
    %v1120 = vrot.slane %v1103, %v1119
    %v1125 = vmul.f32 %v1100, %v1108
    %v1126 = vmul.f32 %v1099, %v1112
    %v1127 = vmul.f32 %v1098, %v1116
    %v1128 = vmul.f32 %v1101, %v1120
    %s1129 = scalar_lea.vmem %s2, 80
    %v1130 = vld [vmem:[%s1129] sm:$0xff]
    %v1131 = vld [vmem:[%s1129 + $0x8] sm:$0xff]
    %v1133 = vsel %vm118, %v1130, 0
    %v1136 = vsel %vm118, %v1131, 0
    %v1139 = vsel %vm125, %v1125, 0
    %v1142 = vsel %vm125, %v1126, 0
    %v1145 = vsel %vm125, %v1127, 0
    %v1148 = vsel %vm125, %v1128, 0
    %1150 = vmatprep.subr.mxu0 %v1142
    %1151 = vmatpush1.msra.mxu0 %v1139
    %1152 = vmatprep.subr.mxu0 0.0
    %1153 = vmatpush1.msra.mxu0 0.0
    %1154 = vmatprep.subr.mxu0 0.0
    %1155 = vmatpush1.msra.mxu0 0.0
    %1156 = vmatprep.subr.mxu0 0.0
    %1157 = vmatpush1.msra.mxu0 0.0
    %1158 = vmatprep.subr.mxu0 0.0
    %1159 = vmatpush1.msra.mxu0 0.0
    %1160 = vmatprep.subr.mxu0 0.0
    %1161 = vmatpush1.msra.mxu0 0.0
    %1162 = vmatprep.subr.mxu0 0.0
    %1163 = vmatpush1.msra.mxu0 0.0
    %1164 = vmatprep.subr.mxu0 0.0
    %1165 = vmatpush1.msra.mxu0 0.0
    %1166 = vmatprep.subr.mxu0 0.0
    %1167 = vmatpush1.msra.mxu0 0.0
    %1168 = vmatprep.subr.mxu0 0.0
    %1169 = vmatpush1.msra.mxu0 0.0
    %1170 = vmatprep.subr.mxu0 0.0
    %1171 = vmatpush1.msra.mxu0 0.0
    %1172 = vmatprep.subr.mxu0 0.0
    %1173 = vmatpush1.msra.mxu0 0.0
    %1174 = vmatprep.subr.mxu0 0.0
    %1175 = vmatpush1.msra.mxu0 0.0
    %1176 = vmatprep.subr.mxu0 0.0
    %1177 = vmatpush1.msra.mxu0 0.0
    %1178 = vmatprep.subr.mxu0 0.0
    %1179 = vmatpush1.msra.mxu0 0.0
    %1180 = vmatprep.subr.mxu0 0.0
    %1181 = vmatpush1.msra.mxu0 0.0
    %1182 = vmatprep.subr.mxu0 0.0
    %1183 = vmatpush1.msra.mxu0 0.0
    %1184 = vmatprep.subr.mxu0 0.0
    %1185 = vmatpush1.msra.mxu0 0.0
    %1186 = vmatprep.subr.mxu0 0.0
    %1187 = vmatpush1.msra.mxu0 0.0
    %1188 = vmatprep.subr.mxu0 0.0
    %1189 = vmatpush1.msra.mxu0 0.0
    %1190 = vmatprep.subr.mxu0 0.0
    %1191 = vmatpush1.msra.mxu0 0.0
    %1192 = vmatprep.subr.mxu0 0.0
    %1193 = vmatpush1.msra.mxu0 0.0
    %1194 = vmatprep.subr.mxu0 0.0
    %1195 = vmatpush1.msra.mxu0 0.0
    %1196 = vmatprep.subr.mxu0 0.0
    %1197 = vmatpush1.msra.mxu0 0.0
    %1198 = vmatprep.subr.mxu0 0.0
    %1199 = vmatpush1.msra.mxu0 0.0
    %1200 = vmatprep.subr.mxu0 0.0
    %1201 = vmatpush1.msra.mxu0 0.0
    %1202 = vmatprep.subr.mxu0 0.0
    %1203 = vmatpush1.msra.mxu0 0.0
    %1204 = vmatprep.subr.mxu0 0.0
    %1205 = vmatpush1.msra.mxu0 0.0
    %1206 = vmatprep.subr.mxu0 0.0
    %1207 = vmatpush1.msra.mxu0 0.0
    %1208 = vmatprep.subr.mxu0 0.0
    %1209 = vmatpush1.msra.mxu0 0.0
    %1210 = vmatprep.subr.mxu0 0.0
    %1211 = vmatpush1.msra.mxu0 0.0
    %1212 = vmatprep.subr.mxu0 0.0
    %1213 = vmatpush1.msra.mxu0 0.0
    %1214 = vmatprep.mubr.f32.mxu0 0.0
    %1215 = vmatmul.mubr.f32.gmra.mrb[0].mxu0 %v1133
    %v1216 = vpop.f32.mrb[0].mxu0
    %v1217 = vadd.f32 0.0, %v1216
    %v1218 = vpop.f32.mrb[0].mxu0
    %v1219 = vadd.f32 0.0, %v1218
    %1220 = vmatprep.mubr.f32.mxu0 0.0
    %1221 = vmatmul.mubr.f32.gmra.mrb[0].mxu0 %v1136
    %v1222 = vpop.f32.mrb[0].mxu0
    %v1223 = vadd.f32 0.0, %v1222
    %v1224 = vpop.f32.mrb[0].mxu0
    %v1225 = vadd.f32 0.0, %v1224
    %1226 = vdwg.mxu0
    %1227 = vmatprep.subr.mxu0 %v1148
    %1228 = vmatpush1.msra.mxu0 %v1145
    %1229 = vmatprep.subr.mxu0 0.0
    %1230 = vmatpush1.msra.mxu0 0.0
    %1231 = vmatprep.subr.mxu0 0.0
    %1232 = vmatpush1.msra.mxu0 0.0
    %1233 = vmatprep.subr.mxu0 0.0
    %1234 = vmatpush1.msra.mxu0 0.0
    %1235 = vmatprep.subr.mxu0 0.0
    %1236 = vmatpush1.msra.mxu0 0.0
    %1237 = vmatprep.subr.mxu0 0.0
    %1238 = vmatpush1.msra.mxu0 0.0
    %1239 = vmatprep.subr.mxu0 0.0
    %1240 = vmatpush1.msra.mxu0 0.0
    %1241 = vmatprep.subr.mxu0 0.0
    %1242 = vmatpush1.msra.mxu0 0.0
    %1243 = vmatprep.subr.mxu0 0.0
    %1244 = vmatpush1.msra.mxu0 0.0
    %1245 = vmatprep.subr.mxu0 0.0
    %1246 = vmatpush1.msra.mxu0 0.0
    %1247 = vmatprep.subr.mxu0 0.0
    %1248 = vmatpush1.msra.mxu0 0.0
    %1249 = vmatprep.subr.mxu0 0.0
    %1250 = vmatpush1.msra.mxu0 0.0
    %1251 = vmatprep.subr.mxu0 0.0
    %1252 = vmatpush1.msra.mxu0 0.0
    %1253 = vmatprep.subr.mxu0 0.0
    %1254 = vmatpush1.msra.mxu0 0.0
    %1255 = vmatprep.subr.mxu0 0.0
    %1256 = vmatpush1.msra.mxu0 0.0
    %1257 = vmatprep.subr.mxu0 0.0
    %1258 = vmatpush1.msra.mxu0 0.0
    %1259 = vmatprep.subr.mxu0 0.0
    %1260 = vmatpush1.msra.mxu0 0.0
    %1261 = vmatprep.subr.mxu0 0.0
    %1262 = vmatpush1.msra.mxu0 0.0
    %1263 = vmatprep.subr.mxu0 0.0
    %1264 = vmatpush1.msra.mxu0 0.0
    %1265 = vmatprep.subr.mxu0 0.0
    %1266 = vmatpush1.msra.mxu0 0.0
    %1267 = vmatprep.subr.mxu0 0.0
    %1268 = vmatpush1.msra.mxu0 0.0
    %1269 = vmatprep.subr.mxu0 0.0
    %1270 = vmatpush1.msra.mxu0 0.0
    %1271 = vmatprep.subr.mxu0 0.0
    %1272 = vmatpush1.msra.mxu0 0.0
    %1273 = vmatprep.subr.mxu0 0.0
    %1274 = vmatpush1.msra.mxu0 0.0
    %1275 = vmatprep.subr.mxu0 0.0
    %1276 = vmatpush1.msra.mxu0 0.0
    %1277 = vmatprep.subr.mxu0 0.0
    %1278 = vmatpush1.msra.mxu0 0.0
    %1279 = vmatprep.subr.mxu0 0.0
    %1280 = vmatpush1.msra.mxu0 0.0
    %1281 = vmatprep.subr.mxu0 0.0
    %1282 = vmatpush1.msra.mxu0 0.0
    %1283 = vmatprep.subr.mxu0 0.0
    %1284 = vmatpush1.msra.mxu0 0.0
    %1285 = vmatprep.subr.mxu0 0.0
    %1286 = vmatpush1.msra.mxu0 0.0
    %1287 = vmatprep.subr.mxu0 0.0
    %1288 = vmatpush1.msra.mxu0 0.0
    %1289 = vmatprep.subr.mxu0 0.0
    %1290 = vmatpush1.msra.mxu0 0.0
    %1291 = vmatprep.mubr.f32.mxu0 0.0
    %1292 = vmatmul.mubr.f32.gmra.mrb[0].mxu0 %v1133
    %v1293 = vpop.f32.mrb[0].mxu0
    %v1294 = vadd.f32 0.0, %v1293
    %v1295 = vpop.f32.mrb[0].mxu0
    %v1296 = vadd.f32 0.0, %v1295
    %1297 = vmatprep.mubr.f32.mxu0 0.0
    %1298 = vmatmul.mubr.f32.gmra.mrb[0].mxu0 %v1136
    %v1299 = vpop.f32.mrb[0].mxu0
    %v1300 = vadd.f32 0.0, %v1299
    %v1301 = vpop.f32.mrb[0].mxu0
    %v1302 = vadd.f32 0.0, %v1301
    %1303 = vdwg.mxu0
    %v1304 = vadd.f32 %v1081, %v1217
    %v1305 = vadd.f32 %v1082, %v1219
    %v1306 = vadd.f32 %v1083, %v1294
    %v1307 = vadd.f32 %v1084, %v1296
    %v1308 = vadd.f32 %v1085, %v1223
    %v1309 = vadd.f32 %v1086, %v1225
    %v1310 = vadd.f32 %v1087, %v1300
    %v1311 = vadd.f32 %v1088, %v1302
    %1312 = vrot.lane.b32.xlu0 %v24, 113
    %v1313 = vpop.permute.xlu0 %1312
    %1314 = vrot.lane.b32.xlu0 %v28, 113
    %v1315 = vpop.permute.xlu0 %1314
    %1316 = vrot.lane.b32.xlu0 %v25, 113
    %v1317 = vpop.permute.xlu0 %1316
    %1318 = vrot.lane.b32.xlu0 %v29, 113
    %v1319 = vpop.permute.xlu0 %1318
    %vm1320 = vcmp.lt.s32.totalorder %v41, 113
    %v1321 = vsel %vm1320, %v1317, %v1319
    %v1322 = vsel %vm1320, %v1315, %v1317
    %v1323 = vsel %vm1320, %v1313, %v1315
    %v1324 = vsel %vm1320, %v1319, %v1313
    %s1325 = scalar_lea.vmem %s1, 6
    %v1326 = vld [vmem:[%s1325] ss:$8 sm:$0xf]
    %v1328 = vlaneseq
    %v1329 = vshrl.u32 %v1328, 7
    %v1330 = vsub.s32 0, %v1329
    %v1331 = vrot.slane %v1326, %v1330
    %v1332 = vlaneseq
    %v1333 = vshrl.u32 %v1332, 7
    %v1334 = vsub.s32 1, %v1333
    %v1335 = vrot.slane %v1326, %v1334
    %v1336 = vlaneseq
    %v1337 = vshrl.u32 %v1336, 7
    %v1338 = vsub.s32 2, %v1337
    %v1339 = vrot.slane %v1326, %v1338
    %v1340 = vlaneseq
    %v1341 = vshrl.u32 %v1340, 7
    %v1342 = vsub.s32 3, %v1341
    %v1343 = vrot.slane %v1326, %v1342
    %v1348 = vmul.f32 %v1323, %v1331
    %v1349 = vmul.f32 %v1322, %v1335
    %v1350 = vmul.f32 %v1321, %v1339
    %v1351 = vmul.f32 %v1324, %v1343
    %s1352 = scalar_lea.vmem %s2, 96
    %v1353 = vld [vmem:[%s1352] sm:$0xff]
    %v1354 = vld [vmem:[%s1352 + $0x8] sm:$0xff]
    %v1356 = vsel %vm118, %v1353, 0
    %v1359 = vsel %vm118, %v1354, 0
    %v1362 = vsel %vm125, %v1348, 0
    %v1365 = vsel %vm125, %v1349, 0
    %v1368 = vsel %vm125, %v1350, 0
    %v1371 = vsel %vm125, %v1351, 0
    %1373 = vmatprep.subr.mxu0 %v1365
    %1374 = vmatpush1.msra.mxu0 %v1362
    %1375 = vmatprep.subr.mxu0 0.0
    %1376 = vmatpush1.msra.mxu0 0.0
    %1377 = vmatprep.subr.mxu0 0.0
    %1378 = vmatpush1.msra.mxu0 0.0
    %1379 = vmatprep.subr.mxu0 0.0
    %1380 = vmatpush1.msra.mxu0 0.0
    %1381 = vmatprep.subr.mxu0 0.0
    %1382 = vmatpush1.msra.mxu0 0.0
    %1383 = vmatprep.subr.mxu0 0.0
    %1384 = vmatpush1.msra.mxu0 0.0
    %1385 = vmatprep.subr.mxu0 0.0
    %1386 = vmatpush1.msra.mxu0 0.0
    %1387 = vmatprep.subr.mxu0 0.0
    %1388 = vmatpush1.msra.mxu0 0.0
    %1389 = vmatprep.subr.mxu0 0.0
    %1390 = vmatpush1.msra.mxu0 0.0
    %1391 = vmatprep.subr.mxu0 0.0
    %1392 = vmatpush1.msra.mxu0 0.0
    %1393 = vmatprep.subr.mxu0 0.0
    %1394 = vmatpush1.msra.mxu0 0.0
    %1395 = vmatprep.subr.mxu0 0.0
    %1396 = vmatpush1.msra.mxu0 0.0
    %1397 = vmatprep.subr.mxu0 0.0
    %1398 = vmatpush1.msra.mxu0 0.0
    %1399 = vmatprep.subr.mxu0 0.0
    %1400 = vmatpush1.msra.mxu0 0.0
    %1401 = vmatprep.subr.mxu0 0.0
    %1402 = vmatpush1.msra.mxu0 0.0
    %1403 = vmatprep.subr.mxu0 0.0
    %1404 = vmatpush1.msra.mxu0 0.0
    %1405 = vmatprep.subr.mxu0 0.0
    %1406 = vmatpush1.msra.mxu0 0.0
    %1407 = vmatprep.subr.mxu0 0.0
    %1408 = vmatpush1.msra.mxu0 0.0
    %1409 = vmatprep.subr.mxu0 0.0
    %1410 = vmatpush1.msra.mxu0 0.0
    %1411 = vmatprep.subr.mxu0 0.0
    %1412 = vmatpush1.msra.mxu0 0.0
    %1413 = vmatprep.subr.mxu0 0.0
    %1414 = vmatpush1.msra.mxu0 0.0
    %1415 = vmatprep.subr.mxu0 0.0
    %1416 = vmatpush1.msra.mxu0 0.0
    %1417 = vmatprep.subr.mxu0 0.0
    %1418 = vmatpush1.msra.mxu0 0.0
    %1419 = vmatprep.subr.mxu0 0.0
    %1420 = vmatpush1.msra.mxu0 0.0
    %1421 = vmatprep.subr.mxu0 0.0
    %1422 = vmatpush1.msra.mxu0 0.0
    %1423 = vmatprep.subr.mxu0 0.0
    %1424 = vmatpush1.msra.mxu0 0.0
    %1425 = vmatprep.subr.mxu0 0.0
    %1426 = vmatpush1.msra.mxu0 0.0
    %1427 = vmatprep.subr.mxu0 0.0
    %1428 = vmatpush1.msra.mxu0 0.0
    %1429 = vmatprep.subr.mxu0 0.0
    %1430 = vmatpush1.msra.mxu0 0.0
    %1431 = vmatprep.subr.mxu0 0.0
    %1432 = vmatpush1.msra.mxu0 0.0
    %1433 = vmatprep.subr.mxu0 0.0
    %1434 = vmatpush1.msra.mxu0 0.0
    %1435 = vmatprep.subr.mxu0 0.0
    %1436 = vmatpush1.msra.mxu0 0.0
    %1437 = vmatprep.mubr.f32.mxu0 0.0
    %1438 = vmatmul.mubr.f32.gmra.mrb[0].mxu0 %v1356
    %v1439 = vpop.f32.mrb[0].mxu0
    %v1440 = vadd.f32 0.0, %v1439
    %v1441 = vpop.f32.mrb[0].mxu0
    %v1442 = vadd.f32 0.0, %v1441
    %1443 = vmatprep.mubr.f32.mxu0 0.0
    %1444 = vmatmul.mubr.f32.gmra.mrb[0].mxu0 %v1359
    %v1445 = vpop.f32.mrb[0].mxu0
    %v1446 = vadd.f32 0.0, %v1445
    %v1447 = vpop.f32.mrb[0].mxu0
    %v1448 = vadd.f32 0.0, %v1447
    %1449 = vdwg.mxu0
    %1450 = vmatprep.subr.mxu0 %v1371
    %1451 = vmatpush1.msra.mxu0 %v1368
    %1452 = vmatprep.subr.mxu0 0.0
    %1453 = vmatpush1.msra.mxu0 0.0
    %1454 = vmatprep.subr.mxu0 0.0
    %1455 = vmatpush1.msra.mxu0 0.0
    %1456 = vmatprep.subr.mxu0 0.0
    %1457 = vmatpush1.msra.mxu0 0.0
    %1458 = vmatprep.subr.mxu0 0.0
    %1459 = vmatpush1.msra.mxu0 0.0
    %1460 = vmatprep.subr.mxu0 0.0
    %1461 = vmatpush1.msra.mxu0 0.0
    %1462 = vmatprep.subr.mxu0 0.0
    %1463 = vmatpush1.msra.mxu0 0.0
    %1464 = vmatprep.subr.mxu0 0.0
    %1465 = vmatpush1.msra.mxu0 0.0
    %1466 = vmatprep.subr.mxu0 0.0
    %1467 = vmatpush1.msra.mxu0 0.0
    %1468 = vmatprep.subr.mxu0 0.0
    %1469 = vmatpush1.msra.mxu0 0.0
    %1470 = vmatprep.subr.mxu0 0.0
    %1471 = vmatpush1.msra.mxu0 0.0
    %1472 = vmatprep.subr.mxu0 0.0
    %1473 = vmatpush1.msra.mxu0 0.0
    %1474 = vmatprep.subr.mxu0 0.0
    %1475 = vmatpush1.msra.mxu0 0.0
    %1476 = vmatprep.subr.mxu0 0.0
    %1477 = vmatpush1.msra.mxu0 0.0
    %1478 = vmatprep.subr.mxu0 0.0
    %1479 = vmatpush1.msra.mxu0 0.0
    %1480 = vmatprep.subr.mxu0 0.0
    %1481 = vmatpush1.msra.mxu0 0.0
    %1482 = vmatprep.subr.mxu0 0.0
    %1483 = vmatpush1.msra.mxu0 0.0
    %1484 = vmatprep.subr.mxu0 0.0
    %1485 = vmatpush1.msra.mxu0 0.0
    %1486 = vmatprep.subr.mxu0 0.0
    %1487 = vmatpush1.msra.mxu0 0.0
    %1488 = vmatprep.subr.mxu0 0.0
    %1489 = vmatpush1.msra.mxu0 0.0
    %1490 = vmatprep.subr.mxu0 0.0
    %1491 = vmatpush1.msra.mxu0 0.0
    %1492 = vmatprep.subr.mxu0 0.0
    %1493 = vmatpush1.msra.mxu0 0.0
    %1494 = vmatprep.subr.mxu0 0.0
    %1495 = vmatpush1.msra.mxu0 0.0
    %1496 = vmatprep.subr.mxu0 0.0
    %1497 = vmatpush1.msra.mxu0 0.0
    %1498 = vmatprep.subr.mxu0 0.0
    %1499 = vmatpush1.msra.mxu0 0.0
    %1500 = vmatprep.subr.mxu0 0.0
    %1501 = vmatpush1.msra.mxu0 0.0
    %1502 = vmatprep.subr.mxu0 0.0
    %1503 = vmatpush1.msra.mxu0 0.0
    %1504 = vmatprep.subr.mxu0 0.0
    %1505 = vmatpush1.msra.mxu0 0.0
    %1506 = vmatprep.subr.mxu0 0.0
    %1507 = vmatpush1.msra.mxu0 0.0
    %1508 = vmatprep.subr.mxu0 0.0
    %1509 = vmatpush1.msra.mxu0 0.0
    %1510 = vmatprep.subr.mxu0 0.0
    %1511 = vmatpush1.msra.mxu0 0.0
    %1512 = vmatprep.subr.mxu0 0.0
    %1513 = vmatpush1.msra.mxu0 0.0
    %1514 = vmatprep.mubr.f32.mxu0 0.0
    %1515 = vmatmul.mubr.f32.gmra.mrb[0].mxu0 %v1356
    %v1516 = vpop.f32.mrb[0].mxu0
    %v1517 = vadd.f32 0.0, %v1516
    %v1518 = vpop.f32.mrb[0].mxu0
    %v1519 = vadd.f32 0.0, %v1518
    %1520 = vmatprep.mubr.f32.mxu0 0.0
    %1521 = vmatmul.mubr.f32.gmra.mrb[0].mxu0 %v1359
    %v1522 = vpop.f32.mrb[0].mxu0
    %v1523 = vadd.f32 0.0, %v1522
    %v1524 = vpop.f32.mrb[0].mxu0
    %v1525 = vadd.f32 0.0, %v1524
    %1526 = vdwg.mxu0
    %v1527 = vadd.f32 %v1304, %v1440
    %v1528 = vadd.f32 %v1305, %v1442
    %v1529 = vadd.f32 %v1306, %v1517
    %v1530 = vadd.f32 %v1307, %v1519
    %v1531 = vadd.f32 %v1308, %v1446
    %v1532 = vadd.f32 %v1309, %v1448
    %v1533 = vadd.f32 %v1310, %v1523
    %v1534 = vadd.f32 %v1311, %v1525
    %1535 = vrot.lane.b32.xlu0 %v24, 112
    %v1536 = vpop.permute.xlu0 %1535
    %1537 = vrot.lane.b32.xlu0 %v28, 112
    %v1538 = vpop.permute.xlu0 %1537
    %1539 = vrot.lane.b32.xlu0 %v25, 112
    %v1540 = vpop.permute.xlu0 %1539
    %1541 = vrot.lane.b32.xlu0 %v29, 112
    %v1542 = vpop.permute.xlu0 %1541
    %vm1543 = vcmp.lt.s32.totalorder %v41, 112
    %v1544 = vsel %vm1543, %v1540, %v1542
    %v1545 = vsel %vm1543, %v1538, %v1540
    %v1546 = vsel %vm1543, %v1536, %v1538
    %v1547 = vsel %vm1543, %v1542, %v1536
    %s1548 = scalar_lea.vmem %s1, 7
    %v1549 = vld [vmem:[%s1548] ss:$8 sm:$0xf]
    %v1551 = vlaneseq
    %v1552 = vshrl.u32 %v1551, 7
    %v1553 = vsub.s32 0, %v1552
    %v1554 = vrot.slane %v1549, %v1553
    %v1555 = vlaneseq
    %v1556 = vshrl.u32 %v1555, 7
    %v1557 = vsub.s32 1, %v1556
    %v1558 = vrot.slane %v1549, %v1557
    %v1559 = vlaneseq
    %v1560 = vshrl.u32 %v1559, 7
    %v1561 = vsub.s32 2, %v1560
    %v1562 = vrot.slane %v1549, %v1561
    %v1563 = vlaneseq
    %v1564 = vshrl.u32 %v1563, 7
    %v1565 = vsub.s32 3, %v1564
    %v1566 = vrot.slane %v1549, %v1565
    %v1571 = vmul.f32 %v1546, %v1554
    %v1572 = vmul.f32 %v1545, %v1558
    %v1573 = vmul.f32 %v1544, %v1562
    %v1574 = vmul.f32 %v1547, %v1566
    %s1575 = scalar_lea.vmem %s2, 112
    %v1576 = vld [vmem:[%s1575] sm:$0xff]
    %v1577 = vld [vmem:[%s1575 + $0x8] sm:$0xff]
    %v1579 = vsel %vm118, %v1576, 0
    %v1582 = vsel %vm118, %v1577, 0
    %v1585 = vsel %vm125, %v1571, 0
    %v1588 = vsel %vm125, %v1572, 0
    %v1591 = vsel %vm125, %v1573, 0
    %v1594 = vsel %vm125, %v1574, 0
    %1596 = vmatprep.subr.mxu0 %v1588
    %1597 = vmatpush1.msra.mxu0 %v1585
    %1598 = vmatprep.subr.mxu0 0.0
    %1599 = vmatpush1.msra.mxu0 0.0
    %1600 = vmatprep.subr.mxu0 0.0
    %1601 = vmatpush1.msra.mxu0 0.0
    %1602 = vmatprep.subr.mxu0 0.0
    %1603 = vmatpush1.msra.mxu0 0.0
    %1604 = vmatprep.subr.mxu0 0.0
    %1605 = vmatpush1.msra.mxu0 0.0
    %1606 = vmatprep.subr.mxu0 0.0
    %1607 = vmatpush1.msra.mxu0 0.0
    %1608 = vmatprep.subr.mxu0 0.0
    %1609 = vmatpush1.msra.mxu0 0.0
    %1610 = vmatprep.subr.mxu0 0.0
    %1611 = vmatpush1.msra.mxu0 0.0
    %1612 = vmatprep.subr.mxu0 0.0
    %1613 = vmatpush1.msra.mxu0 0.0
    %1614 = vmatprep.subr.mxu0 0.0
    %1615 = vmatpush1.msra.mxu0 0.0
    %1616 = vmatprep.subr.mxu0 0.0
    %1617 = vmatpush1.msra.mxu0 0.0
    %1618 = vmatprep.subr.mxu0 0.0
    %1619 = vmatpush1.msra.mxu0 0.0
    %1620 = vmatprep.subr.mxu0 0.0
    %1621 = vmatpush1.msra.mxu0 0.0
    %1622 = vmatprep.subr.mxu0 0.0
    %1623 = vmatpush1.msra.mxu0 0.0
    %1624 = vmatprep.subr.mxu0 0.0
    %1625 = vmatpush1.msra.mxu0 0.0
    %1626 = vmatprep.subr.mxu0 0.0
    %1627 = vmatpush1.msra.mxu0 0.0
    %1628 = vmatprep.subr.mxu0 0.0
    %1629 = vmatpush1.msra.mxu0 0.0
    %1630 = vmatprep.subr.mxu0 0.0
    %1631 = vmatpush1.msra.mxu0 0.0
    %1632 = vmatprep.subr.mxu0 0.0
    %1633 = vmatpush1.msra.mxu0 0.0
    %1634 = vmatprep.subr.mxu0 0.0
    %1635 = vmatpush1.msra.mxu0 0.0
    %1636 = vmatprep.subr.mxu0 0.0
    %1637 = vmatpush1.msra.mxu0 0.0
    %1638 = vmatprep.subr.mxu0 0.0
    %1639 = vmatpush1.msra.mxu0 0.0
    %1640 = vmatprep.subr.mxu0 0.0
    %1641 = vmatpush1.msra.mxu0 0.0
    %1642 = vmatprep.subr.mxu0 0.0
    %1643 = vmatpush1.msra.mxu0 0.0
    %1644 = vmatprep.subr.mxu0 0.0
    %1645 = vmatpush1.msra.mxu0 0.0
    %1646 = vmatprep.subr.mxu0 0.0
    %1647 = vmatpush1.msra.mxu0 0.0
    %1648 = vmatprep.subr.mxu0 0.0
    %1649 = vmatpush1.msra.mxu0 0.0
    %1650 = vmatprep.subr.mxu0 0.0
    %1651 = vmatpush1.msra.mxu0 0.0
    %1652 = vmatprep.subr.mxu0 0.0
    %1653 = vmatpush1.msra.mxu0 0.0
    %1654 = vmatprep.subr.mxu0 0.0
    %1655 = vmatpush1.msra.mxu0 0.0
    %1656 = vmatprep.subr.mxu0 0.0
    %1657 = vmatpush1.msra.mxu0 0.0
    %1658 = vmatprep.subr.mxu0 0.0
    %1659 = vmatpush1.msra.mxu0 0.0
    %1660 = vmatprep.mubr.f32.mxu0 0.0
    %1661 = vmatmul.mubr.f32.gmra.mrb[0].mxu0 %v1579
    %v1662 = vpop.f32.mrb[0].mxu0
    %v1663 = vadd.f32 0.0, %v1662
    %v1664 = vpop.f32.mrb[0].mxu0
    %v1665 = vadd.f32 0.0, %v1664
    %1666 = vmatprep.mubr.f32.mxu0 0.0
    %1667 = vmatmul.mubr.f32.gmra.mrb[0].mxu0 %v1582
    %v1668 = vpop.f32.mrb[0].mxu0
    %v1669 = vadd.f32 0.0, %v1668
    %v1670 = vpop.f32.mrb[0].mxu0
    %v1671 = vadd.f32 0.0, %v1670
    %1672 = vdwg.mxu0
    %1673 = vmatprep.subr.mxu0 %v1594
    %1674 = vmatpush1.msra.mxu0 %v1591
    %1675 = vmatprep.subr.mxu0 0.0
    %1676 = vmatpush1.msra.mxu0 0.0
    %1677 = vmatprep.subr.mxu0 0.0
    %1678 = vmatpush1.msra.mxu0 0.0
    %1679 = vmatprep.subr.mxu0 0.0
    %1680 = vmatpush1.msra.mxu0 0.0
    %1681 = vmatprep.subr.mxu0 0.0
    %1682 = vmatpush1.msra.mxu0 0.0
    %1683 = vmatprep.subr.mxu0 0.0
    %1684 = vmatpush1.msra.mxu0 0.0
    %1685 = vmatprep.subr.mxu0 0.0
    %1686 = vmatpush1.msra.mxu0 0.0
    %1687 = vmatprep.subr.mxu0 0.0
    %1688 = vmatpush1.msra.mxu0 0.0
    %1689 = vmatprep.subr.mxu0 0.0
    %1690 = vmatpush1.msra.mxu0 0.0
    %1691 = vmatprep.subr.mxu0 0.0
    %1692 = vmatpush1.msra.mxu0 0.0
    %1693 = vmatprep.subr.mxu0 0.0
    %1694 = vmatpush1.msra.mxu0 0.0
    %1695 = vmatprep.subr.mxu0 0.0
    %1696 = vmatpush1.msra.mxu0 0.0
    %1697 = vmatprep.subr.mxu0 0.0
    %1698 = vmatpush1.msra.mxu0 0.0
    %1699 = vmatprep.subr.mxu0 0.0
    %1700 = vmatpush1.msra.mxu0 0.0
    %1701 = vmatprep.subr.mxu0 0.0
    %1702 = vmatpush1.msra.mxu0 0.0
    %1703 = vmatprep.subr.mxu0 0.0
    %1704 = vmatpush1.msra.mxu0 0.0
    %1705 = vmatprep.subr.mxu0 0.0
    %1706 = vmatpush1.msra.mxu0 0.0
    %1707 = vmatprep.subr.mxu0 0.0
    %1708 = vmatpush1.msra.mxu0 0.0
    %1709 = vmatprep.subr.mxu0 0.0
    %1710 = vmatpush1.msra.mxu0 0.0
    %1711 = vmatprep.subr.mxu0 0.0
    %1712 = vmatpush1.msra.mxu0 0.0
    %1713 = vmatprep.subr.mxu0 0.0
    %1714 = vmatpush1.msra.mxu0 0.0
    %1715 = vmatprep.subr.mxu0 0.0
    %1716 = vmatpush1.msra.mxu0 0.0
    %1717 = vmatprep.subr.mxu0 0.0
    %1718 = vmatpush1.msra.mxu0 0.0
    %1719 = vmatprep.subr.mxu0 0.0
    %1720 = vmatpush1.msra.mxu0 0.0
    %1721 = vmatprep.subr.mxu0 0.0
    %1722 = vmatpush1.msra.mxu0 0.0
    %1723 = vmatprep.subr.mxu0 0.0
    %1724 = vmatpush1.msra.mxu0 0.0
    %1725 = vmatprep.subr.mxu0 0.0
    %1726 = vmatpush1.msra.mxu0 0.0
    %1727 = vmatprep.subr.mxu0 0.0
    %1728 = vmatpush1.msra.mxu0 0.0
    %1729 = vmatprep.subr.mxu0 0.0
    %1730 = vmatpush1.msra.mxu0 0.0
    %1731 = vmatprep.subr.mxu0 0.0
    %1732 = vmatpush1.msra.mxu0 0.0
    %1733 = vmatprep.subr.mxu0 0.0
    %1734 = vmatpush1.msra.mxu0 0.0
    %1735 = vmatprep.subr.mxu0 0.0
    %1736 = vmatpush1.msra.mxu0 0.0
    %1737 = vmatprep.mubr.f32.mxu0 0.0
    %1738 = vmatmul.mubr.f32.gmra.mrb[0].mxu0 %v1579
    %v1739 = vpop.f32.mrb[0].mxu0
    %v1740 = vadd.f32 0.0, %v1739
    %v1741 = vpop.f32.mrb[0].mxu0
    %v1742 = vadd.f32 0.0, %v1741
    %1743 = vmatprep.mubr.f32.mxu0 0.0
    %1744 = vmatmul.mubr.f32.gmra.mrb[0].mxu0 %v1582
    %v1745 = vpop.f32.mrb[0].mxu0
    %v1746 = vadd.f32 0.0, %v1745
    %v1747 = vpop.f32.mrb[0].mxu0
    %v1748 = vadd.f32 0.0, %v1747
    %1749 = vdwg.mxu0
    %v1750 = vadd.f32 %v1527, %v1663
    %v1751 = vadd.f32 %v1528, %v1665
    %v1752 = vadd.f32 %v1529, %v1740
    %v1753 = vadd.f32 %v1530, %v1742
    %v1754 = vadd.f32 %v1531, %v1669
    %v1755 = vadd.f32 %v1532, %v1671
    %v1756 = vadd.f32 %v1533, %v1746
    %v1757 = vadd.f32 %v1534, %v1748
    %1758 = vrot.lane.b32.xlu0 %v24, 111
    %v1759 = vpop.permute.xlu0 %1758
    %1760 = vrot.lane.b32.xlu0 %v28, 111
    %v1761 = vpop.permute.xlu0 %1760
    %1762 = vrot.lane.b32.xlu0 %v25, 111
    %v1763 = vpop.permute.xlu0 %1762
    %1764 = vrot.lane.b32.xlu0 %v29, 111
    %v1765 = vpop.permute.xlu0 %1764
    %vm1766 = vcmp.lt.s32.totalorder %v41, 111
    %v1767 = vsel %vm1766, %v1763, %v1765
    %v1768 = vsel %vm1766, %v1761, %v1763
    %v1769 = vsel %vm1766, %v1759, %v1761
    %v1770 = vsel %vm1766, %v1765, %v1759
    %s1771 = scalar_lea.vmem %s1, 32
    %v1772 = vld [vmem:[%s1771] ss:$8 sm:$0xf]
    %v1774 = vlaneseq
    %v1775 = vshrl.u32 %v1774, 7
    %v1776 = vsub.s32 0, %v1775
    %v1777 = vrot.slane %v1772, %v1776
    %v1778 = vlaneseq
    %v1779 = vshrl.u32 %v1778, 7
    %v1780 = vsub.s32 1, %v1779
    %v1781 = vrot.slane %v1772, %v1780
    %v1782 = vlaneseq
    %v1783 = vshrl.u32 %v1782, 7
    %v1784 = vsub.s32 2, %v1783
    %v1785 = vrot.slane %v1772, %v1784
    %v1786 = vlaneseq
    %v1787 = vshrl.u32 %v1786, 7
    %v1788 = vsub.s32 3, %v1787
    %v1789 = vrot.slane %v1772, %v1788
    %v1794 = vmul.f32 %v1769, %v1777
    %v1795 = vmul.f32 %v1768, %v1781
    %v1796 = vmul.f32 %v1767, %v1785
    %v1797 = vmul.f32 %v1770, %v1789
    %s1798 = scalar_lea.vmem %s2, 128
    %v1799 = vld [vmem:[%s1798] sm:$0xff]
    %v1800 = vld [vmem:[%s1798 + $0x8] sm:$0xff]
    %v1802 = vsel %vm118, %v1799, 0
    %v1805 = vsel %vm118, %v1800, 0
    %v1808 = vsel %vm125, %v1794, 0
    %v1811 = vsel %vm125, %v1795, 0
    %v1814 = vsel %vm125, %v1796, 0
    %v1817 = vsel %vm125, %v1797, 0
    %1819 = vmatprep.subr.mxu0 %v1811
    %1820 = vmatpush1.msra.mxu0 %v1808
    %1821 = vmatprep.subr.mxu0 0.0
    %1822 = vmatpush1.msra.mxu0 0.0
    %1823 = vmatprep.subr.mxu0 0.0
    %1824 = vmatpush1.msra.mxu0 0.0
    %1825 = vmatprep.subr.mxu0 0.0
    %1826 = vmatpush1.msra.mxu0 0.0
    %1827 = vmatprep.subr.mxu0 0.0
    %1828 = vmatpush1.msra.mxu0 0.0
    %1829 = vmatprep.subr.mxu0 0.0
    %1830 = vmatpush1.msra.mxu0 0.0
    %1831 = vmatprep.subr.mxu0 0.0
    %1832 = vmatpush1.msra.mxu0 0.0
    %1833 = vmatprep.subr.mxu0 0.0
    %1834 = vmatpush1.msra.mxu0 0.0
    %1835 = vmatprep.subr.mxu0 0.0
    %1836 = vmatpush1.msra.mxu0 0.0
    %1837 = vmatprep.subr.mxu0 0.0
    %1838 = vmatpush1.msra.mxu0 0.0
    %1839 = vmatprep.subr.mxu0 0.0
    %1840 = vmatpush1.msra.mxu0 0.0
    %1841 = vmatprep.subr.mxu0 0.0
    %1842 = vmatpush1.msra.mxu0 0.0
    %1843 = vmatprep.subr.mxu0 0.0
    %1844 = vmatpush1.msra.mxu0 0.0
    %1845 = vmatprep.subr.mxu0 0.0
    %1846 = vmatpush1.msra.mxu0 0.0
    %1847 = vmatprep.subr.mxu0 0.0
    %1848 = vmatpush1.msra.mxu0 0.0
    %1849 = vmatprep.subr.mxu0 0.0
    %1850 = vmatpush1.msra.mxu0 0.0
    %1851 = vmatprep.subr.mxu0 0.0
    %1852 = vmatpush1.msra.mxu0 0.0
    %1853 = vmatprep.subr.mxu0 0.0
    %1854 = vmatpush1.msra.mxu0 0.0
    %1855 = vmatprep.subr.mxu0 0.0
    %1856 = vmatpush1.msra.mxu0 0.0
    %1857 = vmatprep.subr.mxu0 0.0
    %1858 = vmatpush1.msra.mxu0 0.0
    %1859 = vmatprep.subr.mxu0 0.0
    %1860 = vmatpush1.msra.mxu0 0.0
    %1861 = vmatprep.subr.mxu0 0.0
    %1862 = vmatpush1.msra.mxu0 0.0
    %1863 = vmatprep.subr.mxu0 0.0
    %1864 = vmatpush1.msra.mxu0 0.0
    %1865 = vmatprep.subr.mxu0 0.0
    %1866 = vmatpush1.msra.mxu0 0.0
    %1867 = vmatprep.subr.mxu0 0.0
    %1868 = vmatpush1.msra.mxu0 0.0
    %1869 = vmatprep.subr.mxu0 0.0
    %1870 = vmatpush1.msra.mxu0 0.0
    %1871 = vmatprep.subr.mxu0 0.0
    %1872 = vmatpush1.msra.mxu0 0.0
    %1873 = vmatprep.subr.mxu0 0.0
    %1874 = vmatpush1.msra.mxu0 0.0
    %1875 = vmatprep.subr.mxu0 0.0
    %1876 = vmatpush1.msra.mxu0 0.0
    %1877 = vmatprep.subr.mxu0 0.0
    %1878 = vmatpush1.msra.mxu0 0.0
    %1879 = vmatprep.subr.mxu0 0.0
    %1880 = vmatpush1.msra.mxu0 0.0
    %1881 = vmatprep.subr.mxu0 0.0
    %1882 = vmatpush1.msra.mxu0 0.0
    %1883 = vmatprep.mubr.f32.mxu0 0.0
    %1884 = vmatmul.mubr.f32.gmra.mrb[0].mxu0 %v1802
    %v1885 = vpop.f32.mrb[0].mxu0
    %v1886 = vadd.f32 0.0, %v1885
    %v1887 = vpop.f32.mrb[0].mxu0
    %v1888 = vadd.f32 0.0, %v1887
    %1889 = vmatprep.mubr.f32.mxu0 0.0
    %1890 = vmatmul.mubr.f32.gmra.mrb[0].mxu0 %v1805
    %v1891 = vpop.f32.mrb[0].mxu0
    %v1892 = vadd.f32 0.0, %v1891
    %v1893 = vpop.f32.mrb[0].mxu0
    %v1894 = vadd.f32 0.0, %v1893
    %1895 = vdwg.mxu0
    %1896 = vmatprep.subr.mxu0 %v1817
    %1897 = vmatpush1.msra.mxu0 %v1814
    %1898 = vmatprep.subr.mxu0 0.0
    %1899 = vmatpush1.msra.mxu0 0.0
    %1900 = vmatprep.subr.mxu0 0.0
    %1901 = vmatpush1.msra.mxu0 0.0
    %1902 = vmatprep.subr.mxu0 0.0
    %1903 = vmatpush1.msra.mxu0 0.0
    %1904 = vmatprep.subr.mxu0 0.0
    %1905 = vmatpush1.msra.mxu0 0.0
    %1906 = vmatprep.subr.mxu0 0.0
    %1907 = vmatpush1.msra.mxu0 0.0
    %1908 = vmatprep.subr.mxu0 0.0
    %1909 = vmatpush1.msra.mxu0 0.0
    %1910 = vmatprep.subr.mxu0 0.0
    %1911 = vmatpush1.msra.mxu0 0.0
    %1912 = vmatprep.subr.mxu0 0.0
    %1913 = vmatpush1.msra.mxu0 0.0
    %1914 = vmatprep.subr.mxu0 0.0
    %1915 = vmatpush1.msra.mxu0 0.0
    %1916 = vmatprep.subr.mxu0 0.0
    %1917 = vmatpush1.msra.mxu0 0.0
    %1918 = vmatprep.subr.mxu0 0.0
    %1919 = vmatpush1.msra.mxu0 0.0
    %1920 = vmatprep.subr.mxu0 0.0
    %1921 = vmatpush1.msra.mxu0 0.0
    %1922 = vmatprep.subr.mxu0 0.0
    %1923 = vmatpush1.msra.mxu0 0.0
    %1924 = vmatprep.subr.mxu0 0.0
    %1925 = vmatpush1.msra.mxu0 0.0
    %1926 = vmatprep.subr.mxu0 0.0
    %1927 = vmatpush1.msra.mxu0 0.0
    %1928 = vmatprep.subr.mxu0 0.0
    %1929 = vmatpush1.msra.mxu0 0.0
    %1930 = vmatprep.subr.mxu0 0.0
    %1931 = vmatpush1.msra.mxu0 0.0
    %1932 = vmatprep.subr.mxu0 0.0
    %1933 = vmatpush1.msra.mxu0 0.0
    %1934 = vmatprep.subr.mxu0 0.0
    %1935 = vmatpush1.msra.mxu0 0.0
    %1936 = vmatprep.subr.mxu0 0.0
    %1937 = vmatpush1.msra.mxu0 0.0
    %1938 = vmatprep.subr.mxu0 0.0
    %1939 = vmatpush1.msra.mxu0 0.0
    %1940 = vmatprep.subr.mxu0 0.0
    %1941 = vmatpush1.msra.mxu0 0.0
    %1942 = vmatprep.subr.mxu0 0.0
    %1943 = vmatpush1.msra.mxu0 0.0
    %1944 = vmatprep.subr.mxu0 0.0
    %1945 = vmatpush1.msra.mxu0 0.0
    %1946 = vmatprep.subr.mxu0 0.0
    %1947 = vmatpush1.msra.mxu0 0.0
    %1948 = vmatprep.subr.mxu0 0.0
    %1949 = vmatpush1.msra.mxu0 0.0
    %1950 = vmatprep.subr.mxu0 0.0
    %1951 = vmatpush1.msra.mxu0 0.0
    %1952 = vmatprep.subr.mxu0 0.0
    %1953 = vmatpush1.msra.mxu0 0.0
    %1954 = vmatprep.subr.mxu0 0.0
    %1955 = vmatpush1.msra.mxu0 0.0
    %1956 = vmatprep.subr.mxu0 0.0
    %1957 = vmatpush1.msra.mxu0 0.0
    %1958 = vmatprep.subr.mxu0 0.0
    %1959 = vmatpush1.msra.mxu0 0.0
    %1960 = vmatprep.mubr.f32.mxu0 0.0
    %1961 = vmatmul.mubr.f32.gmra.mrb[0].mxu0 %v1802
    %v1962 = vpop.f32.mrb[0].mxu0
    %v1963 = vadd.f32 0.0, %v1962
    %v1964 = vpop.f32.mrb[0].mxu0
    %v1965 = vadd.f32 0.0, %v1964
    %1966 = vmatprep.mubr.f32.mxu0 0.0
    %1967 = vmatmul.mubr.f32.gmra.mrb[0].mxu0 %v1805
    %v1968 = vpop.f32.mrb[0].mxu0
    %v1969 = vadd.f32 0.0, %v1968
    %v1970 = vpop.f32.mrb[0].mxu0
    %v1971 = vadd.f32 0.0, %v1970
    %1972 = vdwg.mxu0
    %v1973 = vadd.f32 %v1750, %v1886
    %v1974 = vadd.f32 %v1751, %v1888
    %v1975 = vadd.f32 %v1752, %v1963
    %v1976 = vadd.f32 %v1753, %v1965
    %v1977 = vadd.f32 %v1754, %v1892
    %v1978 = vadd.f32 %v1755, %v1894
    %v1979 = vadd.f32 %v1756, %v1969
    %v1980 = vadd.f32 %v1757, %v1971
    %v1981 = vld [vmem:[%s3] sm:$0xff]
    %v1982 = vld [vmem:[%s3 + $0x8] sm:$0xff]
    %1984 = vset.pattern.permute.xlu0 0
    %1985 = vperm.xlu0 %1984, %v1981
    %v1986 = vpop.permute.xlu0 %1985
    %1989 = vset.pattern.permute.xlu0 0
    %1990 = vperm.xlu0 %1989, %v1982
    %v1991 = vpop.permute.xlu0 %1990
    %v1993 = vadd.f32 %v1973, %v1986
    %v1994 = vadd.f32 %v1974, %v1986
    %v1995 = vadd.f32 %v1975, %v1986
    %v1996 = vadd.f32 %v1976, %v1986
    %v1997 = vadd.f32 %v1977, %v1991
    %v1998 = vadd.f32 %v1978, %v1991
    %v1999 = vadd.f32 %v1979, %v1991
    %v2000 = vadd.f32 %v1980, %v1991
    %v2001 = vmax.f32 %v1993, 0.0
    %v2002 = vmax.f32 %v1994, 0.0
    %v2003 = vmax.f32 %v1995, 0.0
    %v2004 = vmax.f32 %v1996, 0.0
    %v2005 = vmax.f32 %v1997, 0.0
    %v2006 = vmax.f32 %v1998, 0.0
    %v2007 = vmax.f32 %v1999, 0.0
    %v2008 = vmax.f32 %v2000, 0.0
    %2009 = vrot.lane.b32.xlu0 %v2001, 17
    %v2010 = vpop.permute.xlu0 %2009
    %2011 = vrot.lane.b32.xlu0 %v2005, 17
    %v2012 = vpop.permute.xlu0 %2011
    %2013 = vrot.lane.b32.xlu0 %v2002, 17
    %v2014 = vpop.permute.xlu0 %2013
    %2015 = vrot.lane.b32.xlu0 %v2006, 17
    %v2016 = vpop.permute.xlu0 %2015
    %2017 = vrot.lane.b32.xlu0 %v2003, 17
    %v2018 = vpop.permute.xlu0 %2017
    %2019 = vrot.lane.b32.xlu0 %v2007, 17
    %v2020 = vpop.permute.xlu0 %2019
    %2021 = vrot.lane.b32.xlu0 %v2004, 17
    %v2022 = vpop.permute.xlu0 %2021
    %2023 = vrot.lane.b32.xlu0 %v2008, 17
    %v2024 = vpop.permute.xlu0 %2023
    %v2025 = vsel %vm42, %v2018, %v2022
    %v2026 = vsel %vm42, %v2020, %v2024
    %v2027 = vsel %vm42, %v2014, %v2018
    %v2028 = vsel %vm42, %v2016, %v2020
    %v2029 = vsel %vm42, %v2010, %v2014
    %v2030 = vsel %vm42, %v2012, %v2016
    %v2031 = vsel %vm42, %v2022, %v2010
    %v2032 = vsel %vm42, %v2024, %v2012
    %v2033 = vmul.f32 %v2031, %v52
    %v2034 = vmul.f32 %v2029, %v56
    %v2035 = vmul.f32 %v2027, %v60
    %v2036 = vmul.f32 %v2025, %v64
    %v2037 = vmul.f32 %v2032, %v52
    %v2038 = vmul.f32 %v2030, %v56
    %v2039 = vmul.f32 %v2028, %v60
    %v2040 = vmul.f32 %v2026, %v64
    %v2041 = vld [vmem:[%s4] sm:$0xf]
    %2042 = vrot.lane.b32.xlu0 %v2001, 16
    %v2043 = vpop.permute.xlu0 %2042
    %2044 = vrot.lane.b32.xlu0 %v2005, 16
    %v2045 = vpop.permute.xlu0 %2044
    %2046 = vrot.lane.b32.xlu0 %v2002, 16
    %v2047 = vpop.permute.xlu0 %2046
    %2048 = vrot.lane.b32.xlu0 %v2006, 16
    %v2049 = vpop.permute.xlu0 %2048
    %2050 = vrot.lane.b32.xlu0 %v2003, 16
    %v2051 = vpop.permute.xlu0 %2050
    %2052 = vrot.lane.b32.xlu0 %v2007, 16
    %v2053 = vpop.permute.xlu0 %2052
    %2054 = vrot.lane.b32.xlu0 %v2004, 16
    %v2055 = vpop.permute.xlu0 %2054
    %2056 = vrot.lane.b32.xlu0 %v2008, 16
    %v2057 = vpop.permute.xlu0 %2056
    %v2058 = vsel %vm83, %v2051, %v2055
    %v2059 = vsel %vm83, %v2053, %v2057
    %v2060 = vsel %vm83, %v2047, %v2051
    %v2061 = vsel %vm83, %v2049, %v2053
    %v2062 = vsel %vm83, %v2043, %v2047
    %v2063 = vsel %vm83, %v2045, %v2049
    %v2064 = vsel %vm83, %v2055, %v2043
    %v2065 = vsel %vm83, %v2057, %v2045
    %v2066 = vmul.f32 %v2064, %v94
    %v2067 = vmul.f32 %v2062, %v98
    %v2068 = vmul.f32 %v2060, %v102
    %v2069 = vmul.f32 %v2058, %v106
    %v2070 = vmul.f32 %v2065, %v94
    %v2071 = vmul.f32 %v2063, %v98
    %v2072 = vmul.f32 %v2061, %v102
    %v2073 = vmul.f32 %v2059, %v106
    %s2074 = scalar_lea.vmem %s4, 4
    %v2075 = vld [vmem:[%s2074] sm:$0xf]
    %vm2076 = vcmask 130048
    %v2078 = vsel %vm2076, %v2075, 0
    %2080 = vmatprep.subr.mxu0 %v2067
    %2081 = vmatpush1.msra.mxu0 %v2066
    %2082 = vmatprep.subr.mxu0 %v2071
    %2083 = vmatpush1.msra.mxu0 %v2070
    %2084 = vmatprep.subr.mxu0 0.0
    %2085 = vmatpush1.msra.mxu0 0.0
    %2086 = vmatprep.subr.mxu0 0.0
    %2087 = vmatpush1.msra.mxu0 0.0
    %2088 = vmatprep.subr.mxu0 0.0
    %2089 = vmatpush1.msra.mxu0 0.0
    %2090 = vmatprep.subr.mxu0 0.0
    %2091 = vmatpush1.msra.mxu0 0.0
    %2092 = vmatprep.subr.mxu0 0.0
    %2093 = vmatpush1.msra.mxu0 0.0
    %2094 = vmatprep.subr.mxu0 0.0
    %2095 = vmatpush1.msra.mxu0 0.0
    %2096 = vmatprep.subr.mxu0 0.0
    %2097 = vmatpush1.msra.mxu0 0.0
    %2098 = vmatprep.subr.mxu0 0.0
    %2099 = vmatpush1.msra.mxu0 0.0
    %2100 = vmatprep.subr.mxu0 0.0
    %2101 = vmatpush1.msra.mxu0 0.0
    %2102 = vmatprep.subr.mxu0 0.0
    %2103 = vmatpush1.msra.mxu0 0.0
    %2104 = vmatprep.subr.mxu0 0.0
    %2105 = vmatpush1.msra.mxu0 0.0
    %2106 = vmatprep.subr.mxu0 0.0
    %2107 = vmatpush1.msra.mxu0 0.0
    %2108 = vmatprep.subr.mxu0 0.0
    %2109 = vmatpush1.msra.mxu0 0.0
    %2110 = vmatprep.subr.mxu0 0.0
    %2111 = vmatpush1.msra.mxu0 0.0
    %2112 = vmatprep.subr.mxu0 0.0
    %2113 = vmatpush1.msra.mxu0 0.0
    %2114 = vmatprep.subr.mxu0 0.0
    %2115 = vmatpush1.msra.mxu0 0.0
    %2116 = vmatprep.subr.mxu0 0.0
    %2117 = vmatpush1.msra.mxu0 0.0
    %2118 = vmatprep.subr.mxu0 0.0
    %2119 = vmatpush1.msra.mxu0 0.0
    %2120 = vmatprep.subr.mxu0 0.0
    %2121 = vmatpush1.msra.mxu0 0.0
    %2122 = vmatprep.subr.mxu0 0.0
    %2123 = vmatpush1.msra.mxu0 0.0
    %2124 = vmatprep.subr.mxu0 0.0
    %2125 = vmatpush1.msra.mxu0 0.0
    %2126 = vmatprep.subr.mxu0 0.0
    %2127 = vmatpush1.msra.mxu0 0.0
    %2128 = vmatprep.subr.mxu0 0.0
    %2129 = vmatpush1.msra.mxu0 0.0
    %2130 = vmatprep.subr.mxu0 0.0
    %2131 = vmatpush1.msra.mxu0 0.0
    %2132 = vmatprep.subr.mxu0 0.0
    %2133 = vmatpush1.msra.mxu0 0.0
    %2134 = vmatprep.subr.mxu0 0.0
    %2135 = vmatpush1.msra.mxu0 0.0
    %2136 = vmatprep.subr.mxu0 0.0
    %2137 = vmatpush1.msra.mxu0 0.0
    %2138 = vmatprep.subr.mxu0 0.0
    %2139 = vmatpush1.msra.mxu0 0.0
    %2140 = vmatprep.subr.mxu0 0.0
    %2141 = vmatpush1.msra.mxu0 0.0
    %2142 = vmatprep.subr.mxu0 0.0
    %2143 = vmatpush1.msra.mxu0 0.0
    %2144 = vmatprep.mubr.f32.mxu0 0.0
    %2145 = vmatmul.mubr.f32.gmra.mrb[0].mxu0 %v2078
    %v2146 = vpop.f32.mrb[0].mxu0
    %v2147 = vadd.f32 0.0, %v2146
    %v2148 = vpop.f32.mrb[0].mxu0
    %v2149 = vadd.f32 0.0, %v2148
    %2150 = vdwg.mxu0
    %2151 = vmatprep.subr.mxu0 %v2069
    %2152 = vmatpush1.msra.mxu0 %v2068
    %2153 = vmatprep.subr.mxu0 %v2073
    %2154 = vmatpush1.msra.mxu0 %v2072
    %2155 = vmatprep.subr.mxu0 0.0
    %2156 = vmatpush1.msra.mxu0 0.0
    %2157 = vmatprep.subr.mxu0 0.0
    %2158 = vmatpush1.msra.mxu0 0.0
    %2159 = vmatprep.subr.mxu0 0.0
    %2160 = vmatpush1.msra.mxu0 0.0
    %2161 = vmatprep.subr.mxu0 0.0
    %2162 = vmatpush1.msra.mxu0 0.0
    %2163 = vmatprep.subr.mxu0 0.0
    %2164 = vmatpush1.msra.mxu0 0.0
    %2165 = vmatprep.subr.mxu0 0.0
    %2166 = vmatpush1.msra.mxu0 0.0
    %2167 = vmatprep.subr.mxu0 0.0
    %2168 = vmatpush1.msra.mxu0 0.0
    %2169 = vmatprep.subr.mxu0 0.0
    %2170 = vmatpush1.msra.mxu0 0.0
    %2171 = vmatprep.subr.mxu0 0.0
    %2172 = vmatpush1.msra.mxu0 0.0
    %2173 = vmatprep.subr.mxu0 0.0
    %2174 = vmatpush1.msra.mxu0 0.0
    %2175 = vmatprep.subr.mxu0 0.0
    %2176 = vmatpush1.msra.mxu0 0.0
    %2177 = vmatprep.subr.mxu0 0.0
    %2178 = vmatpush1.msra.mxu0 0.0
    %2179 = vmatprep.subr.mxu0 0.0
    %2180 = vmatpush1.msra.mxu0 0.0
    %2181 = vmatprep.subr.mxu0 0.0
    %2182 = vmatpush1.msra.mxu0 0.0
    %2183 = vmatprep.subr.mxu0 0.0
    %2184 = vmatpush1.msra.mxu0 0.0
    %2185 = vmatprep.subr.mxu0 0.0
    %2186 = vmatpush1.msra.mxu0 0.0
    %2187 = vmatprep.subr.mxu0 0.0
    %2188 = vmatpush1.msra.mxu0 0.0
    %2189 = vmatprep.subr.mxu0 0.0
    %2190 = vmatpush1.msra.mxu0 0.0
    %2191 = vmatprep.subr.mxu0 0.0
    %2192 = vmatpush1.msra.mxu0 0.0
    %2193 = vmatprep.subr.mxu0 0.0
    %2194 = vmatpush1.msra.mxu0 0.0
    %2195 = vmatprep.subr.mxu0 0.0
    %2196 = vmatpush1.msra.mxu0 0.0
    %2197 = vmatprep.subr.mxu0 0.0
    %2198 = vmatpush1.msra.mxu0 0.0
    %2199 = vmatprep.subr.mxu0 0.0
    %2200 = vmatpush1.msra.mxu0 0.0
    %2201 = vmatprep.subr.mxu0 0.0
    %2202 = vmatpush1.msra.mxu0 0.0
    %2203 = vmatprep.subr.mxu0 0.0
    %2204 = vmatpush1.msra.mxu0 0.0
    %2205 = vmatprep.subr.mxu0 0.0
    %2206 = vmatpush1.msra.mxu0 0.0
    %2207 = vmatprep.subr.mxu0 0.0
    %2208 = vmatpush1.msra.mxu0 0.0
    %2209 = vmatprep.subr.mxu0 0.0
    %2210 = vmatpush1.msra.mxu0 0.0
    %2211 = vmatprep.subr.mxu0 0.0
    %2212 = vmatpush1.msra.mxu0 0.0
    %2213 = vmatprep.subr.mxu0 0.0
    %2214 = vmatpush1.msra.mxu0 0.0
    %2215 = vmatprep.mubr.f32.mxu0 0.0
    %2216 = vmatmul.mubr.f32.gmra.mrb[0].mxu0 %v2078
    %v2217 = vpop.f32.mrb[0].mxu0
    %v2218 = vadd.f32 0.0, %v2217
    %v2219 = vpop.f32.mrb[0].mxu0
    %v2220 = vadd.f32 0.0, %v2219
    %2221 = vdwg.mxu0
    %v2223 = vsel %vm2076, %v2041, 0
    %2225 = vmatprep.subr.mxu0 %v2034
    %2226 = vmatpush1.msra.mxu0 %v2033
    %2227 = vmatprep.subr.mxu0 %v2038
    %2228 = vmatpush1.msra.mxu0 %v2037
    %2229 = vmatprep.subr.mxu0 0.0
    %2230 = vmatpush1.msra.mxu0 0.0
    %2231 = vmatprep.subr.mxu0 0.0
    %2232 = vmatpush1.msra.mxu0 0.0
    %2233 = vmatprep.subr.mxu0 0.0
    %2234 = vmatpush1.msra.mxu0 0.0
    %2235 = vmatprep.subr.mxu0 0.0
    %2236 = vmatpush1.msra.mxu0 0.0
    %2237 = vmatprep.subr.mxu0 0.0
    %2238 = vmatpush1.msra.mxu0 0.0
    %2239 = vmatprep.subr.mxu0 0.0
    %2240 = vmatpush1.msra.mxu0 0.0
    %2241 = vmatprep.subr.mxu0 0.0
    %2242 = vmatpush1.msra.mxu0 0.0
    %2243 = vmatprep.subr.mxu0 0.0
    %2244 = vmatpush1.msra.mxu0 0.0
    %2245 = vmatprep.subr.mxu0 0.0
    %2246 = vmatpush1.msra.mxu0 0.0
    %2247 = vmatprep.subr.mxu0 0.0
    %2248 = vmatpush1.msra.mxu0 0.0
    %2249 = vmatprep.subr.mxu0 0.0
    %2250 = vmatpush1.msra.mxu0 0.0
    %2251 = vmatprep.subr.mxu0 0.0
    %2252 = vmatpush1.msra.mxu0 0.0
    %2253 = vmatprep.subr.mxu0 0.0
    %2254 = vmatpush1.msra.mxu0 0.0
    %2255 = vmatprep.subr.mxu0 0.0
    %2256 = vmatpush1.msra.mxu0 0.0
    %2257 = vmatprep.subr.mxu0 0.0
    %2258 = vmatpush1.msra.mxu0 0.0
    %2259 = vmatprep.subr.mxu0 0.0
    %2260 = vmatpush1.msra.mxu0 0.0
    %2261 = vmatprep.subr.mxu0 0.0
    %2262 = vmatpush1.msra.mxu0 0.0
    %2263 = vmatprep.subr.mxu0 0.0
    %2264 = vmatpush1.msra.mxu0 0.0
    %2265 = vmatprep.subr.mxu0 0.0
    %2266 = vmatpush1.msra.mxu0 0.0
    %2267 = vmatprep.subr.mxu0 0.0
    %2268 = vmatpush1.msra.mxu0 0.0
    %2269 = vmatprep.subr.mxu0 0.0
    %2270 = vmatpush1.msra.mxu0 0.0
    %2271 = vmatprep.subr.mxu0 0.0
    %2272 = vmatpush1.msra.mxu0 0.0
    %2273 = vmatprep.subr.mxu0 0.0
    %2274 = vmatpush1.msra.mxu0 0.0
    %2275 = vmatprep.subr.mxu0 0.0
    %2276 = vmatpush1.msra.mxu0 0.0
    %2277 = vmatprep.subr.mxu0 0.0
    %2278 = vmatpush1.msra.mxu0 0.0
    %2279 = vmatprep.subr.mxu0 0.0
    %2280 = vmatpush1.msra.mxu0 0.0
    %2281 = vmatprep.subr.mxu0 0.0
    %2282 = vmatpush1.msra.mxu0 0.0
    %2283 = vmatprep.subr.mxu0 0.0
    %2284 = vmatpush1.msra.mxu0 0.0
    %2285 = vmatprep.subr.mxu0 0.0
    %2286 = vmatpush1.msra.mxu0 0.0
    %2287 = vmatprep.subr.mxu0 0.0
    %2288 = vmatpush1.msra.mxu0 0.0
    %2289 = vmatprep.mubr.f32.mxu0 0.0
    %2290 = vmatmul.mubr.f32.gmra.mrb[0].mxu0 %v2223
    %v2291 = vpop.f32.mrb[0].mxu0
    %v2292 = vadd.f32 %v2147, %v2291
    %v2293 = vpop.f32.mrb[0].mxu0
    %v2294 = vadd.f32 %v2149, %v2293
    %2295 = vdwg.mxu0
    %2296 = vmatprep.subr.mxu0 %v2036
    %2297 = vmatpush1.msra.mxu0 %v2035
    %2298 = vmatprep.subr.mxu0 %v2040
    %2299 = vmatpush1.msra.mxu0 %v2039
    %2300 = vmatprep.subr.mxu0 0.0
    %2301 = vmatpush1.msra.mxu0 0.0
    %2302 = vmatprep.subr.mxu0 0.0
    %2303 = vmatpush1.msra.mxu0 0.0
    %2304 = vmatprep.subr.mxu0 0.0
    %2305 = vmatpush1.msra.mxu0 0.0
    %2306 = vmatprep.subr.mxu0 0.0
    %2307 = vmatpush1.msra.mxu0 0.0
    %2308 = vmatprep.subr.mxu0 0.0
    %2309 = vmatpush1.msra.mxu0 0.0
    %2310 = vmatprep.subr.mxu0 0.0
    %2311 = vmatpush1.msra.mxu0 0.0
    %2312 = vmatprep.subr.mxu0 0.0
    %2313 = vmatpush1.msra.mxu0 0.0
    %2314 = vmatprep.subr.mxu0 0.0
    %2315 = vmatpush1.msra.mxu0 0.0
    %2316 = vmatprep.subr.mxu0 0.0
    %2317 = vmatpush1.msra.mxu0 0.0
    %2318 = vmatprep.subr.mxu0 0.0
    %2319 = vmatpush1.msra.mxu0 0.0
    %2320 = vmatprep.subr.mxu0 0.0
    %2321 = vmatpush1.msra.mxu0 0.0
    %2322 = vmatprep.subr.mxu0 0.0
    %2323 = vmatpush1.msra.mxu0 0.0
    %2324 = vmatprep.subr.mxu0 0.0
    %2325 = vmatpush1.msra.mxu0 0.0
    %2326 = vmatprep.subr.mxu0 0.0
    %2327 = vmatpush1.msra.mxu0 0.0
    %2328 = vmatprep.subr.mxu0 0.0
    %2329 = vmatpush1.msra.mxu0 0.0
    %2330 = vmatprep.subr.mxu0 0.0
    %2331 = vmatpush1.msra.mxu0 0.0
    %2332 = vmatprep.subr.mxu0 0.0
    %2333 = vmatpush1.msra.mxu0 0.0
    %2334 = vmatprep.subr.mxu0 0.0
    %2335 = vmatpush1.msra.mxu0 0.0
    %2336 = vmatprep.subr.mxu0 0.0
    %2337 = vmatpush1.msra.mxu0 0.0
    %2338 = vmatprep.subr.mxu0 0.0
    %2339 = vmatpush1.msra.mxu0 0.0
    %2340 = vmatprep.subr.mxu0 0.0
    %2341 = vmatpush1.msra.mxu0 0.0
    %2342 = vmatprep.subr.mxu0 0.0
    %2343 = vmatpush1.msra.mxu0 0.0
    %2344 = vmatprep.subr.mxu0 0.0
    %2345 = vmatpush1.msra.mxu0 0.0
    %2346 = vmatprep.subr.mxu0 0.0
    %2347 = vmatpush1.msra.mxu0 0.0
    %2348 = vmatprep.subr.mxu0 0.0
    %2349 = vmatpush1.msra.mxu0 0.0
    %2350 = vmatprep.subr.mxu0 0.0
    %2351 = vmatpush1.msra.mxu0 0.0
    %2352 = vmatprep.subr.mxu0 0.0
    %2353 = vmatpush1.msra.mxu0 0.0
    %2354 = vmatprep.subr.mxu0 0.0
    %2355 = vmatpush1.msra.mxu0 0.0
    %2356 = vmatprep.subr.mxu0 0.0
    %2357 = vmatpush1.msra.mxu0 0.0
    %2358 = vmatprep.subr.mxu0 0.0
    %2359 = vmatpush1.msra.mxu0 0.0
    %2360 = vmatprep.mubr.f32.mxu0 0.0
    %2361 = vmatmul.mubr.f32.gmra.mrb[0].mxu0 %v2223
    %v2362 = vpop.f32.mrb[0].mxu0
    %v2363 = vadd.f32 %v2218, %v2362
    %v2364 = vpop.f32.mrb[0].mxu0
    %v2365 = vadd.f32 %v2220, %v2364
    %2366 = vdwg.mxu0
    %2367 = vrot.lane.b32.xlu0 %v2001, 15
    %v2368 = vpop.permute.xlu0 %2367
    %2369 = vrot.lane.b32.xlu0 %v2005, 15
    %v2370 = vpop.permute.xlu0 %2369
    %2371 = vrot.lane.b32.xlu0 %v2002, 15
    %v2372 = vpop.permute.xlu0 %2371
    %2373 = vrot.lane.b32.xlu0 %v2006, 15
    %v2374 = vpop.permute.xlu0 %2373
    %2375 = vrot.lane.b32.xlu0 %v2003, 15
    %v2376 = vpop.permute.xlu0 %2375
    %2377 = vrot.lane.b32.xlu0 %v2007, 15
    %v2378 = vpop.permute.xlu0 %2377
    %2379 = vrot.lane.b32.xlu0 %v2004, 15
    %v2380 = vpop.permute.xlu0 %2379
    %2381 = vrot.lane.b32.xlu0 %v2008, 15
    %v2382 = vpop.permute.xlu0 %2381
    %v2383 = vsel %vm472, %v2376, %v2380
    %v2384 = vsel %vm472, %v2378, %v2382
    %v2385 = vsel %vm472, %v2372, %v2376
    %v2386 = vsel %vm472, %v2374, %v2378
    %v2387 = vsel %vm472, %v2368, %v2372
    %v2388 = vsel %vm472, %v2370, %v2374
    %v2389 = vsel %vm472, %v2380, %v2368
    %v2390 = vsel %vm472, %v2382, %v2370
    %v2391 = vmul.f32 %v2389, %v483
    %v2392 = vmul.f32 %v2387, %v487
    %v2393 = vmul.f32 %v2385, %v491
    %v2394 = vmul.f32 %v2383, %v495
    %v2395 = vmul.f32 %v2390, %v483
    %v2396 = vmul.f32 %v2388, %v487
    %v2397 = vmul.f32 %v2386, %v491
    %v2398 = vmul.f32 %v2384, %v495
    %s2399 = scalar_lea.vmem %s4, 8
    %v2400 = vld [vmem:[%s2399] sm:$0xf]
    %v2402 = vsel %vm2076, %v2400, 0
    %2404 = vmatprep.subr.mxu0 %v2392
    %2405 = vmatpush1.msra.mxu0 %v2391
    %2406 = vmatprep.subr.mxu0 %v2396
    %2407 = vmatpush1.msra.mxu0 %v2395
    %2408 = vmatprep.subr.mxu0 0.0
    %2409 = vmatpush1.msra.mxu0 0.0
    %2410 = vmatprep.subr.mxu0 0.0
    %2411 = vmatpush1.msra.mxu0 0.0
    %2412 = vmatprep.subr.mxu0 0.0
    %2413 = vmatpush1.msra.mxu0 0.0
    %2414 = vmatprep.subr.mxu0 0.0
    %2415 = vmatpush1.msra.mxu0 0.0
    %2416 = vmatprep.subr.mxu0 0.0
    %2417 = vmatpush1.msra.mxu0 0.0
    %2418 = vmatprep.subr.mxu0 0.0
    %2419 = vmatpush1.msra.mxu0 0.0
    %2420 = vmatprep.subr.mxu0 0.0
    %2421 = vmatpush1.msra.mxu0 0.0
    %2422 = vmatprep.subr.mxu0 0.0
    %2423 = vmatpush1.msra.mxu0 0.0
    %2424 = vmatprep.subr.mxu0 0.0
    %2425 = vmatpush1.msra.mxu0 0.0
    %2426 = vmatprep.subr.mxu0 0.0
    %2427 = vmatpush1.msra.mxu0 0.0
    %2428 = vmatprep.subr.mxu0 0.0
    %2429 = vmatpush1.msra.mxu0 0.0
    %2430 = vmatprep.subr.mxu0 0.0
    %2431 = vmatpush1.msra.mxu0 0.0
    %2432 = vmatprep.subr.mxu0 0.0
    %2433 = vmatpush1.msra.mxu0 0.0
    %2434 = vmatprep.subr.mxu0 0.0
    %2435 = vmatpush1.msra.mxu0 0.0
    %2436 = vmatprep.subr.mxu0 0.0
    %2437 = vmatpush1.msra.mxu0 0.0
    %2438 = vmatprep.subr.mxu0 0.0
    %2439 = vmatpush1.msra.mxu0 0.0
    %2440 = vmatprep.subr.mxu0 0.0
    %2441 = vmatpush1.msra.mxu0 0.0
    %2442 = vmatprep.subr.mxu0 0.0
    %2443 = vmatpush1.msra.mxu0 0.0
    %2444 = vmatprep.subr.mxu0 0.0
    %2445 = vmatpush1.msra.mxu0 0.0
    %2446 = vmatprep.subr.mxu0 0.0
    %2447 = vmatpush1.msra.mxu0 0.0
    %2448 = vmatprep.subr.mxu0 0.0
    %2449 = vmatpush1.msra.mxu0 0.0
    %2450 = vmatprep.subr.mxu0 0.0
    %2451 = vmatpush1.msra.mxu0 0.0
    %2452 = vmatprep.subr.mxu0 0.0
    %2453 = vmatpush1.msra.mxu0 0.0
    %2454 = vmatprep.subr.mxu0 0.0
    %2455 = vmatpush1.msra.mxu0 0.0
    %2456 = vmatprep.subr.mxu0 0.0
    %2457 = vmatpush1.msra.mxu0 0.0
    %2458 = vmatprep.subr.mxu0 0.0
    %2459 = vmatpush1.msra.mxu0 0.0
    %2460 = vmatprep.subr.mxu0 0.0
    %2461 = vmatpush1.msra.mxu0 0.0
    %2462 = vmatprep.subr.mxu0 0.0
    %2463 = vmatpush1.msra.mxu0 0.0
    %2464 = vmatprep.subr.mxu0 0.0
    %2465 = vmatpush1.msra.mxu0 0.0
    %2466 = vmatprep.subr.mxu0 0.0
    %2467 = vmatpush1.msra.mxu0 0.0
    %2468 = vmatprep.mubr.f32.mxu0 0.0
    %2469 = vmatmul.mubr.f32.gmra.mrb[0].mxu0 %v2402
    %v2470 = vpop.f32.mrb[0].mxu0
    %v2471 = vadd.f32 0.0, %v2470
    %v2472 = vpop.f32.mrb[0].mxu0
    %v2473 = vadd.f32 0.0, %v2472
    %2474 = vdwg.mxu0
    %2475 = vmatprep.subr.mxu0 %v2394
    %2476 = vmatpush1.msra.mxu0 %v2393
    %2477 = vmatprep.subr.mxu0 %v2398
    %2478 = vmatpush1.msra.mxu0 %v2397
    %2479 = vmatprep.subr.mxu0 0.0
    %2480 = vmatpush1.msra.mxu0 0.0
    %2481 = vmatprep.subr.mxu0 0.0
    %2482 = vmatpush1.msra.mxu0 0.0
    %2483 = vmatprep.subr.mxu0 0.0
    %2484 = vmatpush1.msra.mxu0 0.0
    %2485 = vmatprep.subr.mxu0 0.0
    %2486 = vmatpush1.msra.mxu0 0.0
    %2487 = vmatprep.subr.mxu0 0.0
    %2488 = vmatpush1.msra.mxu0 0.0
    %2489 = vmatprep.subr.mxu0 0.0
    %2490 = vmatpush1.msra.mxu0 0.0
    %2491 = vmatprep.subr.mxu0 0.0
    %2492 = vmatpush1.msra.mxu0 0.0
    %2493 = vmatprep.subr.mxu0 0.0
    %2494 = vmatpush1.msra.mxu0 0.0
    %2495 = vmatprep.subr.mxu0 0.0
    %2496 = vmatpush1.msra.mxu0 0.0
    %2497 = vmatprep.subr.mxu0 0.0
    %2498 = vmatpush1.msra.mxu0 0.0
    %2499 = vmatprep.subr.mxu0 0.0
    %2500 = vmatpush1.msra.mxu0 0.0
    %2501 = vmatprep.subr.mxu0 0.0
    %2502 = vmatpush1.msra.mxu0 0.0
    %2503 = vmatprep.subr.mxu0 0.0
    %2504 = vmatpush1.msra.mxu0 0.0
    %2505 = vmatprep.subr.mxu0 0.0
    %2506 = vmatpush1.msra.mxu0 0.0
    %2507 = vmatprep.subr.mxu0 0.0
    %2508 = vmatpush1.msra.mxu0 0.0
    %2509 = vmatprep.subr.mxu0 0.0
    %2510 = vmatpush1.msra.mxu0 0.0
    %2511 = vmatprep.subr.mxu0 0.0
    %2512 = vmatpush1.msra.mxu0 0.0
    %2513 = vmatprep.subr.mxu0 0.0
    %2514 = vmatpush1.msra.mxu0 0.0
    %2515 = vmatprep.subr.mxu0 0.0
    %2516 = vmatpush1.msra.mxu0 0.0
    %2517 = vmatprep.subr.mxu0 0.0
    %2518 = vmatpush1.msra.mxu0 0.0
    %2519 = vmatprep.subr.mxu0 0.0
    %2520 = vmatpush1.msra.mxu0 0.0
    %2521 = vmatprep.subr.mxu0 0.0
    %2522 = vmatpush1.msra.mxu0 0.0
    %2523 = vmatprep.subr.mxu0 0.0
    %2524 = vmatpush1.msra.mxu0 0.0
    %2525 = vmatprep.subr.mxu0 0.0
    %2526 = vmatpush1.msra.mxu0 0.0
    %2527 = vmatprep.subr.mxu0 0.0
    %2528 = vmatpush1.msra.mxu0 0.0
    %2529 = vmatprep.subr.mxu0 0.0
    %2530 = vmatpush1.msra.mxu0 0.0
    %2531 = vmatprep.subr.mxu0 0.0
    %2532 = vmatpush1.msra.mxu0 0.0
    %2533 = vmatprep.subr.mxu0 0.0
    %2534 = vmatpush1.msra.mxu0 0.0
    %2535 = vmatprep.subr.mxu0 0.0
    %2536 = vmatpush1.msra.mxu0 0.0
    %2537 = vmatprep.subr.mxu0 0.0
    %2538 = vmatpush1.msra.mxu0 0.0
    %2539 = vmatprep.mubr.f32.mxu0 0.0
    %2540 = vmatmul.mubr.f32.gmra.mrb[0].mxu0 %v2402
    %v2541 = vpop.f32.mrb[0].mxu0
    %v2542 = vadd.f32 0.0, %v2541
    %v2543 = vpop.f32.mrb[0].mxu0
    %v2544 = vadd.f32 0.0, %v2543
    %2545 = vdwg.mxu0
    %v2546 = vadd.f32 %v2292, %v2471
    %v2547 = vadd.f32 %v2294, %v2473
    %v2548 = vadd.f32 %v2363, %v2542
    %v2549 = vadd.f32 %v2365, %v2544
    %2550 = vrot.lane.b32.xlu0 %v2001, 1
    %v2551 = vpop.permute.xlu0 %2550
    %2552 = vrot.lane.b32.xlu0 %v2005, 1
    %v2553 = vpop.permute.xlu0 %2552
    %2554 = vrot.lane.b32.xlu0 %v2002, 1
    %v2555 = vpop.permute.xlu0 %2554
    %2556 = vrot.lane.b32.xlu0 %v2006, 1
    %v2557 = vpop.permute.xlu0 %2556
    %2558 = vrot.lane.b32.xlu0 %v2003, 1
    %v2559 = vpop.permute.xlu0 %2558
    %2560 = vrot.lane.b32.xlu0 %v2007, 1
    %v2561 = vpop.permute.xlu0 %2560
    %2562 = vrot.lane.b32.xlu0 %v2004, 1
    %v2563 = vpop.permute.xlu0 %2562
    %2564 = vrot.lane.b32.xlu0 %v2008, 1
    %v2565 = vpop.permute.xlu0 %2564
    %v2566 = vsel %vm695, %v2559, %v2563
    %v2567 = vsel %vm695, %v2561, %v2565
    %v2568 = vsel %vm695, %v2555, %v2559
    %v2569 = vsel %vm695, %v2557, %v2561
    %v2570 = vsel %vm695, %v2551, %v2555
    %v2571 = vsel %vm695, %v2553, %v2557
    %v2572 = vsel %vm695, %v2563, %v2551
    %v2573 = vsel %vm695, %v2565, %v2553
    %v2574 = vmul.f32 %v2572, %v706
    %v2575 = vmul.f32 %v2570, %v710
    %v2576 = vmul.f32 %v2568, %v714
    %v2577 = vmul.f32 %v2566, %v718
    %v2578 = vmul.f32 %v2573, %v706
    %v2579 = vmul.f32 %v2571, %v710
    %v2580 = vmul.f32 %v2569, %v714
    %v2581 = vmul.f32 %v2567, %v718
    %s2582 = scalar_lea.vmem %s4, 12
    %v2583 = vld [vmem:[%s2582] sm:$0xf]
    %v2585 = vsel %vm2076, %v2583, 0
    %2587 = vmatprep.subr.mxu0 %v2575
    %2588 = vmatpush1.msra.mxu0 %v2574
    %2589 = vmatprep.subr.mxu0 %v2579
    %2590 = vmatpush1.msra.mxu0 %v2578
    %2591 = vmatprep.subr.mxu0 0.0
    %2592 = vmatpush1.msra.mxu0 0.0
    %2593 = vmatprep.subr.mxu0 0.0
    %2594 = vmatpush1.msra.mxu0 0.0
    %2595 = vmatprep.subr.mxu0 0.0
    %2596 = vmatpush1.msra.mxu0 0.0
    %2597 = vmatprep.subr.mxu0 0.0
    %2598 = vmatpush1.msra.mxu0 0.0
    %2599 = vmatprep.subr.mxu0 0.0
    %2600 = vmatpush1.msra.mxu0 0.0
    %2601 = vmatprep.subr.mxu0 0.0
    %2602 = vmatpush1.msra.mxu0 0.0
    %2603 = vmatprep.subr.mxu0 0.0
    %2604 = vmatpush1.msra.mxu0 0.0
    %2605 = vmatprep.subr.mxu0 0.0
    %2606 = vmatpush1.msra.mxu0 0.0
    %2607 = vmatprep.subr.mxu0 0.0
    %2608 = vmatpush1.msra.mxu0 0.0
    %2609 = vmatprep.subr.mxu0 0.0
    %2610 = vmatpush1.msra.mxu0 0.0
    %2611 = vmatprep.subr.mxu0 0.0
    %2612 = vmatpush1.msra.mxu0 0.0
    %2613 = vmatprep.subr.mxu0 0.0
    %2614 = vmatpush1.msra.mxu0 0.0
    %2615 = vmatprep.subr.mxu0 0.0
    %2616 = vmatpush1.msra.mxu0 0.0
    %2617 = vmatprep.subr.mxu0 0.0
    %2618 = vmatpush1.msra.mxu0 0.0
    %2619 = vmatprep.subr.mxu0 0.0
    %2620 = vmatpush1.msra.mxu0 0.0
    %2621 = vmatprep.subr.mxu0 0.0
    %2622 = vmatpush1.msra.mxu0 0.0
    %2623 = vmatprep.subr.mxu0 0.0
    %2624 = vmatpush1.msra.mxu0 0.0
    %2625 = vmatprep.subr.mxu0 0.0
    %2626 = vmatpush1.msra.mxu0 0.0
    %2627 = vmatprep.subr.mxu0 0.0
    %2628 = vmatpush1.msra.mxu0 0.0
    %2629 = vmatprep.subr.mxu0 0.0
    %2630 = vmatpush1.msra.mxu0 0.0
    %2631 = vmatprep.subr.mxu0 0.0
    %2632 = vmatpush1.msra.mxu0 0.0
    %2633 = vmatprep.subr.mxu0 0.0
    %2634 = vmatpush1.msra.mxu0 0.0
    %2635 = vmatprep.subr.mxu0 0.0
    %2636 = vmatpush1.msra.mxu0 0.0
    %2637 = vmatprep.subr.mxu0 0.0
    %2638 = vmatpush1.msra.mxu0 0.0
    %2639 = vmatprep.subr.mxu0 0.0
    %2640 = vmatpush1.msra.mxu0 0.0
    %2641 = vmatprep.subr.mxu0 0.0
    %2642 = vmatpush1.msra.mxu0 0.0
    %2643 = vmatprep.subr.mxu0 0.0
    %2644 = vmatpush1.msra.mxu0 0.0
    %2645 = vmatprep.subr.mxu0 0.0
    %2646 = vmatpush1.msra.mxu0 0.0
    %2647 = vmatprep.subr.mxu0 0.0
    %2648 = vmatpush1.msra.mxu0 0.0
    %2649 = vmatprep.subr.mxu0 0.0
    %2650 = vmatpush1.msra.mxu0 0.0
    %2651 = vmatprep.mubr.f32.mxu0 0.0
    %2652 = vmatmul.mubr.f32.gmra.mrb[0].mxu0 %v2585
    %v2653 = vpop.f32.mrb[0].mxu0
    %v2654 = vadd.f32 0.0, %v2653
    %v2655 = vpop.f32.mrb[0].mxu0
    %v2656 = vadd.f32 0.0, %v2655
    %2657 = vdwg.mxu0
    %2658 = vmatprep.subr.mxu0 %v2577
    %2659 = vmatpush1.msra.mxu0 %v2576
    %2660 = vmatprep.subr.mxu0 %v2581
    %2661 = vmatpush1.msra.mxu0 %v2580
    %2662 = vmatprep.subr.mxu0 0.0
    %2663 = vmatpush1.msra.mxu0 0.0
    %2664 = vmatprep.subr.mxu0 0.0
    %2665 = vmatpush1.msra.mxu0 0.0
    %2666 = vmatprep.subr.mxu0 0.0
    %2667 = vmatpush1.msra.mxu0 0.0
    %2668 = vmatprep.subr.mxu0 0.0
    %2669 = vmatpush1.msra.mxu0 0.0
    %2670 = vmatprep.subr.mxu0 0.0
    %2671 = vmatpush1.msra.mxu0 0.0
    %2672 = vmatprep.subr.mxu0 0.0
    %2673 = vmatpush1.msra.mxu0 0.0
    %2674 = vmatprep.subr.mxu0 0.0
    %2675 = vmatpush1.msra.mxu0 0.0
    %2676 = vmatprep.subr.mxu0 0.0
    %2677 = vmatpush1.msra.mxu0 0.0
    %2678 = vmatprep.subr.mxu0 0.0
    %2679 = vmatpush1.msra.mxu0 0.0
    %2680 = vmatprep.subr.mxu0 0.0
    %2681 = vmatpush1.msra.mxu0 0.0
    %2682 = vmatprep.subr.mxu0 0.0
    %2683 = vmatpush1.msra.mxu0 0.0
    %2684 = vmatprep.subr.mxu0 0.0
    %2685 = vmatpush1.msra.mxu0 0.0
    %2686 = vmatprep.subr.mxu0 0.0
    %2687 = vmatpush1.msra.mxu0 0.0
    %2688 = vmatprep.subr.mxu0 0.0
    %2689 = vmatpush1.msra.mxu0 0.0
    %2690 = vmatprep.subr.mxu0 0.0
    %2691 = vmatpush1.msra.mxu0 0.0
    %2692 = vmatprep.subr.mxu0 0.0
    %2693 = vmatpush1.msra.mxu0 0.0
    %2694 = vmatprep.subr.mxu0 0.0
    %2695 = vmatpush1.msra.mxu0 0.0
    %2696 = vmatprep.subr.mxu0 0.0
    %2697 = vmatpush1.msra.mxu0 0.0
    %2698 = vmatprep.subr.mxu0 0.0
    %2699 = vmatpush1.msra.mxu0 0.0
    %2700 = vmatprep.subr.mxu0 0.0
    %2701 = vmatpush1.msra.mxu0 0.0
    %2702 = vmatprep.subr.mxu0 0.0
    %2703 = vmatpush1.msra.mxu0 0.0
    %2704 = vmatprep.subr.mxu0 0.0
    %2705 = vmatpush1.msra.mxu0 0.0
    %2706 = vmatprep.subr.mxu0 0.0
    %2707 = vmatpush1.msra.mxu0 0.0
    %2708 = vmatprep.subr.mxu0 0.0
    %2709 = vmatpush1.msra.mxu0 0.0
    %2710 = vmatprep.subr.mxu0 0.0
    %2711 = vmatpush1.msra.mxu0 0.0
    %2712 = vmatprep.subr.mxu0 0.0
    %2713 = vmatpush1.msra.mxu0 0.0
    %2714 = vmatprep.subr.mxu0 0.0
    %2715 = vmatpush1.msra.mxu0 0.0
    %2716 = vmatprep.subr.mxu0 0.0
    %2717 = vmatpush1.msra.mxu0 0.0
    %2718 = vmatprep.subr.mxu0 0.0
    %2719 = vmatpush1.msra.mxu0 0.0
    %2720 = vmatprep.subr.mxu0 0.0
    %2721 = vmatpush1.msra.mxu0 0.0
    %2722 = vmatprep.mubr.f32.mxu0 0.0
    %2723 = vmatmul.mubr.f32.gmra.mrb[0].mxu0 %v2585
    %v2724 = vpop.f32.mrb[0].mxu0
    %v2725 = vadd.f32 0.0, %v2724
    %v2726 = vpop.f32.mrb[0].mxu0
    %v2727 = vadd.f32 0.0, %v2726
    %2728 = vdwg.mxu0
    %v2729 = vadd.f32 %v2546, %v2654
    %v2730 = vadd.f32 %v2547, %v2656
    %v2731 = vadd.f32 %v2548, %v2725
    %v2732 = vadd.f32 %v2549, %v2727
    %s2733 = scalar_lea.vmem %s4, 16
    %v2734 = vld [vmem:[%s2733] sm:$0xf]
    %v2736 = vsel %vm2076, %v2734, 0
    %2738 = vmatprep.subr.mxu0 %v2002
    %2739 = vmatpush1.msra.mxu0 %v2001
    %2740 = vmatprep.subr.mxu0 %v2006
    %2741 = vmatpush1.msra.mxu0 %v2005
    %2742 = vmatprep.subr.mxu0 0.0
    %2743 = vmatpush1.msra.mxu0 0.0
    %2744 = vmatprep.subr.mxu0 0.0
    %2745 = vmatpush1.msra.mxu0 0.0
    %2746 = vmatprep.subr.mxu0 0.0
    %2747 = vmatpush1.msra.mxu0 0.0
    %2748 = vmatprep.subr.mxu0 0.0
    %2749 = vmatpush1.msra.mxu0 0.0
    %2750 = vmatprep.subr.mxu0 0.0
    %2751 = vmatpush1.msra.mxu0 0.0
    %2752 = vmatprep.subr.mxu0 0.0
    %2753 = vmatpush1.msra.mxu0 0.0
    %2754 = vmatprep.subr.mxu0 0.0
    %2755 = vmatpush1.msra.mxu0 0.0
    %2756 = vmatprep.subr.mxu0 0.0
    %2757 = vmatpush1.msra.mxu0 0.0
    %2758 = vmatprep.subr.mxu0 0.0
    %2759 = vmatpush1.msra.mxu0 0.0
    %2760 = vmatprep.subr.mxu0 0.0
    %2761 = vmatpush1.msra.mxu0 0.0
    %2762 = vmatprep.subr.mxu0 0.0
    %2763 = vmatpush1.msra.mxu0 0.0
    %2764 = vmatprep.subr.mxu0 0.0
    %2765 = vmatpush1.msra.mxu0 0.0
    %2766 = vmatprep.subr.mxu0 0.0
    %2767 = vmatpush1.msra.mxu0 0.0
    %2768 = vmatprep.subr.mxu0 0.0
    %2769 = vmatpush1.msra.mxu0 0.0
    %2770 = vmatprep.subr.mxu0 0.0
    %2771 = vmatpush1.msra.mxu0 0.0
    %2772 = vmatprep.subr.mxu0 0.0
    %2773 = vmatpush1.msra.mxu0 0.0
    %2774 = vmatprep.subr.mxu0 0.0
    %2775 = vmatpush1.msra.mxu0 0.0
    %2776 = vmatprep.subr.mxu0 0.0
    %2777 = vmatpush1.msra.mxu0 0.0
    %2778 = vmatprep.subr.mxu0 0.0
    %2779 = vmatpush1.msra.mxu0 0.0
    %2780 = vmatprep.subr.mxu0 0.0
    %2781 = vmatpush1.msra.mxu0 0.0
    %2782 = vmatprep.subr.mxu0 0.0
    %2783 = vmatpush1.msra.mxu0 0.0
    %2784 = vmatprep.subr.mxu0 0.0
    %2785 = vmatpush1.msra.mxu0 0.0
    %2786 = vmatprep.subr.mxu0 0.0
    %2787 = vmatpush1.msra.mxu0 0.0
    %2788 = vmatprep.subr.mxu0 0.0
    %2789 = vmatpush1.msra.mxu0 0.0
    %2790 = vmatprep.subr.mxu0 0.0
    %2791 = vmatpush1.msra.mxu0 0.0
    %2792 = vmatprep.subr.mxu0 0.0
    %2793 = vmatpush1.msra.mxu0 0.0
    %2794 = vmatprep.subr.mxu0 0.0
    %2795 = vmatpush1.msra.mxu0 0.0
    %2796 = vmatprep.subr.mxu0 0.0
    %2797 = vmatpush1.msra.mxu0 0.0
    %2798 = vmatprep.subr.mxu0 0.0
    %2799 = vmatpush1.msra.mxu0 0.0
    %2800 = vmatprep.subr.mxu0 0.0
    %2801 = vmatpush1.msra.mxu0 0.0
    %2802 = vmatprep.mubr.f32.mxu0 0.0
    %2803 = vmatmul.mubr.f32.gmra.mrb[0].mxu0 %v2736
    %v2804 = vpop.f32.mrb[0].mxu0
    %v2805 = vadd.f32 0.0, %v2804
    %v2806 = vpop.f32.mrb[0].mxu0
    %v2807 = vadd.f32 0.0, %v2806
    %2808 = vdwg.mxu0
    %2809 = vmatprep.subr.mxu0 %v2004
    %2810 = vmatpush1.msra.mxu0 %v2003
    %2811 = vmatprep.subr.mxu0 %v2008
    %2812 = vmatpush1.msra.mxu0 %v2007
    %2813 = vmatprep.subr.mxu0 0.0
    %2814 = vmatpush1.msra.mxu0 0.0
    %2815 = vmatprep.subr.mxu0 0.0
    %2816 = vmatpush1.msra.mxu0 0.0
    %2817 = vmatprep.subr.mxu0 0.0
    %2818 = vmatpush1.msra.mxu0 0.0
    %2819 = vmatprep.subr.mxu0 0.0
    %2820 = vmatpush1.msra.mxu0 0.0
    %2821 = vmatprep.subr.mxu0 0.0
    %2822 = vmatpush1.msra.mxu0 0.0
    %2823 = vmatprep.subr.mxu0 0.0
    %2824 = vmatpush1.msra.mxu0 0.0
    %2825 = vmatprep.subr.mxu0 0.0
    %2826 = vmatpush1.msra.mxu0 0.0
    %2827 = vmatprep.subr.mxu0 0.0
    %2828 = vmatpush1.msra.mxu0 0.0
    %2829 = vmatprep.subr.mxu0 0.0
    %2830 = vmatpush1.msra.mxu0 0.0
    %2831 = vmatprep.subr.mxu0 0.0
    %2832 = vmatpush1.msra.mxu0 0.0
    %2833 = vmatprep.subr.mxu0 0.0
    %2834 = vmatpush1.msra.mxu0 0.0
    %2835 = vmatprep.subr.mxu0 0.0
    %2836 = vmatpush1.msra.mxu0 0.0
    %2837 = vmatprep.subr.mxu0 0.0
    %2838 = vmatpush1.msra.mxu0 0.0
    %2839 = vmatprep.subr.mxu0 0.0
    %2840 = vmatpush1.msra.mxu0 0.0
    %2841 = vmatprep.subr.mxu0 0.0
    %2842 = vmatpush1.msra.mxu0 0.0
    %2843 = vmatprep.subr.mxu0 0.0
    %2844 = vmatpush1.msra.mxu0 0.0
    %2845 = vmatprep.subr.mxu0 0.0
    %2846 = vmatpush1.msra.mxu0 0.0
    %2847 = vmatprep.subr.mxu0 0.0
    %2848 = vmatpush1.msra.mxu0 0.0
    %2849 = vmatprep.subr.mxu0 0.0
    %2850 = vmatpush1.msra.mxu0 0.0
    %2851 = vmatprep.subr.mxu0 0.0
    %2852 = vmatpush1.msra.mxu0 0.0
    %2853 = vmatprep.subr.mxu0 0.0
    %2854 = vmatpush1.msra.mxu0 0.0
    %2855 = vmatprep.subr.mxu0 0.0
    %2856 = vmatpush1.msra.mxu0 0.0
    %2857 = vmatprep.subr.mxu0 0.0
    %2858 = vmatpush1.msra.mxu0 0.0
    %2859 = vmatprep.subr.mxu0 0.0
    %2860 = vmatpush1.msra.mxu0 0.0
    %2861 = vmatprep.subr.mxu0 0.0
    %2862 = vmatpush1.msra.mxu0 0.0
    %2863 = vmatprep.subr.mxu0 0.0
    %2864 = vmatpush1.msra.mxu0 0.0
    %2865 = vmatprep.subr.mxu0 0.0
    %2866 = vmatpush1.msra.mxu0 0.0
    %2867 = vmatprep.subr.mxu0 0.0
    %2868 = vmatpush1.msra.mxu0 0.0
    %2869 = vmatprep.subr.mxu0 0.0
    %2870 = vmatpush1.msra.mxu0 0.0
    %2871 = vmatprep.subr.mxu0 0.0
    %2872 = vmatpush1.msra.mxu0 0.0
    %2873 = vmatprep.mubr.f32.mxu0 0.0
    %2874 = vmatmul.mubr.f32.gmra.mrb[0].mxu0 %v2736
    %v2875 = vpop.f32.mrb[0].mxu0
    %v2876 = vadd.f32 0.0, %v2875
    %v2877 = vpop.f32.mrb[0].mxu0
    %v2878 = vadd.f32 0.0, %v2877
    %2879 = vdwg.mxu0
    %v2880 = vadd.f32 %v2729, %v2805
    %v2881 = vadd.f32 %v2730, %v2807
    %v2882 = vadd.f32 %v2731, %v2876
    %v2883 = vadd.f32 %v2732, %v2878
    %2884 = vrot.lane.b32.xlu0 %v2001, 127
    %v2885 = vpop.permute.xlu0 %2884
    %2886 = vrot.lane.b32.xlu0 %v2005, 127
    %v2887 = vpop.permute.xlu0 %2886
    %2888 = vrot.lane.b32.xlu0 %v2002, 127
    %v2889 = vpop.permute.xlu0 %2888
    %2890 = vrot.lane.b32.xlu0 %v2006, 127
    %v2891 = vpop.permute.xlu0 %2890
    %2892 = vrot.lane.b32.xlu0 %v2003, 127
    %v2893 = vpop.permute.xlu0 %2892
    %2894 = vrot.lane.b32.xlu0 %v2007, 127
    %v2895 = vpop.permute.xlu0 %2894
    %2896 = vrot.lane.b32.xlu0 %v2004, 127
    %v2897 = vpop.permute.xlu0 %2896
    %2898 = vrot.lane.b32.xlu0 %v2008, 127
    %v2899 = vpop.permute.xlu0 %2898
    %v2900 = vsel %vm1097, %v2893, %v2897
    %v2901 = vsel %vm1097, %v2895, %v2899
    %v2902 = vsel %vm1097, %v2889, %v2893
    %v2903 = vsel %vm1097, %v2891, %v2895
    %v2904 = vsel %vm1097, %v2885, %v2889
    %v2905 = vsel %vm1097, %v2887, %v2891
    %v2906 = vsel %vm1097, %v2897, %v2885
    %v2907 = vsel %vm1097, %v2899, %v2887
    %v2908 = vmul.f32 %v2904, %v1108
    %v2909 = vmul.f32 %v2902, %v1112
    %v2910 = vmul.f32 %v2900, %v1116
    %v2911 = vmul.f32 %v2906, %v1120
    %v2912 = vmul.f32 %v2905, %v1108
    %v2913 = vmul.f32 %v2903, %v1112
    %v2914 = vmul.f32 %v2901, %v1116
    %v2915 = vmul.f32 %v2907, %v1120
    %s2916 = scalar_lea.vmem %s4, 20
    %v2917 = vld [vmem:[%s2916] sm:$0xf]
    %v2919 = vsel %vm2076, %v2917, 0
    %2921 = vmatprep.subr.mxu0 %v2909
    %2922 = vmatpush1.msra.mxu0 %v2908
    %2923 = vmatprep.subr.mxu0 %v2913
    %2924 = vmatpush1.msra.mxu0 %v2912
    %2925 = vmatprep.subr.mxu0 0.0
    %2926 = vmatpush1.msra.mxu0 0.0
    %2927 = vmatprep.subr.mxu0 0.0
    %2928 = vmatpush1.msra.mxu0 0.0
    %2929 = vmatprep.subr.mxu0 0.0
    %2930 = vmatpush1.msra.mxu0 0.0
    %2931 = vmatprep.subr.mxu0 0.0
    %2932 = vmatpush1.msra.mxu0 0.0
    %2933 = vmatprep.subr.mxu0 0.0
    %2934 = vmatpush1.msra.mxu0 0.0
    %2935 = vmatprep.subr.mxu0 0.0
    %2936 = vmatpush1.msra.mxu0 0.0
    %2937 = vmatprep.subr.mxu0 0.0
    %2938 = vmatpush1.msra.mxu0 0.0
    %2939 = vmatprep.subr.mxu0 0.0
    %2940 = vmatpush1.msra.mxu0 0.0
    %2941 = vmatprep.subr.mxu0 0.0
    %2942 = vmatpush1.msra.mxu0 0.0
    %2943 = vmatprep.subr.mxu0 0.0
    %2944 = vmatpush1.msra.mxu0 0.0
    %2945 = vmatprep.subr.mxu0 0.0
    %2946 = vmatpush1.msra.mxu0 0.0
    %2947 = vmatprep.subr.mxu0 0.0
    %2948 = vmatpush1.msra.mxu0 0.0
    %2949 = vmatprep.subr.mxu0 0.0
    %2950 = vmatpush1.msra.mxu0 0.0
    %2951 = vmatprep.subr.mxu0 0.0
    %2952 = vmatpush1.msra.mxu0 0.0
    %2953 = vmatprep.subr.mxu0 0.0
    %2954 = vmatpush1.msra.mxu0 0.0
    %2955 = vmatprep.subr.mxu0 0.0
    %2956 = vmatpush1.msra.mxu0 0.0
    %2957 = vmatprep.subr.mxu0 0.0
    %2958 = vmatpush1.msra.mxu0 0.0
    %2959 = vmatprep.subr.mxu0 0.0
    %2960 = vmatpush1.msra.mxu0 0.0
    %2961 = vmatprep.subr.mxu0 0.0
    %2962 = vmatpush1.msra.mxu0 0.0
    %2963 = vmatprep.subr.mxu0 0.0
    %2964 = vmatpush1.msra.mxu0 0.0
    %2965 = vmatprep.subr.mxu0 0.0
    %2966 = vmatpush1.msra.mxu0 0.0
    %2967 = vmatprep.subr.mxu0 0.0
    %2968 = vmatpush1.msra.mxu0 0.0
    %2969 = vmatprep.subr.mxu0 0.0
    %2970 = vmatpush1.msra.mxu0 0.0
    %2971 = vmatprep.subr.mxu0 0.0
    %2972 = vmatpush1.msra.mxu0 0.0
    %2973 = vmatprep.subr.mxu0 0.0
    %2974 = vmatpush1.msra.mxu0 0.0
    %2975 = vmatprep.subr.mxu0 0.0
    %2976 = vmatpush1.msra.mxu0 0.0
    %2977 = vmatprep.subr.mxu0 0.0
    %2978 = vmatpush1.msra.mxu0 0.0
    %2979 = vmatprep.subr.mxu0 0.0
    %2980 = vmatpush1.msra.mxu0 0.0
    %2981 = vmatprep.subr.mxu0 0.0
    %2982 = vmatpush1.msra.mxu0 0.0
    %2983 = vmatprep.subr.mxu0 0.0
    %2984 = vmatpush1.msra.mxu0 0.0
    %2985 = vmatprep.mubr.f32.mxu0 0.0
    %2986 = vmatmul.mubr.f32.gmra.mrb[0].mxu0 %v2919
    %v2987 = vpop.f32.mrb[0].mxu0
    %v2988 = vadd.f32 0.0, %v2987
    %v2989 = vpop.f32.mrb[0].mxu0
    %v2990 = vadd.f32 0.0, %v2989
    %2991 = vdwg.mxu0
    %2992 = vmatprep.subr.mxu0 %v2911
    %2993 = vmatpush1.msra.mxu0 %v2910
    %2994 = vmatprep.subr.mxu0 %v2915
    %2995 = vmatpush1.msra.mxu0 %v2914
    %2996 = vmatprep.subr.mxu0 0.0
    %2997 = vmatpush1.msra.mxu0 0.0
    %2998 = vmatprep.subr.mxu0 0.0
    %2999 = vmatpush1.msra.mxu0 0.0
    %3000 = vmatprep.subr.mxu0 0.0
    %3001 = vmatpush1.msra.mxu0 0.0
    %3002 = vmatprep.subr.mxu0 0.0
    %3003 = vmatpush1.msra.mxu0 0.0
    %3004 = vmatprep.subr.mxu0 0.0
    %3005 = vmatpush1.msra.mxu0 0.0
    %3006 = vmatprep.subr.mxu0 0.0
    %3007 = vmatpush1.msra.mxu0 0.0
    %3008 = vmatprep.subr.mxu0 0.0
    %3009 = vmatpush1.msra.mxu0 0.0
    %3010 = vmatprep.subr.mxu0 0.0
    %3011 = vmatpush1.msra.mxu0 0.0
    %3012 = vmatprep.subr.mxu0 0.0
    %3013 = vmatpush1.msra.mxu0 0.0
    %3014 = vmatprep.subr.mxu0 0.0
    %3015 = vmatpush1.msra.mxu0 0.0
    %3016 = vmatprep.subr.mxu0 0.0
    %3017 = vmatpush1.msra.mxu0 0.0
    %3018 = vmatprep.subr.mxu0 0.0
    %3019 = vmatpush1.msra.mxu0 0.0
    %3020 = vmatprep.subr.mxu0 0.0
    %3021 = vmatpush1.msra.mxu0 0.0
    %3022 = vmatprep.subr.mxu0 0.0
    %3023 = vmatpush1.msra.mxu0 0.0
    %3024 = vmatprep.subr.mxu0 0.0
    %3025 = vmatpush1.msra.mxu0 0.0
    %3026 = vmatprep.subr.mxu0 0.0
    %3027 = vmatpush1.msra.mxu0 0.0
    %3028 = vmatprep.subr.mxu0 0.0
    %3029 = vmatpush1.msra.mxu0 0.0
    %3030 = vmatprep.subr.mxu0 0.0
    %3031 = vmatpush1.msra.mxu0 0.0
    %3032 = vmatprep.subr.mxu0 0.0
    %3033 = vmatpush1.msra.mxu0 0.0
    %3034 = vmatprep.subr.mxu0 0.0
    %3035 = vmatpush1.msra.mxu0 0.0
    %3036 = vmatprep.subr.mxu0 0.0
    %3037 = vmatpush1.msra.mxu0 0.0
    %3038 = vmatprep.subr.mxu0 0.0
    %3039 = vmatpush1.msra.mxu0 0.0
    %3040 = vmatprep.subr.mxu0 0.0
    %3041 = vmatpush1.msra.mxu0 0.0
    %3042 = vmatprep.subr.mxu0 0.0
    %3043 = vmatpush1.msra.mxu0 0.0
    %3044 = vmatprep.subr.mxu0 0.0
    %3045 = vmatpush1.msra.mxu0 0.0
    %3046 = vmatprep.subr.mxu0 0.0
    %3047 = vmatpush1.msra.mxu0 0.0
    %3048 = vmatprep.subr.mxu0 0.0
    %3049 = vmatpush1.msra.mxu0 0.0
    %3050 = vmatprep.subr.mxu0 0.0
    %3051 = vmatpush1.msra.mxu0 0.0
    %3052 = vmatprep.subr.mxu0 0.0
    %3053 = vmatpush1.msra.mxu0 0.0
    %3054 = vmatprep.subr.mxu0 0.0
    %3055 = vmatpush1.msra.mxu0 0.0
    %3056 = vmatprep.mubr.f32.mxu0 0.0
    %3057 = vmatmul.mubr.f32.gmra.mrb[0].mxu0 %v2919
    %v3058 = vpop.f32.mrb[0].mxu0
    %v3059 = vadd.f32 0.0, %v3058
    %v3060 = vpop.f32.mrb[0].mxu0
    %v3061 = vadd.f32 0.0, %v3060
    %3062 = vdwg.mxu0
    %v3063 = vadd.f32 %v2880, %v2988
    %v3064 = vadd.f32 %v2881, %v2990
    %v3065 = vadd.f32 %v2882, %v3059
    %v3066 = vadd.f32 %v2883, %v3061
    %3067 = vrot.lane.b32.xlu0 %v2001, 113
    %v3068 = vpop.permute.xlu0 %3067
    %3069 = vrot.lane.b32.xlu0 %v2005, 113
    %v3070 = vpop.permute.xlu0 %3069
    %3071 = vrot.lane.b32.xlu0 %v2002, 113
    %v3072 = vpop.permute.xlu0 %3071
    %3073 = vrot.lane.b32.xlu0 %v2006, 113
    %v3074 = vpop.permute.xlu0 %3073
    %3075 = vrot.lane.b32.xlu0 %v2003, 113
    %v3076 = vpop.permute.xlu0 %3075
    %3077 = vrot.lane.b32.xlu0 %v2007, 113
    %v3078 = vpop.permute.xlu0 %3077
    %3079 = vrot.lane.b32.xlu0 %v2004, 113
    %v3080 = vpop.permute.xlu0 %3079
    %3081 = vrot.lane.b32.xlu0 %v2008, 113
    %v3082 = vpop.permute.xlu0 %3081
    %v3083 = vsel %vm1320, %v3076, %v3080
    %v3084 = vsel %vm1320, %v3078, %v3082
    %v3085 = vsel %vm1320, %v3072, %v3076
    %v3086 = vsel %vm1320, %v3074, %v3078
    %v3087 = vsel %vm1320, %v3068, %v3072
    %v3088 = vsel %vm1320, %v3070, %v3074
    %v3089 = vsel %vm1320, %v3080, %v3068
    %v3090 = vsel %vm1320, %v3082, %v3070
    %v3091 = vmul.f32 %v3087, %v1331
    %v3092 = vmul.f32 %v3085, %v1335
    %v3093 = vmul.f32 %v3083, %v1339
    %v3094 = vmul.f32 %v3089, %v1343
    %v3095 = vmul.f32 %v3088, %v1331
    %v3096 = vmul.f32 %v3086, %v1335
    %v3097 = vmul.f32 %v3084, %v1339
    %v3098 = vmul.f32 %v3090, %v1343
    %s3099 = scalar_lea.vmem %s4, 24
    %v3100 = vld [vmem:[%s3099] sm:$0xf]
    %v3102 = vsel %vm2076, %v3100, 0
    %3104 = vmatprep.subr.mxu0 %v3092
    %3105 = vmatpush1.msra.mxu0 %v3091
    %3106 = vmatprep.subr.mxu0 %v3096
    %3107 = vmatpush1.msra.mxu0 %v3095
    %3108 = vmatprep.subr.mxu0 0.0
    %3109 = vmatpush1.msra.mxu0 0.0
    %3110 = vmatprep.subr.mxu0 0.0
    %3111 = vmatpush1.msra.mxu0 0.0
    %3112 = vmatprep.subr.mxu0 0.0
    %3113 = vmatpush1.msra.mxu0 0.0
    %3114 = vmatprep.subr.mxu0 0.0
    %3115 = vmatpush1.msra.mxu0 0.0
    %3116 = vmatprep.subr.mxu0 0.0
    %3117 = vmatpush1.msra.mxu0 0.0
    %3118 = vmatprep.subr.mxu0 0.0
    %3119 = vmatpush1.msra.mxu0 0.0
    %3120 = vmatprep.subr.mxu0 0.0
    %3121 = vmatpush1.msra.mxu0 0.0
    %3122 = vmatprep.subr.mxu0 0.0
    %3123 = vmatpush1.msra.mxu0 0.0
    %3124 = vmatprep.subr.mxu0 0.0
    %3125 = vmatpush1.msra.mxu0 0.0
    %3126 = vmatprep.subr.mxu0 0.0
    %3127 = vmatpush1.msra.mxu0 0.0
    %3128 = vmatprep.subr.mxu0 0.0
    %3129 = vmatpush1.msra.mxu0 0.0
    %3130 = vmatprep.subr.mxu0 0.0
    %3131 = vmatpush1.msra.mxu0 0.0
    %3132 = vmatprep.subr.mxu0 0.0
    %3133 = vmatpush1.msra.mxu0 0.0
    %3134 = vmatprep.subr.mxu0 0.0
    %3135 = vmatpush1.msra.mxu0 0.0
    %3136 = vmatprep.subr.mxu0 0.0
    %3137 = vmatpush1.msra.mxu0 0.0
    %3138 = vmatprep.subr.mxu0 0.0
    %3139 = vmatpush1.msra.mxu0 0.0
    %3140 = vmatprep.subr.mxu0 0.0
    %3141 = vmatpush1.msra.mxu0 0.0
    %3142 = vmatprep.subr.mxu0 0.0
    %3143 = vmatpush1.msra.mxu0 0.0
    %3144 = vmatprep.subr.mxu0 0.0
    %3145 = vmatpush1.msra.mxu0 0.0
    %3146 = vmatprep.subr.mxu0 0.0
    %3147 = vmatpush1.msra.mxu0 0.0
    %3148 = vmatprep.subr.mxu0 0.0
    %3149 = vmatpush1.msra.mxu0 0.0
    %3150 = vmatprep.subr.mxu0 0.0
    %3151 = vmatpush1.msra.mxu0 0.0
    %3152 = vmatprep.subr.mxu0 0.0
    %3153 = vmatpush1.msra.mxu0 0.0
    %3154 = vmatprep.subr.mxu0 0.0
    %3155 = vmatpush1.msra.mxu0 0.0
    %3156 = vmatprep.subr.mxu0 0.0
    %3157 = vmatpush1.msra.mxu0 0.0
    %3158 = vmatprep.subr.mxu0 0.0
    %3159 = vmatpush1.msra.mxu0 0.0
    %3160 = vmatprep.subr.mxu0 0.0
    %3161 = vmatpush1.msra.mxu0 0.0
    %3162 = vmatprep.subr.mxu0 0.0
    %3163 = vmatpush1.msra.mxu0 0.0
    %3164 = vmatprep.subr.mxu0 0.0
    %3165 = vmatpush1.msra.mxu0 0.0
    %3166 = vmatprep.subr.mxu0 0.0
    %3167 = vmatpush1.msra.mxu0 0.0
    %3168 = vmatprep.mubr.f32.mxu0 0.0
    %3169 = vmatmul.mubr.f32.gmra.mrb[0].mxu0 %v3102
    %v3170 = vpop.f32.mrb[0].mxu0
    %v3171 = vadd.f32 0.0, %v3170
    %v3172 = vpop.f32.mrb[0].mxu0
    %v3173 = vadd.f32 0.0, %v3172
    %3174 = vdwg.mxu0
    %3175 = vmatprep.subr.mxu0 %v3094
    %3176 = vmatpush1.msra.mxu0 %v3093
    %3177 = vmatprep.subr.mxu0 %v3098
    %3178 = vmatpush1.msra.mxu0 %v3097
    %3179 = vmatprep.subr.mxu0 0.0
    %3180 = vmatpush1.msra.mxu0 0.0
    %3181 = vmatprep.subr.mxu0 0.0
    %3182 = vmatpush1.msra.mxu0 0.0
    %3183 = vmatprep.subr.mxu0 0.0
    %3184 = vmatpush1.msra.mxu0 0.0
    %3185 = vmatprep.subr.mxu0 0.0
    %3186 = vmatpush1.msra.mxu0 0.0
    %3187 = vmatprep.subr.mxu0 0.0
    %3188 = vmatpush1.msra.mxu0 0.0
    %3189 = vmatprep.subr.mxu0 0.0
    %3190 = vmatpush1.msra.mxu0 0.0
    %3191 = vmatprep.subr.mxu0 0.0
    %3192 = vmatpush1.msra.mxu0 0.0
    %3193 = vmatprep.subr.mxu0 0.0
    %3194 = vmatpush1.msra.mxu0 0.0
    %3195 = vmatprep.subr.mxu0 0.0
    %3196 = vmatpush1.msra.mxu0 0.0
    %3197 = vmatprep.subr.mxu0 0.0
    %3198 = vmatpush1.msra.mxu0 0.0
    %3199 = vmatprep.subr.mxu0 0.0
    %3200 = vmatpush1.msra.mxu0 0.0
    %3201 = vmatprep.subr.mxu0 0.0
    %3202 = vmatpush1.msra.mxu0 0.0
    %3203 = vmatprep.subr.mxu0 0.0
    %3204 = vmatpush1.msra.mxu0 0.0
    %3205 = vmatprep.subr.mxu0 0.0
    %3206 = vmatpush1.msra.mxu0 0.0
    %3207 = vmatprep.subr.mxu0 0.0
    %3208 = vmatpush1.msra.mxu0 0.0
    %3209 = vmatprep.subr.mxu0 0.0
    %3210 = vmatpush1.msra.mxu0 0.0
    %3211 = vmatprep.subr.mxu0 0.0
    %3212 = vmatpush1.msra.mxu0 0.0
    %3213 = vmatprep.subr.mxu0 0.0
    %3214 = vmatpush1.msra.mxu0 0.0
    %3215 = vmatprep.subr.mxu0 0.0
    %3216 = vmatpush1.msra.mxu0 0.0
    %3217 = vmatprep.subr.mxu0 0.0
    %3218 = vmatpush1.msra.mxu0 0.0
    %3219 = vmatprep.subr.mxu0 0.0
    %3220 = vmatpush1.msra.mxu0 0.0
    %3221 = vmatprep.subr.mxu0 0.0
    %3222 = vmatpush1.msra.mxu0 0.0
    %3223 = vmatprep.subr.mxu0 0.0
    %3224 = vmatpush1.msra.mxu0 0.0
    %3225 = vmatprep.subr.mxu0 0.0
    %3226 = vmatpush1.msra.mxu0 0.0
    %3227 = vmatprep.subr.mxu0 0.0
    %3228 = vmatpush1.msra.mxu0 0.0
    %3229 = vmatprep.subr.mxu0 0.0
    %3230 = vmatpush1.msra.mxu0 0.0
    %3231 = vmatprep.subr.mxu0 0.0
    %3232 = vmatpush1.msra.mxu0 0.0
    %3233 = vmatprep.subr.mxu0 0.0
    %3234 = vmatpush1.msra.mxu0 0.0
    %3235 = vmatprep.subr.mxu0 0.0
    %3236 = vmatpush1.msra.mxu0 0.0
    %3237 = vmatprep.subr.mxu0 0.0
    %3238 = vmatpush1.msra.mxu0 0.0
    %3239 = vmatprep.mubr.f32.mxu0 0.0
    %3240 = vmatmul.mubr.f32.gmra.mrb[0].mxu0 %v3102
    %v3241 = vpop.f32.mrb[0].mxu0
    %v3242 = vadd.f32 0.0, %v3241
    %v3243 = vpop.f32.mrb[0].mxu0
    %v3244 = vadd.f32 0.0, %v3243
    %3245 = vdwg.mxu0
    %v3246 = vadd.f32 %v3063, %v3171
    %v3247 = vadd.f32 %v3064, %v3173
    %v3248 = vadd.f32 %v3065, %v3242
    %v3249 = vadd.f32 %v3066, %v3244
    %3250 = vrot.lane.b32.xlu0 %v2001, 112
    %v3251 = vpop.permute.xlu0 %3250
    %3252 = vrot.lane.b32.xlu0 %v2005, 112
    %v3253 = vpop.permute.xlu0 %3252
    %3254 = vrot.lane.b32.xlu0 %v2002, 112
    %v3255 = vpop.permute.xlu0 %3254
    %3256 = vrot.lane.b32.xlu0 %v2006, 112
    %v3257 = vpop.permute.xlu0 %3256
    %3258 = vrot.lane.b32.xlu0 %v2003, 112
    %v3259 = vpop.permute.xlu0 %3258
    %3260 = vrot.lane.b32.xlu0 %v2007, 112
    %v3261 = vpop.permute.xlu0 %3260
    %3262 = vrot.lane.b32.xlu0 %v2004, 112
    %v3263 = vpop.permute.xlu0 %3262
    %3264 = vrot.lane.b32.xlu0 %v2008, 112
    %v3265 = vpop.permute.xlu0 %3264
    %v3266 = vsel %vm1543, %v3259, %v3263
    %v3267 = vsel %vm1543, %v3261, %v3265
    %v3268 = vsel %vm1543, %v3255, %v3259
    %v3269 = vsel %vm1543, %v3257, %v3261
    %v3270 = vsel %vm1543, %v3251, %v3255
    %v3271 = vsel %vm1543, %v3253, %v3257
    %v3272 = vsel %vm1543, %v3263, %v3251
    %v3273 = vsel %vm1543, %v3265, %v3253
    %v3274 = vmul.f32 %v3270, %v1554
    %v3275 = vmul.f32 %v3268, %v1558
    %v3276 = vmul.f32 %v3266, %v1562
    %v3277 = vmul.f32 %v3272, %v1566
    %v3278 = vmul.f32 %v3271, %v1554
    %v3279 = vmul.f32 %v3269, %v1558
    %v3280 = vmul.f32 %v3267, %v1562
    %v3281 = vmul.f32 %v3273, %v1566
    %s3282 = scalar_lea.vmem %s4, 28
    %v3283 = vld [vmem:[%s3282] sm:$0xf]
    %v3285 = vsel %vm2076, %v3283, 0
    %3287 = vmatprep.subr.mxu0 %v3275
    %3288 = vmatpush1.msra.mxu0 %v3274
    %3289 = vmatprep.subr.mxu0 %v3279
    %3290 = vmatpush1.msra.mxu0 %v3278
    %3291 = vmatprep.subr.mxu0 0.0
    %3292 = vmatpush1.msra.mxu0 0.0
    %3293 = vmatprep.subr.mxu0 0.0
    %3294 = vmatpush1.msra.mxu0 0.0
    %3295 = vmatprep.subr.mxu0 0.0
    %3296 = vmatpush1.msra.mxu0 0.0
    %3297 = vmatprep.subr.mxu0 0.0
    %3298 = vmatpush1.msra.mxu0 0.0
    %3299 = vmatprep.subr.mxu0 0.0
    %3300 = vmatpush1.msra.mxu0 0.0
    %3301 = vmatprep.subr.mxu0 0.0
    %3302 = vmatpush1.msra.mxu0 0.0
    %3303 = vmatprep.subr.mxu0 0.0
    %3304 = vmatpush1.msra.mxu0 0.0
    %3305 = vmatprep.subr.mxu0 0.0
    %3306 = vmatpush1.msra.mxu0 0.0
    %3307 = vmatprep.subr.mxu0 0.0
    %3308 = vmatpush1.msra.mxu0 0.0
    %3309 = vmatprep.subr.mxu0 0.0
    %3310 = vmatpush1.msra.mxu0 0.0
    %3311 = vmatprep.subr.mxu0 0.0
    %3312 = vmatpush1.msra.mxu0 0.0
    %3313 = vmatprep.subr.mxu0 0.0
    %3314 = vmatpush1.msra.mxu0 0.0
    %3315 = vmatprep.subr.mxu0 0.0
    %3316 = vmatpush1.msra.mxu0 0.0
    %3317 = vmatprep.subr.mxu0 0.0
    %3318 = vmatpush1.msra.mxu0 0.0
    %3319 = vmatprep.subr.mxu0 0.0
    %3320 = vmatpush1.msra.mxu0 0.0
    %3321 = vmatprep.subr.mxu0 0.0
    %3322 = vmatpush1.msra.mxu0 0.0
    %3323 = vmatprep.subr.mxu0 0.0
    %3324 = vmatpush1.msra.mxu0 0.0
    %3325 = vmatprep.subr.mxu0 0.0
    %3326 = vmatpush1.msra.mxu0 0.0
    %3327 = vmatprep.subr.mxu0 0.0
    %3328 = vmatpush1.msra.mxu0 0.0
    %3329 = vmatprep.subr.mxu0 0.0
    %3330 = vmatpush1.msra.mxu0 0.0
    %3331 = vmatprep.subr.mxu0 0.0
    %3332 = vmatpush1.msra.mxu0 0.0
    %3333 = vmatprep.subr.mxu0 0.0
    %3334 = vmatpush1.msra.mxu0 0.0
    %3335 = vmatprep.subr.mxu0 0.0
    %3336 = vmatpush1.msra.mxu0 0.0
    %3337 = vmatprep.subr.mxu0 0.0
    %3338 = vmatpush1.msra.mxu0 0.0
    %3339 = vmatprep.subr.mxu0 0.0
    %3340 = vmatpush1.msra.mxu0 0.0
    %3341 = vmatprep.subr.mxu0 0.0
    %3342 = vmatpush1.msra.mxu0 0.0
    %3343 = vmatprep.subr.mxu0 0.0
    %3344 = vmatpush1.msra.mxu0 0.0
    %3345 = vmatprep.subr.mxu0 0.0
    %3346 = vmatpush1.msra.mxu0 0.0
    %3347 = vmatprep.subr.mxu0 0.0
    %3348 = vmatpush1.msra.mxu0 0.0
    %3349 = vmatprep.subr.mxu0 0.0
    %3350 = vmatpush1.msra.mxu0 0.0
    %3351 = vmatprep.mubr.f32.mxu0 0.0
    %3352 = vmatmul.mubr.f32.gmra.mrb[0].mxu0 %v3285
    %v3353 = vpop.f32.mrb[0].mxu0
    %v3354 = vadd.f32 0.0, %v3353
    %v3355 = vpop.f32.mrb[0].mxu0
    %v3356 = vadd.f32 0.0, %v3355
    %3357 = vdwg.mxu0
    %3358 = vmatprep.subr.mxu0 %v3277
    %3359 = vmatpush1.msra.mxu0 %v3276
    %3360 = vmatprep.subr.mxu0 %v3281
    %3361 = vmatpush1.msra.mxu0 %v3280
    %3362 = vmatprep.subr.mxu0 0.0
    %3363 = vmatpush1.msra.mxu0 0.0
    %3364 = vmatprep.subr.mxu0 0.0
    %3365 = vmatpush1.msra.mxu0 0.0
    %3366 = vmatprep.subr.mxu0 0.0
    %3367 = vmatpush1.msra.mxu0 0.0
    %3368 = vmatprep.subr.mxu0 0.0
    %3369 = vmatpush1.msra.mxu0 0.0
    %3370 = vmatprep.subr.mxu0 0.0
    %3371 = vmatpush1.msra.mxu0 0.0
    %3372 = vmatprep.subr.mxu0 0.0
    %3373 = vmatpush1.msra.mxu0 0.0
    %3374 = vmatprep.subr.mxu0 0.0
    %3375 = vmatpush1.msra.mxu0 0.0
    %3376 = vmatprep.subr.mxu0 0.0
    %3377 = vmatpush1.msra.mxu0 0.0
    %3378 = vmatprep.subr.mxu0 0.0
    %3379 = vmatpush1.msra.mxu0 0.0
    %3380 = vmatprep.subr.mxu0 0.0
    %3381 = vmatpush1.msra.mxu0 0.0
    %3382 = vmatprep.subr.mxu0 0.0
    %3383 = vmatpush1.msra.mxu0 0.0
    %3384 = vmatprep.subr.mxu0 0.0
    %3385 = vmatpush1.msra.mxu0 0.0
    %3386 = vmatprep.subr.mxu0 0.0
    %3387 = vmatpush1.msra.mxu0 0.0
    %3388 = vmatprep.subr.mxu0 0.0
    %3389 = vmatpush1.msra.mxu0 0.0
    %3390 = vmatprep.subr.mxu0 0.0
    %3391 = vmatpush1.msra.mxu0 0.0
    %3392 = vmatprep.subr.mxu0 0.0
    %3393 = vmatpush1.msra.mxu0 0.0
    %3394 = vmatprep.subr.mxu0 0.0
    %3395 = vmatpush1.msra.mxu0 0.0
    %3396 = vmatprep.subr.mxu0 0.0
    %3397 = vmatpush1.msra.mxu0 0.0
    %3398 = vmatprep.subr.mxu0 0.0
    %3399 = vmatpush1.msra.mxu0 0.0
    %3400 = vmatprep.subr.mxu0 0.0
    %3401 = vmatpush1.msra.mxu0 0.0
    %3402 = vmatprep.subr.mxu0 0.0
    %3403 = vmatpush1.msra.mxu0 0.0
    %3404 = vmatprep.subr.mxu0 0.0
    %3405 = vmatpush1.msra.mxu0 0.0
    %3406 = vmatprep.subr.mxu0 0.0
    %3407 = vmatpush1.msra.mxu0 0.0
    %3408 = vmatprep.subr.mxu0 0.0
    %3409 = vmatpush1.msra.mxu0 0.0
    %3410 = vmatprep.subr.mxu0 0.0
    %3411 = vmatpush1.msra.mxu0 0.0
    %3412 = vmatprep.subr.mxu0 0.0
    %3413 = vmatpush1.msra.mxu0 0.0
    %3414 = vmatprep.subr.mxu0 0.0
    %3415 = vmatpush1.msra.mxu0 0.0
    %3416 = vmatprep.subr.mxu0 0.0
    %3417 = vmatpush1.msra.mxu0 0.0
    %3418 = vmatprep.subr.mxu0 0.0
    %3419 = vmatpush1.msra.mxu0 0.0
    %3420 = vmatprep.subr.mxu0 0.0
    %3421 = vmatpush1.msra.mxu0 0.0
    %3422 = vmatprep.mubr.f32.mxu0 0.0
    %3423 = vmatmul.mubr.f32.gmra.mrb[0].mxu0 %v3285
    %v3424 = vpop.f32.mrb[0].mxu0
    %v3425 = vadd.f32 0.0, %v3424
    %v3426 = vpop.f32.mrb[0].mxu0
    %v3427 = vadd.f32 0.0, %v3426
    %3428 = vdwg.mxu0
    %v3429 = vadd.f32 %v3246, %v3354
    %v3430 = vadd.f32 %v3247, %v3356
    %v3431 = vadd.f32 %v3248, %v3425
    %v3432 = vadd.f32 %v3249, %v3427
    %3433 = vrot.lane.b32.xlu0 %v2001, 111
    %v3434 = vpop.permute.xlu0 %3433
    %3435 = vrot.lane.b32.xlu0 %v2005, 111
    %v3436 = vpop.permute.xlu0 %3435
    %3437 = vrot.lane.b32.xlu0 %v2002, 111
    %v3438 = vpop.permute.xlu0 %3437
    %3439 = vrot.lane.b32.xlu0 %v2006, 111
    %v3440 = vpop.permute.xlu0 %3439
    %3441 = vrot.lane.b32.xlu0 %v2003, 111
    %v3442 = vpop.permute.xlu0 %3441
    %3443 = vrot.lane.b32.xlu0 %v2007, 111
    %v3444 = vpop.permute.xlu0 %3443
    %3445 = vrot.lane.b32.xlu0 %v2004, 111
    %v3446 = vpop.permute.xlu0 %3445
    %3447 = vrot.lane.b32.xlu0 %v2008, 111
    %v3448 = vpop.permute.xlu0 %3447
    %v3449 = vsel %vm1766, %v3442, %v3446
    %v3450 = vsel %vm1766, %v3444, %v3448
    %v3451 = vsel %vm1766, %v3438, %v3442
    %v3452 = vsel %vm1766, %v3440, %v3444
    %v3453 = vsel %vm1766, %v3434, %v3438
    %v3454 = vsel %vm1766, %v3436, %v3440
    %v3455 = vsel %vm1766, %v3446, %v3434
    %v3456 = vsel %vm1766, %v3448, %v3436
    %v3457 = vmul.f32 %v3453, %v1777
    %v3458 = vmul.f32 %v3451, %v1781
    %v3459 = vmul.f32 %v3449, %v1785
    %v3460 = vmul.f32 %v3455, %v1789
    %v3461 = vmul.f32 %v3454, %v1777
    %v3462 = vmul.f32 %v3452, %v1781
    %v3463 = vmul.f32 %v3450, %v1785
    %v3464 = vmul.f32 %v3456, %v1789
    %s3465 = scalar_lea.vmem %s4, 32
    %v3466 = vld [vmem:[%s3465] sm:$0xf]
    %v3468 = vsel %vm2076, %v3466, 0
    %3470 = vmatprep.subr.mxu0 %v3458
    %3471 = vmatpush1.msra.mxu0 %v3457
    %3472 = vmatprep.subr.mxu0 %v3462
    %3473 = vmatpush1.msra.mxu0 %v3461
    %3474 = vmatprep.subr.mxu0 0.0
    %3475 = vmatpush1.msra.mxu0 0.0
    %3476 = vmatprep.subr.mxu0 0.0
    %3477 = vmatpush1.msra.mxu0 0.0
    %3478 = vmatprep.subr.mxu0 0.0
    %3479 = vmatpush1.msra.mxu0 0.0
    %3480 = vmatprep.subr.mxu0 0.0
    %3481 = vmatpush1.msra.mxu0 0.0
    %3482 = vmatprep.subr.mxu0 0.0
    %3483 = vmatpush1.msra.mxu0 0.0
    %3484 = vmatprep.subr.mxu0 0.0
    %3485 = vmatpush1.msra.mxu0 0.0
    %3486 = vmatprep.subr.mxu0 0.0
    %3487 = vmatpush1.msra.mxu0 0.0
    %3488 = vmatprep.subr.mxu0 0.0
    %3489 = vmatpush1.msra.mxu0 0.0
    %3490 = vmatprep.subr.mxu0 0.0
    %3491 = vmatpush1.msra.mxu0 0.0
    %3492 = vmatprep.subr.mxu0 0.0
    %3493 = vmatpush1.msra.mxu0 0.0
    %3494 = vmatprep.subr.mxu0 0.0
    %3495 = vmatpush1.msra.mxu0 0.0
    %3496 = vmatprep.subr.mxu0 0.0
    %3497 = vmatpush1.msra.mxu0 0.0
    %3498 = vmatprep.subr.mxu0 0.0
    %3499 = vmatpush1.msra.mxu0 0.0
    %3500 = vmatprep.subr.mxu0 0.0
    %3501 = vmatpush1.msra.mxu0 0.0
    %3502 = vmatprep.subr.mxu0 0.0
    %3503 = vmatpush1.msra.mxu0 0.0
    %3504 = vmatprep.subr.mxu0 0.0
    %3505 = vmatpush1.msra.mxu0 0.0
    %3506 = vmatprep.subr.mxu0 0.0
    %3507 = vmatpush1.msra.mxu0 0.0
    %3508 = vmatprep.subr.mxu0 0.0
    %3509 = vmatpush1.msra.mxu0 0.0
    %3510 = vmatprep.subr.mxu0 0.0
    %3511 = vmatpush1.msra.mxu0 0.0
    %3512 = vmatprep.subr.mxu0 0.0
    %3513 = vmatpush1.msra.mxu0 0.0
    %3514 = vmatprep.subr.mxu0 0.0
    %3515 = vmatpush1.msra.mxu0 0.0
    %3516 = vmatprep.subr.mxu0 0.0
    %3517 = vmatpush1.msra.mxu0 0.0
    %3518 = vmatprep.subr.mxu0 0.0
    %3519 = vmatpush1.msra.mxu0 0.0
    %3520 = vmatprep.subr.mxu0 0.0
    %3521 = vmatpush1.msra.mxu0 0.0
    %3522 = vmatprep.subr.mxu0 0.0
    %3523 = vmatpush1.msra.mxu0 0.0
    %3524 = vmatprep.subr.mxu0 0.0
    %3525 = vmatpush1.msra.mxu0 0.0
    %3526 = vmatprep.subr.mxu0 0.0
    %3527 = vmatpush1.msra.mxu0 0.0
    %3528 = vmatprep.subr.mxu0 0.0
    %3529 = vmatpush1.msra.mxu0 0.0
    %3530 = vmatprep.subr.mxu0 0.0
    %3531 = vmatpush1.msra.mxu0 0.0
    %3532 = vmatprep.subr.mxu0 0.0
    %3533 = vmatpush1.msra.mxu0 0.0
    %3534 = vmatprep.mubr.f32.mxu0 0.0
    %3535 = vmatmul.mubr.f32.gmra.mrb[0].mxu0 %v3468
    %v3536 = vpop.f32.mrb[0].mxu0
    %v3537 = vadd.f32 0.0, %v3536
    %v3538 = vpop.f32.mrb[0].mxu0
    %v3539 = vadd.f32 0.0, %v3538
    %3540 = vdwg.mxu0
    %3541 = vmatprep.subr.mxu0 %v3460
    %3542 = vmatpush1.msra.mxu0 %v3459
    %3543 = vmatprep.subr.mxu0 %v3464
    %3544 = vmatpush1.msra.mxu0 %v3463
    %3545 = vmatprep.subr.mxu0 0.0
    %3546 = vmatpush1.msra.mxu0 0.0
    %3547 = vmatprep.subr.mxu0 0.0
    %3548 = vmatpush1.msra.mxu0 0.0
    %3549 = vmatprep.subr.mxu0 0.0
    %3550 = vmatpush1.msra.mxu0 0.0
    %3551 = vmatprep.subr.mxu0 0.0
    %3552 = vmatpush1.msra.mxu0 0.0
    %3553 = vmatprep.subr.mxu0 0.0
    %3554 = vmatpush1.msra.mxu0 0.0
    %3555 = vmatprep.subr.mxu0 0.0
    %3556 = vmatpush1.msra.mxu0 0.0
    %3557 = vmatprep.subr.mxu0 0.0
    %3558 = vmatpush1.msra.mxu0 0.0
    %3559 = vmatprep.subr.mxu0 0.0
    %3560 = vmatpush1.msra.mxu0 0.0
    %3561 = vmatprep.subr.mxu0 0.0
    %3562 = vmatpush1.msra.mxu0 0.0
    %3563 = vmatprep.subr.mxu0 0.0
    %3564 = vmatpush1.msra.mxu0 0.0
    %3565 = vmatprep.subr.mxu0 0.0
    %3566 = vmatpush1.msra.mxu0 0.0
    %3567 = vmatprep.subr.mxu0 0.0
    %3568 = vmatpush1.msra.mxu0 0.0
    %3569 = vmatprep.subr.mxu0 0.0
    %3570 = vmatpush1.msra.mxu0 0.0
    %3571 = vmatprep.subr.mxu0 0.0
    %3572 = vmatpush1.msra.mxu0 0.0
    %3573 = vmatprep.subr.mxu0 0.0
    %3574 = vmatpush1.msra.mxu0 0.0
    %3575 = vmatprep.subr.mxu0 0.0
    %3576 = vmatpush1.msra.mxu0 0.0
    %3577 = vmatprep.subr.mxu0 0.0
    %3578 = vmatpush1.msra.mxu0 0.0
    %3579 = vmatprep.subr.mxu0 0.0
    %3580 = vmatpush1.msra.mxu0 0.0
    %3581 = vmatprep.subr.mxu0 0.0
    %3582 = vmatpush1.msra.mxu0 0.0
    %3583 = vmatprep.subr.mxu0 0.0
    %3584 = vmatpush1.msra.mxu0 0.0
    %3585 = vmatprep.subr.mxu0 0.0
    %3586 = vmatpush1.msra.mxu0 0.0
    %3587 = vmatprep.subr.mxu0 0.0
    %3588 = vmatpush1.msra.mxu0 0.0
    %3589 = vmatprep.subr.mxu0 0.0
    %3590 = vmatpush1.msra.mxu0 0.0
    %3591 = vmatprep.subr.mxu0 0.0
    %3592 = vmatpush1.msra.mxu0 0.0
    %3593 = vmatprep.subr.mxu0 0.0
    %3594 = vmatpush1.msra.mxu0 0.0
    %3595 = vmatprep.subr.mxu0 0.0
    %3596 = vmatpush1.msra.mxu0 0.0
    %3597 = vmatprep.subr.mxu0 0.0
    %3598 = vmatpush1.msra.mxu0 0.0
    %3599 = vmatprep.subr.mxu0 0.0
    %3600 = vmatpush1.msra.mxu0 0.0
    %3601 = vmatprep.subr.mxu0 0.0
    %3602 = vmatpush1.msra.mxu0 0.0
    %3603 = vmatprep.subr.mxu0 0.0
    %3604 = vmatpush1.msra.mxu0 0.0
    %3605 = vmatprep.mubr.f32.mxu0 0.0
    %3606 = vmatmul.mubr.f32.gmra.mrb[0].mxu0 %v3468
    %v3607 = vpop.f32.mrb[0].mxu0
    %v3608 = vadd.f32 0.0, %v3607
    %v3609 = vpop.f32.mrb[0].mxu0
    %v3610 = vadd.f32 0.0, %v3609
    %3611 = vdwg.mxu0
    %v3612 = vadd.f32 %v3429, %v3537
    %v3613 = vadd.f32 %v3430, %v3539
    %v3614 = vadd.f32 %v3431, %v3608
    %v3615 = vadd.f32 %v3432, %v3610
    %v3616 = vld [vmem:[%s5] sm:$0xf]
    %3618 = vset.pattern.permute.xlu0 0
    %3619 = vperm.xlu0 %3618, %v3616
    %v3620 = vpop.permute.xlu0 %3619
    %v3622 = vadd.f32 %v3612, %v3620
    %v3623 = vadd.f32 %v3613, %v3620
    %v3624 = vadd.f32 %v3614, %v3620
    %v3625 = vadd.f32 %v3615, %v3620
    %v3626 = vmax.f32 %v3622, 0.0
    %v3627 = vmax.f32 %v3623, 0.0
    %v3628 = vmax.f32 %v3624, 0.0
    %v3629 = vmax.f32 %v3625, 0.0
    %v3634 = vcombine.low %v3626, %v3627
    %v3635 = vcombine.low %v3628, %v3629
    %3638 = vst [vmem:[#allocation2] sm:$0xff] %v3634
    %3639 = vst [vmem:[#allocation2 + $0x8] sm:$0xff] %v3635
    // Predicated region
    $region26: #{tpu_custom_call.1} parent=1 // pred_check
      _
    $region27: #{tpu_custom_call.1} parent=1 // pred_check_branch
      %3641 = sbr.rel (0) target = $region29
    $region28: #{tpu_custom_call.1} parent=1 // pred_region
      %s3643 = ssub.s32 256, 256
      %3644 = vsyncadd [#allocation3], %s3643
      %s3646 = sshll.u32 [#allocation2], 4
      %s3647 = int_to_ptr.vmem [resolvable:$true] %s3646
      %3649 = dma.vmem_to_hbm [thread:$0]  %s3647, 256, %s6, [#allocation3]
    $region29: #{tpu_custom_call.1} parent=1 // pred_fallthru
      _
    // Predicated region
    $region30: #{tpu_custom_call.1} parent=1 // pred_check
      _
    $region31: #{tpu_custom_call.1} parent=1 // pred_check_branch
      %3651 = sbr.rel (0) target = $region33
    $region32: #{tpu_custom_call.1} parent=1 // pred_region
      %3652 = dma.done [#allocation3], 256
    $region33: #{tpu_custom_call.1} parent=1 // pred_fallthru
      _
    %3653 = vsyncpa [#allocation3], 1

</llo_original>
